<compile_context>
chip_gen: v6e
topology: v6e:2x2x1
jax: 0.10.0
libtpu: 0.0.40
codegen_flags: <defaults>
</compile_context>

<pallas_src>
import functools

import numpy as np
import jax
import jax.numpy as jnp
from jax.experimental import pallas as pl
from jax.experimental.pallas import tpu as pltpu


# ----------------------------------------------------------------------------
# Fused kernel: one grid step = one tile of TE edges.
# ----------------------------------------------------------------------------
def _fused_kernel(row_ref, col_ref, h_ref, coordf_ref, cl_ref, cr_ref,
                  gsum_ref, rep_ref,
                  ew1h_ref, ew1t_ref, ew1r_ref, eb1_ref, ew2_ref, eb2_ref,
                  cw1_ref, cw2_ref,
                  nw1h_ref, nw1a_ref, nb1_ref, nw2_ref, nb2_ref,
                  h_out_ref, coord_out_ref,
                  acc_ref, *, coord_max, mxu_dtype):
    t = pl.program_id(0)
    n_tiles = pl.num_programs(0)

    TE = row_ref.shape[0]
    N, F = h_ref.shape
    CD = coordf_ref.shape[1]          # C * D
    H = eb2_ref.shape[1]              # hidden_nf

    @pl.when(t == 0)
    def _init():
        acc_ref[...] = jnp.zeros_like(acc_ref)

    # --- in-VMEM gathers via one-hot matmuls (padded edges use sentinel id == N) ---
    node_iota = jax.lax.broadcasted_iota(jnp.int32, (TE, N), 1)
    oh_row = (row_ref[...] == node_iota).astype(jnp.float32)      # [TE, N]
    oh_col = (col_ref[...] == node_iota).astype(jnp.float32)
    diffm = oh_row - oh_col

    h_row = jnp.dot(oh_row, h_ref[...], preferred_element_type=jnp.float32)     # [TE, F]
    h_col = jnp.dot(oh_col, h_ref[...], preferred_element_type=jnp.float32)     # [TE, F]
    cd_flat = jnp.dot(diffm, coordf_ref[...], preferred_element_type=jnp.float32)  # [TE, C*D]
    cd_l = jnp.dot(diffm, cl_ref[...], preferred_element_type=jnp.float32)      # [TE, C*C*D]
    cd_r = jnp.dot(diffm, cr_ref[...], preferred_element_type=jnp.float32)      # [TE, C*C*D]

    # --- lane-dense per-edge Gram matrix (radial), exact f32 ---
    # radial[e, i*C+k] = sum_j cd[e,i,j] * cd[e,k,j]
    radial = jnp.dot(cd_l * cd_r, gsum_ref[...], preferred_element_type=jnp.float32)  # [TE, C*C]

    # --- edge MLP (weights pre-split so no in-kernel concat of the input) ---
    pre1 = (jnp.dot(h_row.astype(mxu_dtype), ew1h_ref[...],
                    preferred_element_type=jnp.float32)
            + jnp.dot(h_col.astype(mxu_dtype), ew1t_ref[...],
                      preferred_element_type=jnp.float32)
            + jnp.dot(radial, ew1r_ref[...],                      # radial branch stays f32
                      preferred_element_type=jnp.float32)
            + eb1_ref[...])
    h1 = jax.nn.silu(pre1)
    ef = jax.nn.silu(jnp.dot(h1.astype(mxu_dtype), ew2_ref[...],
                             preferred_element_type=jnp.float32) + eb2_ref[...])   # [TE, H]

    # --- coord MLP kept f32 (tiny-gain second layer) ---
    c1 = jax.nn.silu(jnp.dot(ef, cw1_ref[...], preferred_element_type=jnp.float32))
    scale = jnp.dot(c1, cw2_ref[...], preferred_element_type=jnp.float32)           # [TE, C]
    scale_e = jnp.dot(scale, rep_ref[...], preferred_element_type=jnp.float32)      # [TE, C*D]
    trans = cd_flat * scale_e                                                        # [TE, C*D]

    # --- ONE matmul segment-sum: scatter [edge_feat | trans | 1] to nodes ---
    payload = jnp.concatenate([ef, trans, jnp.ones((TE, 1), jnp.float32)], axis=1)  # [TE, H+CD+1]
    acc_ref[...] += jnp.einsum('en,ep->np', oh_row, payload,
                               preferred_element_type=jnp.float32)

    # --- finalize on the last edge tile: coord update + node MLP + residual ---
    @pl.when(t == n_tiles - 1)
    def _finalize():
        acc = acc_ref[...]
        agg_feat = acc[:, :H]                     # [N, H]
        agg_trans = acc[:, H:H + CD]              # [N, C*D]
        count = acc[:, H + CD:H + CD + 1]         # [N, 1]
        inv = pl.reciprocal(jnp.maximum(count, 1.0), approx=True)
        mean_trans = agg_trans * inv
        coord_out_ref[...] = coordf_ref[...] + jnp.clip(mean_trans, -coord_max, coord_max)

        pre_n = (jnp.dot(h_ref[...].astype(mxu_dtype), nw1h_ref[...],
                         preferred_element_type=jnp.float32)
                 + jnp.dot(agg_feat.astype(mxu_dtype), nw1a_ref[...],
                           preferred_element_type=jnp.float32)
                 + nb1_ref[...])
        n1 = jax.nn.silu(pre_n)
        out = jax.nn.silu(jnp.dot(n1.astype(mxu_dtype), nw2_ref[...],
                                  preferred_element_type=jnp.float32) + nb2_ref[...])
        h_out_ref[...] = h_ref[...] + out


# ----------------------------------------------------------------------------
# Wrapper
# ----------------------------------------------------------------------------
def mc_e_gcl_forward(params, h, row, col, coord, coord_change_maximum=10.0,
                     edge_tile=512, use_bf16_mxu=True):
    N, F = h.shape
    _, C, D = coord.shape
    E = row.shape[0]
    H = params['ew2'].shape[1]
    CD, CC, CCD = C * D, C * C, C * C * D

    h = h.astype(jnp.float32)
    coord_flat = coord.reshape(N, CD).astype(jnp.float32)

    # Constant index-plumbing matrices (built at trace time; tiny).
    lmat = np.zeros((CD, CCD), np.float32)     # duplicate channel i over all k
    rmat = np.zeros((CD, CCD), np.float32)     # duplicate channel k over all i
    gsum = np.zeros((CCD, CC), np.float32)     # sum the D components of each (i,k) pair
    for i in range(C):
        for k in range(C):
            p = i * C + k
            for j in range(D):
                lmat[i * D + j, p * D + j] = 1.0
                rmat[k * D + j, p * D + j] = 1.0
                gsum[p * D + j, p] = 1.0
    rep = np.zeros((C, CD), np.float32)        # repeat per-channel scale over D lanes
    for i in range(C):
        for j in range(D):
            rep[i, i * D + j] = 1.0

    # Per-node coordinate expansions (N-sized, layout plumbing only).
    coord_l = coord_flat @ jnp.asarray(lmat)   # [N, C*C*D]
    coord_r = coord_flat @ jnp.asarray(rmat)   # [N, C*C*D]

    # Edge tiling: pad E up to a multiple of TE with sentinel node id == N
    # (its one-hot row is all zeros -> contributes nothing to any aggregate).
    e_round8 = ((E + 7) // 8) * 8
    TE = min(int(edge_tile), e_round8)
    TE = max(8, (TE // 8) * 8)
    n_tiles = (E + TE - 1) // TE
    E_pad = n_tiles * TE
    pad = E_pad - E
    row_i = jnp.concatenate([row.astype(jnp.int32), jnp.full((pad,), N, jnp.int32)])
    col_i = jnp.concatenate([col.astype(jnp.int32), jnp.full((pad,), N, jnp.int32)])
    row2d = row_i[:, None]
    col2d = col_i[:, None]

    # bf16 MXU operands for the big MLP matmuls; radial / coord path stay f32.
    wdt = jnp.bfloat16 if use_bf16_mxu else jnp.float32
    ew1 = params['ew1']
    ew1_h = ew1[:F].astype(wdt)
    ew1_t = ew1[F:2 * F].astype(wdt)
    ew1_r = ew1[2 * F:].astype(jnp.float32)
    ew2 = params['ew2'].astype(wdt)
    nw1 = params['nw1']
    nw1_h = nw1[:F].astype(wdt)
    nw1_a = nw1[F:].astype(wdt)
    nw2 = params['nw2'].astype(wdt)

    inputs = (row2d, col2d, h, coord_flat, coord_l, coord_r,
              jnp.asarray(gsum), jnp.asarray(rep),
              ew1_h, ew1_t, ew1_r, params['eb1'], ew2, params['eb2'],
              params['cw1'], params['cw2'],
              nw1_h, nw1_a, params['nb1'], nw2, params['nb2'])

    def resident(a):
        return pl.BlockSpec(a.shape, lambda e: (0, 0))

    in_specs = ([pl.BlockSpec((TE, 1), lambda e: (e, 0)),
                 pl.BlockSpec((TE, 1), lambda e: (e, 0))]
                + [resident(a) for a in inputs[2:]])

    kernel = functools.partial(_fused_kernel,
                               coord_max=float(coord_change_maximum),
                               mxu_dtype=wdt)

    h_new, coord_new_flat = pl.pallas_call(
        kernel,
        grid=(n_tiles,),
        in_specs=in_specs,
        out_specs=(pl.BlockSpec((N, F), lambda e: (0, 0)),
                   pl.BlockSpec((N, CD), lambda e: (0, 0))),
        out_shape=(jax.ShapeDtypeStruct((N, F), jnp.float32),
                   jax.ShapeDtypeStruct((N, CD), jnp.float32)),
        scratch_shapes=[pltpu.VMEM((N, H + CD + 1), jnp.float32)],
        input_output_aliases={2: 0, 3: 1},     # h -> h_out, coord_flat -> coord_out
        compiler_params=pltpu.CompilerParams(
            # accumulator across edge tiles -> reduction axis must be "arbitrary"
            dimension_semantics=("arbitrary",),
            vmem_limit_bytes=32 * 1024 * 1024),
    )(*inputs)

    return h_new, coord_new_flat.reshape(N, C, D)


# ----------------------------------------------------------------------------
# Pure-JAX reference (mirrors the PyTorch forward semantics, full f32)
# ----------------------------------------------------------------------------
def reference_forward(params, h, row, col, coord, coord_change_maximum=10.0):
    N = h.shape[0]
    cd = coord[row] - coord[col]
    radial = jnp.einsum('eij,ekj->eik', cd, cd)
    x = jnp.concatenate([h[row], h[col], radial.reshape(radial.shape[0], -1)], axis=1)
    h1 = jax.nn.silu(x @ params['ew1'] + params['eb1'])
    ef = jax.nn.silu(h1 @ params['ew2'] + params['eb2'])
    scale = jax.nn.silu(ef @ params['cw1']) @ params['cw2']
    trans = cd * scale[:, :, None]
    agg_trans = jnp.zeros((N,) + trans.shape[1:], jnp.float32).at[row].add(trans)
    count = jnp.zeros((N,), jnp.float32).at[row].add(1.0)
    agg_trans = agg_trans / jnp.maximum(count, 1.0)[:, None, None]
    coord_new = coord + jnp.clip(agg_trans, -coord_change_maximum, coord_change_maximum)
    agg_feat = jnp.zeros((N, ef.shape[1]), jnp.float32).at[row].add(ef)
    node_in = jnp.concatenate([h, agg_feat], axis=1)
    out = jax.nn.silu(jax.nn.silu(node_in @ params['nw1'] + params['nb1'])
                      @ params['nw2'] + params['nb2'])
    return h + out, coord_new


# ----------------------------------------------------------------------------
# Deterministic parameter init (shapes implied by __init__)
# ----------------------------------------------------------------------------
def _xavier(key, shape, gain=1.0):
    fan_in, fan_out = shape
    limit = gain * (6.0 / (fan_in + fan_out)) ** 0.5
    return jax.random.uniform(key, shape, jnp.float32, -limit, limit)


def init_params(key, input_nf, hidden_nf, n_channel, mlp_hidden_scale=2):
    in_e = 2 * input_nf + n_channel * n_channel          # edges_in_d = 0
    he = in_e * mlp_hidden_scale
    in_n = hidden_nf + input_nf
    hn = in_n * mlp_hidden_scale
    hc = hidden_nf * mlp_hidden_scale
    k = jax.random.split(key, 10)
    return {
        'ew1': _xavier(k[0], (in_e, he)),
        'eb1': jax.random.uniform(k[1], (1, he), jnp.float32, -0.1, 0.1),
        'ew2': _xavier(k[2], (he, hidden_nf)),
        'eb2': jax.random.uniform(k[3], (1, hidden_nf), jnp.float32, -0.1, 0.1),
        'nw1': _xavier(k[4], (in_n, hn)),
        'nb1': jax.random.uniform(k[5], (1, hn), jnp.float32, -0.1, 0.1),
        'nw2': _xavier(k[6], (hn, input_nf)),             # output_nf == input_nf (residual)
        'nb2': jax.random.uniform(k[7], (1, input_nf), jnp.float32, -0.1, 0.1),
        'cw1': _xavier(k[8], (hidden_nf, hc)),
        'cw2': _xavier(k[9], (hc, n_channel), gain=0.001),
    }


if __name__ == "__main__":
    bs, n_node = 2, 8
    N = bs * n_node
    input_nf = hidden_nf = 32
    n_channel, d = 4, 3

    # fully-connected graph within each batch element (no self loops): E = bs*n*(n-1)
    rows, cols = [], []
    for b in range(bs):
        for i in range(n_node):
            for j in range(n_node):
                if i != j:
                    rows.append(b * n_node + i)
                    cols.append(b * n_node + j)
    row = jnp.asarray(rows, dtype=jnp.int32)
    col = jnp.asarray(cols, dtype=jnp.int32)

    key = jax.random.PRNGKey(0)
    k_h, k_c, k_p = jax.random.split(key, 3)
    h = jax.random.normal(k_h, (N, input_nf), jnp.float32)
    coord = jax.random.normal(k_c, (N, n_channel, d), jnp.float32)
    params = init_params(k_p, input_nf, hidden_nf, n_channel, mlp_hidden_scale=2)

    h_ref, coord_ref = reference_forward(params, h, row, col, coord)

    fwd = jax.jit(mc_e_gcl_forward,
                  static_argnames=('coord_change_maximum', 'edge_tile', 'use_bf16_mxu'))

    # edge_tile=64 -> 2 edge tiles (exercises the cross-tile accumulator + padded edges)

    # 1) f32 MXU path: tight structural/numerical check of the fused tiled kernel.
    h32, c32 = fwd(params, h, row, col, coord, edge_tile=64, use_bf16_mxu=False)
    jax.block_until_ready((h32, c32))
    assert h32.shape == (N, input_nf) and c32.shape == (N, n_channel, d)
    assert jnp.allclose(h32, h_ref, rtol=3e-3, atol=3e-3), "h mismatch (f32 path)"
    assert jnp.allclose(c32, coord_ref, rtol=3e-3, atol=3e-3), "coord mismatch (f32 path)"

    # 2) bf16 MXU path (default / perf): checked against the pure-f32 reference with a
    #    wider gate (~1e-2 typical deviation expected from bf16 MLP operands).
    hbf, cbf = fwd(params, h, row, col, coord, edge_tile=64, use_bf16_mxu=True)
    jax.block_until_ready((hbf, cbf))
    assert jnp.allclose(hbf, h_ref, rtol=1e-1, atol=1e-1), "h mismatch (bf16 path)"
    assert jnp.allclose(cbf, coord_ref, rtol=3e-3, atol=3e-3), "coord mismatch (bf16 path)"

    print("KERNEL_OK")
</pallas_src>

<mosaic_0001>
module attributes {stable_mosaic.version = 11 : i64} {
  func.func @_fused_kernel(%arg0: i32, %arg1: memref<64x1xi32, #tpu.memory_space<vmem>>, %arg2: memref<64x1xi32, #tpu.memory_space<vmem>>, %arg3: memref<16x32xf32, #tpu.memory_space<vmem>>, %arg4: memref<16x12xf32, #tpu.memory_space<vmem>>, %arg5: memref<16x48xf32, #tpu.memory_space<vmem>>, %arg6: memref<16x48xf32, #tpu.memory_space<vmem>>, %arg7: memref<48x16xf32, #tpu.memory_space<vmem>>, %arg8: memref<4x12xf32, #tpu.memory_space<vmem>>, %arg9: memref<32x160xf32, #tpu.memory_space<vmem>>, %arg10: memref<32x160xf32, #tpu.memory_space<vmem>>, %arg11: memref<16x160xf32, #tpu.memory_space<vmem>>, %arg12: memref<1x160xf32, #tpu.memory_space<vmem>>, %arg13: memref<160x32xf32, #tpu.memory_space<vmem>>, %arg14: memref<1x32xf32, #tpu.memory_space<vmem>>, %arg15: memref<32x64xf32, #tpu.memory_space<vmem>>, %arg16: memref<64x4xf32, #tpu.memory_space<vmem>>, %arg17: memref<32x128xf32, #tpu.memory_space<vmem>>, %arg18: memref<32x128xf32, #tpu.memory_space<vmem>>, %arg19: memref<1x128xf32, #tpu.memory_space<vmem>>, %arg20: memref<128x32xf32, #tpu.memory_space<vmem>>, %arg21: memref<1x32xf32, #tpu.memory_space<vmem>>, %arg22: memref<16x32xf32, #tpu.memory_space<vmem>>, %arg23: memref<16x12xf32, #tpu.memory_space<vmem>>, %arg24: memref<16x45xf32, #tpu.memory_space<vmem>>) attributes {dimension_semantics = [#tpu.dimension_semantics<arbitrary>], iteration_bounds = array<i64: 2>, scalar_prefetch = 0 : i64, scratch_operands = 1 : i64, tpu.core_type = #tpu.core_type<tc>, window_params = [{transform_indices = @transform_0, window_bounds = array<i64: 64, 1>}, {transform_indices = @transform_1, window_bounds = array<i64: 64, 1>}, {pipeline_mode = #tpu.pipeline_mode<synchronous>, transform_indices = @transform_2, window_bounds = array<i64: 16, 32>}, {pipeline_mode = #tpu.pipeline_mode<synchronous>, transform_indices = @transform_3, window_bounds = array<i64: 16, 12>}, {pipeline_mode = #tpu.pipeline_mode<synchronous>, transform_indices = @transform_4, window_bounds = array<i64: 16, 48>}, {pipeline_mode = #tpu.pipeline_mode<synchronous>, transform_indices = @transform_5, window_bounds = array<i64: 16, 48>}, {pipeline_mode = #tpu.pipeline_mode<synchronous>, transform_indices = @transform_6, window_bounds = array<i64: 48, 16>}, {pipeline_mode = #tpu.pipeline_mode<synchronous>, transform_indices = @transform_7, window_bounds = array<i64: 4, 12>}, {pipeline_mode = #tpu.pipeline_mode<synchronous>, transform_indices = @transform_8, window_bounds = array<i64: 32, 160>}, {pipeline_mode = #tpu.pipeline_mode<synchronous>, transform_indices = @transform_9, window_bounds = array<i64: 32, 160>}, {pipeline_mode = #tpu.pipeline_mode<synchronous>, transform_indices = @transform_10, window_bounds = array<i64: 16, 160>}, {pipeline_mode = #tpu.pipeline_mode<synchronous>, transform_indices = @transform_11, window_bounds = array<i64: 1, 160>}, {pipeline_mode = #tpu.pipeline_mode<synchronous>, transform_indices = @transform_12, window_bounds = array<i64: 160, 32>}, {pipeline_mode = #tpu.pipeline_mode<synchronous>, transform_indices = @transform_13, window_bounds = array<i64: 1, 32>}, {pipeline_mode = #tpu.pipeline_mode<synchronous>, transform_indices = @transform_14, window_bounds = array<i64: 32, 64>}, {pipeline_mode = #tpu.pipeline_mode<synchronous>, transform_indices = @transform_15, window_bounds = array<i64: 64, 4>}, {pipeline_mode = #tpu.pipeline_mode<synchronous>, transform_indices = @transform_16, window_bounds = array<i64: 32, 128>}, {pipeline_mode = #tpu.pipeline_mode<synchronous>, transform_indices = @transform_17, window_bounds = array<i64: 32, 128>}, {pipeline_mode = #tpu.pipeline_mode<synchronous>, transform_indices = @transform_18, window_bounds = array<i64: 1, 128>}, {pipeline_mode = #tpu.pipeline_mode<synchronous>, transform_indices = @transform_19, window_bounds = array<i64: 128, 32>}, {pipeline_mode = #tpu.pipeline_mode<synchronous>, transform_indices = @transform_20, window_bounds = array<i64: 1, 32>}, {pipeline_mode = #tpu.pipeline_mode<synchronous>, transform_indices = @transform_21, window_bounds = array<i64: 16, 32>}, {pipeline_mode = #tpu.pipeline_mode<synchronous>, transform_indices = @transform_22, window_bounds = array<i64: 16, 12>}]} {
    %c0_i32 = arith.constant 0 : i32
    %0 = arith.cmpi eq, %arg0, %c0_i32 : i32
    %1 = arith.extui %0 : i1 to i32
    %c0_i32_0 = arith.constant 0 : i32
    %2 = arith.cmpi ne, %1, %c0_i32_0 : i32
    scf.if %2 {
      %cst_56 = arith.constant 0.000000e+00 : f32
      %78 = vector.broadcast %cst_56 : f32 to vector<16x45xf32>
      %c0_57 = arith.constant 0 : index
      %c0_58 = arith.constant 0 : index
      %79 = vector.load %arg24[%c0_57, %c0_58] : memref<16x45xf32, #tpu.memory_space<vmem>>, vector<16x45xf32>
      tpu.vector_store %arg24[%c0_57, %c0_58], %78 {strides = array<i32>} : memref<16x45xf32, #tpu.memory_space<vmem>>, vector<16x45xf32>,
    } else {
    }
    %3 = tpu.iota {dimensions = array<i32: 1>} : vector<64x16xi32>
    %c0 = arith.constant 0 : index
    %c0_1 = arith.constant 0 : index
    %4 = vector.load %arg1[%c0, %c0_1] : memref<64x1xi32, #tpu.memory_space<vmem>>, vector<64x1xi32>
    %5 = vector.broadcast %4 : vector<64x1xi32> to vector<64x16xi32>
    %6 = arith.cmpi eq, %5, %3 : vector<64x16xi32>
    %7 = arith.extui %6 : vector<64x16xi1> to vector<64x16xi32>
    %8 = arith.sitofp %7 : vector<64x16xi32> to vector<64x16xf32>
    %c0_2 = arith.constant 0 : index
    %c0_3 = arith.constant 0 : index
    %9 = vector.load %arg2[%c0_2, %c0_3] : memref<64x1xi32, #tpu.memory_space<vmem>>, vector<64x1xi32>
    %10 = vector.broadcast %9 : vector<64x1xi32> to vector<64x16xi32>
    %11 = arith.cmpi eq, %10, %3 : vector<64x16xi32>
    %12 = arith.extui %11 : vector<64x16xi1> to vector<64x16xi32>
    %13 = arith.sitofp %12 : vector<64x16xi32> to vector<64x16xf32>
    %14 = arith.subf %8, %13 : vector<64x16xf32>
    %c0_4 = arith.constant 0 : index
    %c0_5 = arith.constant 0 : index
    %15 = vector.load %arg3[%c0_4, %c0_5] : memref<16x32xf32, #tpu.memory_space<vmem>>, vector<16x32xf32>
    %cst = arith.constant dense<0.000000e+00> : vector<64x32xf32>
    %16 = tpu.matmul %8, %15, %cst {dimension_numbers = #tpu.dot_dimension_numbers<[1], [0], [0], [1], [0, 0, 1, 1], [], []>} : vector<64x16xf32>, vector<16x32xf32>, vector<64x32xf32> -> vector<64x32xf32>
    %c0_6 = arith.constant 0 : index
    %c0_7 = arith.constant 0 : index
    %17 = vector.load %arg3[%c0_6, %c0_7] : memref<16x32xf32, #tpu.memory_space<vmem>>, vector<16x32xf32>
    %cst_8 = arith.constant dense<0.000000e+00> : vector<64x32xf32>
    %18 = tpu.matmul %13, %17, %cst_8 {dimension_numbers = #tpu.dot_dimension_numbers<[1], [0], [0], [1], [0, 0, 1, 1], [], []>} : vector<64x16xf32>, vector<16x32xf32>, vector<64x32xf32> -> vector<64x32xf32>
    %c0_9 = arith.constant 0 : index
    %c0_10 = arith.constant 0 : index
    %19 = vector.load %arg4[%c0_9, %c0_10] : memref<16x12xf32, #tpu.memory_space<vmem>>, vector<16x12xf32>
    %cst_11 = arith.constant dense<0.000000e+00> : vector<64x12xf32>
    %20 = tpu.matmul %14, %19, %cst_11 {dimension_numbers = #tpu.dot_dimension_numbers<[1], [0], [0], [1], [0, 0, 1, 1], [], []>} : vector<64x16xf32>, vector<16x12xf32>, vector<64x12xf32> -> vector<64x12xf32>
    %c0_12 = arith.constant 0 : index
    %c0_13 = arith.constant 0 : index
    %21 = vector.load %arg5[%c0_12, %c0_13] : memref<16x48xf32, #tpu.memory_space<vmem>>, vector<16x48xf32>
    %cst_14 = arith.constant dense<0.000000e+00> : vector<64x48xf32>
    %22 = tpu.matmul %14, %21, %cst_14 {dimension_numbers = #tpu.dot_dimension_numbers<[1], [0], [0], [1], [0, 0, 1, 1], [], []>} : vector<64x16xf32>, vector<16x48xf32>, vector<64x48xf32> -> vector<64x48xf32>
    %c0_15 = arith.constant 0 : index
    %c0_16 = arith.constant 0 : index
    %23 = vector.load %arg6[%c0_15, %c0_16] : memref<16x48xf32, #tpu.memory_space<vmem>>, vector<16x48xf32>
    %cst_17 = arith.constant dense<0.000000e+00> : vector<64x48xf32>
    %24 = tpu.matmul %14, %23, %cst_17 {dimension_numbers = #tpu.dot_dimension_numbers<[1], [0], [0], [1], [0, 0, 1, 1], [], []>} : vector<64x16xf32>, vector<16x48xf32>, vector<64x48xf32> -> vector<64x48xf32>
    %25 = arith.mulf %22, %24 : vector<64x48xf32>
    %c0_18 = arith.constant 0 : index
    %c0_19 = arith.constant 0 : index
    %26 = vector.load %arg7[%c0_18, %c0_19] : memref<48x16xf32, #tpu.memory_space<vmem>>, vector<48x16xf32>
    %cst_20 = arith.constant dense<0.000000e+00> : vector<64x16xf32>
    %27 = tpu.matmul %25, %26, %cst_20 {dimension_numbers = #tpu.dot_dimension_numbers<[1], [0], [0], [1], [0, 0, 1, 1], [], []>} : vector<64x48xf32>, vector<48x16xf32>, vector<64x16xf32> -> vector<64x16xf32>
    %c0_21 = arith.constant 0 : index
    %c0_22 = arith.constant 0 : index
    %28 = vector.load %arg9[%c0_21, %c0_22] : memref<32x160xf32, #tpu.memory_space<vmem>>, vector<32x160xf32>
    %cst_23 = arith.constant dense<0.000000e+00> : vector<64x160xf32>
    %29 = tpu.matmul %16, %28, %cst_23 {dimension_numbers = #tpu.dot_dimension_numbers<[1], [0], [0], [1], [0, 0, 1, 1], [], []>} : vector<64x32xf32>, vector<32x160xf32>, vector<64x160xf32> -> vector<64x160xf32>
    %c0_24 = arith.constant 0 : index
    %c0_25 = arith.constant 0 : index
    %30 = vector.load %arg10[%c0_24, %c0_25] : memref<32x160xf32, #tpu.memory_space<vmem>>, vector<32x160xf32>
    %cst_26 = arith.constant dense<0.000000e+00> : vector<64x160xf32>
    %31 = tpu.matmul %18, %30, %cst_26 {dimension_numbers = #tpu.dot_dimension_numbers<[1], [0], [0], [1], [0, 0, 1, 1], [], []>} : vector<64x32xf32>, vector<32x160xf32>, vector<64x160xf32> -> vector<64x160xf32>
    %32 = arith.addf %29, %31 : vector<64x160xf32>
    %c0_27 = arith.constant 0 : index
    %c0_28 = arith.constant 0 : index
    %33 = vector.load %arg11[%c0_27, %c0_28] : memref<16x160xf32, #tpu.memory_space<vmem>>, vector<16x160xf32>
    %cst_29 = arith.constant dense<0.000000e+00> : vector<64x160xf32>
    %34 = tpu.matmul %27, %33, %cst_29 {dimension_numbers = #tpu.dot_dimension_numbers<[1], [0], [0], [1], [0, 0, 1, 1], [], []>} : vector<64x16xf32>, vector<16x160xf32>, vector<64x160xf32> -> vector<64x160xf32>
    %35 = arith.addf %32, %34 : vector<64x160xf32>
    %c0_30 = arith.constant 0 : index
    %c0_31 = arith.constant 0 : index
    %36 = vector.load %arg12[%c0_30, %c0_31] : memref<1x160xf32, #tpu.memory_space<vmem>>, vector<1x160xf32>
    %37 = vector.broadcast %36 : vector<1x160xf32> to vector<64x160xf32>
    %38 = arith.addf %35, %37 : vector<64x160xf32>
    %39 = arith.negf %38 : vector<64x160xf32>
    %40 = math.exp %39 : vector<64x160xf32>
    %cst_32 = arith.constant 1.000000e+00 : f32
    %41 = vector.broadcast %cst_32 : f32 to vector<64x160xf32>
    %42 = arith.addf %41, %40 : vector<64x160xf32>
    %43 = arith.divf %41, %42 : vector<64x160xf32>
    %44 = arith.mulf %38, %43 : vector<64x160xf32>
    %c0_33 = arith.constant 0 : index
    %c0_34 = arith.constant 0 : index
    %45 = vector.load %arg13[%c0_33, %c0_34] : memref<160x32xf32, #tpu.memory_space<vmem>>, vector<160x32xf32>
    %cst_35 = arith.constant dense<0.000000e+00> : vector<64x32xf32>
    %46 = tpu.matmul %44, %45, %cst_35 {dimension_numbers = #tpu.dot_dimension_numbers<[1], [0], [0], [1], [0, 0, 1, 1], [], []>} : vector<64x160xf32>, vector<160x32xf32>, vector<64x32xf32> -> vector<64x32xf32>
    %c0_36 = arith.constant 0 : index
    %c0_37 = arith.constant 0 : index
    %47 = vector.load %arg14[%c0_36, %c0_37] : memref<1x32xf32, #tpu.memory_space<vmem>>, vector<1x32xf32>
    %48 = vector.broadcast %47 : vector<1x32xf32> to vector<64x32xf32>
    %49 = arith.addf %46, %48 : vector<64x32xf32>
    %50 = arith.negf %49 : vector<64x32xf32>
    %51 = math.exp %50 : vector<64x32xf32>
    %cst_38 = arith.constant 1.000000e+00 : f32
    %52 = vector.broadcast %cst_38 : f32 to vector<64x32xf32>
    %53 = arith.addf %52, %51 : vector<64x32xf32>
    %54 = arith.divf %52, %53 : vector<64x32xf32>
    %55 = arith.mulf %49, %54 : vector<64x32xf32>
    %c0_39 = arith.constant 0 : index
    %c0_40 = arith.constant 0 : index
    %56 = vector.load %arg15[%c0_39, %c0_40] : memref<32x64xf32, #tpu.memory_space<vmem>>, vector<32x64xf32>
    %cst_41 = arith.constant dense<0.000000e+00> : vector<64x64xf32>
    %57 = tpu.matmul %55, %56, %cst_41 {dimension_numbers = #tpu.dot_dimension_numbers<[1], [0], [0], [1], [0, 0, 1, 1], [], []>} : vector<64x32xf32>, vector<32x64xf32>, vector<64x64xf32> -> vector<64x64xf32>
    %58 = arith.negf %57 : vector<64x64xf32>
    %59 = math.exp %58 : vector<64x64xf32>
    %cst_42 = arith.constant 1.000000e+00 : f32
    %60 = vector.broadcast %cst_42 : f32 to vector<64x64xf32>
    %61 = arith.addf %60, %59 : vector<64x64xf32>
    %62 = arith.divf %60, %61 : vector<64x64xf32>
    %63 = arith.mulf %57, %62 : vector<64x64xf32>
    %c0_43 = arith.constant 0 : index
    %c0_44 = arith.constant 0 : index
    %64 = vector.load %arg16[%c0_43, %c0_44] : memref<64x4xf32, #tpu.memory_space<vmem>>, vector<64x4xf32>
    %cst_45 = arith.constant dense<0.000000e+00> : vector<64x4xf32>
    %65 = tpu.matmul %63, %64, %cst_45 {dimension_numbers = #tpu.dot_dimension_numbers<[1], [0], [0], [1], [0, 0, 1, 1], [], []>} : vector<64x64xf32>, vector<64x4xf32>, vector<64x4xf32> -> vector<64x4xf32>
    %c0_46 = arith.constant 0 : index
    %c0_47 = arith.constant 0 : index
    %66 = vector.load %arg8[%c0_46, %c0_47] : memref<4x12xf32, #tpu.memory_space<vmem>>, vector<4x12xf32>
    %cst_48 = arith.constant dense<0.000000e+00> : vector<64x12xf32>
    %67 = tpu.matmul %65, %66, %cst_48 {dimension_numbers = #tpu.dot_dimension_numbers<[1], [0], [0], [1], [0, 0, 1, 1], [], []>} : vector<64x4xf32>, vector<4x12xf32>, vector<64x12xf32> -> vector<64x12xf32>
    %68 = arith.mulf %20, %67 : vector<64x12xf32>
    %cst_49 = arith.constant 1.000000e+00 : f32
    %69 = vector.broadcast %cst_49 : f32 to vector<64x1xf32>
    %70 = tpu.concatenate %55, %68, %69 in 1 : vector<64x32xf32>, vector<64x12xf32>, vector<64x1xf32> -> vector<64x45xf32>
    %c0_50 = arith.constant 0 : index
    %c0_51 = arith.constant 0 : index
    %71 = vector.load %arg24[%c0_50, %c0_51] : memref<16x45xf32, #tpu.memory_space<vmem>>, vector<16x45xf32>
    "tpu.trace_start"() <{level = 10 : i32, message = "en,ep->np"}> : () -> ()
    %cst_52 = arith.constant dense<0.000000e+00> : vector<16x45xf32>
    %72 = tpu.matmul %8, %70, %cst_52 {dimension_numbers = #tpu.dot_dimension_numbers<[0], [0], [1], [1], [0, 1, 1, 1], [], []>} : vector<64x16xf32>, vector<64x45xf32>, vector<16x45xf32> -> vector<16x45xf32>
    "tpu.trace_stop"() : () -> ()
    %73 = arith.addf %71, %72 : vector<16x45xf32>
    %c0_53 = arith.constant 0 : index
    %c0_54 = arith.constant 0 : index
    %74 = vector.load %arg24[%c0_53, %c0_54] : memref<16x45xf32, #tpu.memory_space<vmem>>, vector<16x45xf32>
    tpu.vector_store %arg24[%c0_53, %c0_54], %73 {strides = array<i32>} : memref<16x45xf32, #tpu.memory_space<vmem>>, vector<16x45xf32>,
    %c1_i32 = arith.constant 1 : i32
    %75 = arith.cmpi eq, %arg0, %c1_i32 : i32
    %76 = arith.extui %75 : i1 to i32
    %c0_i32_55 = arith.constant 0 : i32
    %77 = arith.cmpi ne, %76, %c0_i32_55 : i32
    scf.if %77 {
      %c0_56 = arith.constant 0 : index
      %c0_57 = arith.constant 0 : index
      %78 = vector.load %arg24[%c0_56, %c0_57] : memref<16x45xf32, #tpu.memory_space<vmem>>, vector<16x45xf32>
      %79 = vector.extract_strided_slice %78 {offsets = [0, 0], sizes = [16, 32], strides = [1, 1]} : vector<16x45xf32> to vector<16x32xf32>
      %80 = vector.extract_strided_slice %78 {offsets = [0, 32], sizes = [16, 12], strides = [1, 1]} : vector<16x45xf32> to vector<16x12xf32>
      %81 = vector.extract_strided_slice %78 {offsets = [0, 44], sizes = [16, 1], strides = [1, 1]} : vector<16x45xf32> to vector<16x1xf32>
      %cst_58 = arith.constant 1.000000e+00 : f32
      %82 = vector.broadcast %cst_58 : f32 to vector<16x1xf32>
      %83 = arith.maximumf %81, %82 : vector<16x1xf32>
      %84 = tpu.reciprocal %83 {approx = true} : vector<16x1xf32> -> vector<16x1xf32>
      %85 = vector.broadcast %84 : vector<16x1xf32> to vector<16x12xf32>
      %86 = arith.mulf %80, %85 : vector<16x12xf32>
      %c0_59 = arith.constant 0 : index
      %c0_60 = arith.constant 0 : index
      %87 = vector.load %arg4[%c0_59, %c0_60] : memref<16x12xf32, #tpu.memory_space<vmem>>, vector<16x12xf32>
      %cst_61 = arith.constant -1.000000e+01 : f32
      %cst_62 = arith.constant 1.000000e+01 : f32
      %88 = vector.broadcast %cst_61 : f32 to vector<16x12xf32>
      %89 = arith.maximumf %88, %86 : vector<16x12xf32>
      %90 = vector.broadcast %cst_62 : f32 to vector<16x12xf32>
      %91 = arith.minimumf %90, %89 : vector<16x12xf32>
      %92 = arith.addf %87, %91 : vector<16x12xf32>
      %c0_63 = arith.constant 0 : index
      %c0_64 = arith.constant 0 : index
      %93 = vector.load %arg23[%c0_63, %c0_64] : memref<16x12xf32, #tpu.memory_space<vmem>>, vector<16x12xf32>
      tpu.vector_store %arg23[%c0_63, %c0_64], %92 {strides = array<i32>} : memref<16x12xf32, #tpu.memory_space<vmem>>, vector<16x12xf32>,
      %c0_65 = arith.constant 0 : index
      %c0_66 = arith.constant 0 : index
      %94 = vector.load %arg3[%c0_65, %c0_66] : memref<16x32xf32, #tpu.memory_space<vmem>>, vector<16x32xf32>
      %c0_67 = arith.constant 0 : index
      %c0_68 = arith.constant 0 : index
      %95 = vector.load %arg17[%c0_67, %c0_68] : memref<32x128xf32, #tpu.memory_space<vmem>>, vector<32x128xf32>
      %cst_69 = arith.constant dense<0.000000e+00> : vector<16x128xf32>
      %96 = tpu.matmul %94, %95, %cst_69 {dimension_numbers = #tpu.dot_dimension_numbers<[1], [0], [0], [1], [0, 0, 1, 1], [], []>} : vector<16x32xf32>, vector<32x128xf32>, vector<16x128xf32> -> vector<16x128xf32>
      %c0_70 = arith.constant 0 : index
      %c0_71 = arith.constant 0 : index
      %97 = vector.load %arg18[%c0_70, %c0_71] : memref<32x128xf32, #tpu.memory_space<vmem>>, vector<32x128xf32>
      %cst_72 = arith.constant dense<0.000000e+00> : vector<16x128xf32>
      %98 = tpu.matmul %79, %97, %cst_72 {dimension_numbers = #tpu.dot_dimension_numbers<[1], [0], [0], [1], [0, 0, 1, 1], [], []>} : vector<16x32xf32>, vector<32x128xf32>, vector<16x128xf32> -> vector<16x128xf32>
      %99 = arith.addf %96, %98 : vector<16x128xf32>
      %c0_73 = arith.constant 0 : index
      %c0_74 = arith.constant 0 : index
      %100 = vector.load %arg19[%c0_73, %c0_74] : memref<1x128xf32, #tpu.memory_space<vmem>>, vector<1x128xf32>
      %101 = vector.broadcast %100 : vector<1x128xf32> to vector<16x128xf32>
      %102 = arith.addf %99, %101 : vector<16x128xf32>
      %103 = arith.negf %102 : vector<16x128xf32>
      %104 = math.exp %103 : vector<16x128xf32>
      %cst_75 = arith.constant 1.000000e+00 : f32
      %105 = vector.broadcast %cst_75 : f32 to vector<16x128xf32>
      %106 = arith.addf %105, %104 : vector<16x128xf32>
      %107 = arith.divf %105, %106 : vector<16x128xf32>
      %108 = arith.mulf %102, %107 : vector<16x128xf32>
      %c0_76 = arith.constant 0 : index
      %c0_77 = arith.constant 0 : index
      %109 = vector.load %arg20[%c0_76, %c0_77] : memref<128x32xf32, #tpu.memory_space<vmem>>, vector<128x32xf32>
      %cst_78 = arith.constant dense<0.000000e+00> : vector<16x32xf32>
      %110 = tpu.matmul %108, %109, %cst_78 {dimension_numbers = #tpu.dot_dimension_numbers<[1], [0], [0], [1], [0, 0, 1, 1], [], []>} : vector<16x128xf32>, vector<128x32xf32>, vector<16x32xf32> -> vector<16x32xf32>
      %c0_79 = arith.constant 0 : index
      %c0_80 = arith.constant 0 : index
      %111 = vector.load %arg21[%c0_79, %c0_80] : memref<1x32xf32, #tpu.memory_space<vmem>>, vector<1x32xf32>
      %112 = vector.broadcast %111 : vector<1x32xf32> to vector<16x32xf32>
      %113 = arith.addf %110, %112 : vector<16x32xf32>
      %114 = arith.negf %113 : vector<16x32xf32>
      %115 = math.exp %114 : vector<16x32xf32>
      %cst_81 = arith.constant 1.000000e+00 : f32
      %116 = vector.broadcast %cst_81 : f32 to vector<16x32xf32>
      %117 = arith.addf %116, %115 : vector<16x32xf32>
      %118 = arith.divf %116, %117 : vector<16x32xf32>
      %119 = arith.mulf %113, %118 : vector<16x32xf32>
      %c0_82 = arith.constant 0 : index
      %c0_83 = arith.constant 0 : index
      %120 = vector.load %arg3[%c0_82, %c0_83] : memref<16x32xf32, #tpu.memory_space<vmem>>, vector<16x32xf32>
      %121 = arith.addf %120, %119 : vector<16x32xf32>
      %c0_84 = arith.constant 0 : index
      %c0_85 = arith.constant 0 : index
      %122 = vector.load %arg22[%c0_84, %c0_85] : memref<16x32xf32, #tpu.memory_space<vmem>>, vector<16x32xf32>
      tpu.vector_store %arg22[%c0_84, %c0_85], %121 {strides = array<i32>} : memref<16x32xf32, #tpu.memory_space<vmem>>, vector<16x32xf32>,
    } else {
    }
    return
  }
  func.func @transform_0(%arg0: i32) -> (i32, i32) {
    %c0_i32 = arith.constant 0 : i32
    %c0_i32_0 = arith.constant 0 : i32
    return %arg0, %c0_i32 : i32, i32
  }
  func.func @transform_1(%arg0: i32) -> (i32, i32) {
    %c0_i32 = arith.constant 0 : i32
    %c0_i32_0 = arith.constant 0 : i32
    return %arg0, %c0_i32 : i32, i32
  }
  func.func @transform_2(%arg0: i32) -> (i32, i32) {
    %c0_i32 = arith.constant 0 : i32
    %c0_i32_0 = arith.constant 0 : i32
    %c0_i32_1 = arith.constant 0 : i32
    return %c0_i32, %c0_i32_0 : i32, i32
  }
  func.func @transform_3(%arg0: i32) -> (i32, i32) {
    %c0_i32 = arith.constant 0 : i32
    %c0_i32_0 = arith.constant 0 : i32
    %c0_i32_1 = arith.constant 0 : i32
    return %c0_i32, %c0_i32_0 : i32, i32
  }
  func.func @transform_4(%arg0: i32) -> (i32, i32) {
    %c0_i32 = arith.constant 0 : i32
    %c0_i32_0 = arith.constant 0 : i32
    %c0_i32_1 = arith.constant 0 : i32
    return %c0_i32, %c0_i32_0 : i32, i32
  }
  func.func @transform_5(%arg0: i32) -> (i32, i32) {
    %c0_i32 = arith.constant 0 : i32
    %c0_i32_0 = arith.constant 0 : i32
    %c0_i32_1 = arith.constant 0 : i32
    return %c0_i32, %c0_i32_0 : i32, i32
  }
  func.func @transform_6(%arg0: i32) -> (i32, i32) {
    %c0_i32 = arith.constant 0 : i32
    %c0_i32_0 = arith.constant 0 : i32
    %c0_i32_1 = arith.constant 0 : i32
    return %c0_i32, %c0_i32_0 : i32, i32
  }
  func.func @transform_7(%arg0: i32) -> (i32, i32) {
    %c0_i32 = arith.constant 0 : i32
    %c0_i32_0 = arith.constant 0 : i32
    %c0_i32_1 = arith.constant 0 : i32
    return %c0_i32, %c0_i32_0 : i32, i32
  }
  func.func @transform_8(%arg0: i32) -> (i32, i32) {
    %c0_i32 = arith.constant 0 : i32
    %c0_i32_0 = arith.constant 0 : i32
    %c0_i32_1 = arith.constant 0 : i32
    return %c0_i32, %c0_i32_0 : i32, i32
  }
  func.func @transform_9(%arg0: i32) -> (i32, i32) {
    %c0_i32 = arith.constant 0 : i32
    %c0_i32_0 = arith.constant 0 : i32
    %c0_i32_1 = arith.constant 0 : i32
    return %c0_i32, %c0_i32_0 : i32, i32
  }
  func.func @transform_10(%arg0: i32) -> (i32, i32) {
    %c0_i32 = arith.constant 0 : i32
    %c0_i32_0 = arith.constant 0 : i32
    %c0_i32_1 = arith.constant 0 : i32
    return %c0_i32, %c0_i32_0 : i32, i32
  }
  func.func @transform_11(%arg0: i32) -> (i32, i32) {
    %c0_i32 = arith.constant 0 : i32
    %c0_i32_0 = arith.constant 0 : i32
    %c0_i32_1 = arith.constant 0 : i32
    return %c0_i32, %c0_i32_0 : i32, i32
  }
  func.func @transform_12(%arg0: i32) -> (i32, i32) {
    %c0_i32 = arith.constant 0 : i32
    %c0_i32_0 = arith.constant 0 : i32
    %c0_i32_1 = arith.constant 0 : i32
    return %c0_i32, %c0_i32_0 : i32, i32
  }
  func.func @transform_13(%arg0: i32) -> (i32, i32) {
    %c0_i32 = arith.constant 0 : i32
    %c0_i32_0 = arith.constant 0 : i32
    %c0_i32_1 = arith.constant 0 : i32
    return %c0_i32, %c0_i32_0 : i32, i32
  }
  func.func @transform_14(%arg0: i32) -> (i32, i32) {
    %c0_i32 = arith.constant 0 : i32
    %c0_i32_0 = arith.constant 0 : i32
    %c0_i32_1 = arith.constant 0 : i32
    return %c0_i32, %c0_i32_0 : i32, i32
  }
  func.func @transform_15(%arg0: i32) -> (i32, i32) {
    %c0_i32 = arith.constant 0 : i32
    %c0_i32_0 = arith.constant 0 : i32
    %c0_i32_1 = arith.constant 0 : i32
    return %c0_i32, %c0_i32_0 : i32, i32
  }
  func.func @transform_16(%arg0: i32) -> (i32, i32) {
    %c0_i32 = arith.constant 0 : i32
    %c0_i32_0 = arith.constant 0 : i32
    %c0_i32_1 = arith.constant 0 : i32
    return %c0_i32, %c0_i32_0 : i32, i32
  }
  func.func @transform_17(%arg0: i32) -> (i32, i32) {
    %c0_i32 = arith.constant 0 : i32
    %c0_i32_0 = arith.constant 0 : i32
    %c0_i32_1 = arith.constant 0 : i32
    return %c0_i32, %c0_i32_0 : i32, i32
  }
  func.func @transform_18(%arg0: i32) -> (i32, i32) {
    %c0_i32 = arith.constant 0 : i32
    %c0_i32_0 = arith.constant 0 : i32
    %c0_i32_1 = arith.constant 0 : i32
    return %c0_i32, %c0_i32_0 : i32, i32
  }
  func.func @transform_19(%arg0: i32) -> (i32, i32) {
    %c0_i32 = arith.constant 0 : i32
    %c0_i32_0 = arith.constant 0 : i32
    %c0_i32_1 = arith.constant 0 : i32
    return %c0_i32, %c0_i32_0 : i32, i32
  }
  func.func @transform_20(%arg0: i32) -> (i32, i32) {
    %c0_i32 = arith.constant 0 : i32
    %c0_i32_0 = arith.constant 0 : i32
    %c0_i32_1 = arith.constant 0 : i32
    return %c0_i32, %c0_i32_0 : i32, i32
  }
  func.func @transform_21(%arg0: i32) -> (i32, i32) {
    %c0_i32 = arith.constant 0 : i32
    %c0_i32_0 = arith.constant 0 : i32
    %c0_i32_1 = arith.constant 0 : i32
    return %c0_i32, %c0_i32_0 : i32, i32
  }
  func.func @transform_22(%arg0: i32) -> (i32, i32) {
    %c0_i32 = arith.constant 0 : i32
    %c0_i32_0 = arith.constant 0 : i32
    %c0_i32_1 = arith.constant 0 : i32
    return %c0_i32, %c0_i32_0 : i32, i32
  }
}

</mosaic_0001>

<llo_original>
// kernel: mc_e_gcl_forward.1
$region0: #{mc_e_gcl_forward.1}
  #allocation0 [shape = 'u32[]', space=smem, size = 0x4, offset = 0x4, fixed_abs, tag = 'smem constant byte address 0x4 - core index']
  #allocation1 [shape = 'u32[144,128]{1,0:T(1,128)}', space=vmem, size = 0x12000, scoped, tag = 'internal scratch']
  #allocation2 [shape = 'f32[16,45]{1,0:T(8,128)}', space=vmem, size = 0x2000, scoped, tag = 'scratch operand']
  %s0 = inlined_call_operand.vmem [shape: s32[128,1], index: 0, kind: input, shape index: {}]
  %s1 = inlined_call_operand.vmem [shape: s32[128,1], index: 1, kind: input, shape index: {}]
  %s2 = inlined_call_operand.vmem [shape: f32[16,32], index: 2, kind: input, shape index: {}, may-alias: {2,21}]
  %s3 = inlined_call_operand.vmem [shape: f32[16,12], index: 3, kind: input, shape index: {}, may-alias: {3,22}]
  %s4 = inlined_call_operand.vmem [shape: f32[16,48], index: 4, kind: input, shape index: {}]
  %s5 = inlined_call_operand.vmem [shape: f32[16,48], index: 5, kind: input, shape index: {}]
  %s6 = inlined_call_operand.vmem [shape: f32[48,16], index: 6, kind: input, shape index: {}]
  %s7 = inlined_call_operand.vmem [shape: f32[4,12], index: 7, kind: input, shape index: {}]
  %s8 = inlined_call_operand.vmem [shape: f32[32,160], index: 8, kind: input, shape index: {}]
  %s9 = inlined_call_operand.vmem [shape: f32[32,160], index: 9, kind: input, shape index: {}]
  %s10 = inlined_call_operand.vmem [shape: f32[16,160], index: 10, kind: input, shape index: {}]
  %s11 = inlined_call_operand.vmem [shape: f32[1,160], index: 11, kind: input, shape index: {}]
  %s12 = inlined_call_operand.vmem [shape: f32[160,32], index: 12, kind: input, shape index: {}]
  %s13 = inlined_call_operand.vmem [shape: f32[1,32], index: 13, kind: input, shape index: {}]
  %s14 = inlined_call_operand.vmem [shape: f32[32,64], index: 14, kind: input, shape index: {}]
  %s15 = inlined_call_operand.vmem [shape: f32[64,4], index: 15, kind: input, shape index: {}]
  %s16 = inlined_call_operand.vmem [shape: f32[32,128], index: 16, kind: input, shape index: {}]
  %s17 = inlined_call_operand.vmem [shape: f32[32,128], index: 17, kind: input, shape index: {}]
  %s18 = inlined_call_operand.vmem [shape: f32[1,128], index: 18, kind: input, shape index: {}]
  %s19 = inlined_call_operand.vmem [shape: f32[128,32], index: 19, kind: input, shape index: {}]
  %s20 = inlined_call_operand.vmem [shape: f32[1,32], index: 20, kind: input, shape index: {}]
  %s21 = inlined_call_operand.vmem [shape: f32[16,32], index: 21, kind: output, shape index: {0}, may-alias: {2,21}]
  %s22 = inlined_call_operand.vmem [shape: f32[16,12], index: 22, kind: output, shape index: {1}, may-alias: {3,22}]
  %23 = xla_tuple %s21, %s22
  %s24 = sld [smem:[#allocation0]]
  $region133: #{mc_e_gcl_forward.1} parent=0
    _
  %s26 = ssub.s32 1, %s24
  %s27 = scalar_select 0, %s26, %s24
  loop: start=0, step=1, limit=4
  $region2: #{mc_e_gcl_forward.1} parent=0 // loop_pre_header
    _
  $region3: #{mc_e_gcl_forward.1} parent=0 // loop_header
    %s29 = sphi 0, %s33
    %p30 = scmp.ge.s32.totalorder %s29, 4
    %s39 = sphi 0, %s41
    %s42 = sphi 0, %s39
    %s43 = sphi 0, %s42
    %s59 = sphi 0, %s43
    %s65 = sphi 0, %s67
    %s68 = sphi 0, %s65
    %s69 = sphi 0, %s68
    %s85 = sphi 0, %s69
    %s89 = sphi 0, %s89
    %s91 = sphi 0, %s89
    %s92 = sphi 0, %s91
    %s106 = sphi 0, %s92
    %s110 = sphi 0, %s110
    %s112 = sphi 0, %s110
    %s113 = sphi 0, %s112
    %s127 = sphi 0, %s113
    %s131 = sphi 0, %s131
    %s133 = sphi 0, %s131
    %s134 = sphi 0, %s133
    %s148 = sphi 0, %s134
    %s152 = sphi 0, %s152
    %s154 = sphi 0, %s152
    %s155 = sphi 0, %s154
    %s169 = sphi 0, %s155
    %s173 = sphi 0, %s173
    %s175 = sphi 0, %s173
    %s176 = sphi 0, %s175
    %s190 = sphi 0, %s176
    %s194 = sphi 0, %s194
    %s196 = sphi 0, %s194
    %s197 = sphi 0, %s196
    %s211 = sphi 0, %s197
    %s215 = sphi 0, %s215
    %s217 = sphi 0, %s215
    %s218 = sphi 0, %s217
    %s232 = sphi 0, %s218
    %s236 = sphi 0, %s236
    %s238 = sphi 0, %s236
    %s239 = sphi 0, %s238
    %s253 = sphi 0, %s239
    %s257 = sphi 0, %s257
    %s259 = sphi 0, %s257
    %s260 = sphi 0, %s259
    %s274 = sphi 0, %s260
    %s278 = sphi 0, %s278
    %s280 = sphi 0, %s278
    %s281 = sphi 0, %s280
    %s295 = sphi 0, %s281
    %s299 = sphi 0, %s299
    %s301 = sphi 0, %s299
    %s302 = sphi 0, %s301
    %s316 = sphi 0, %s302
    %s320 = sphi 0, %s320
    %s322 = sphi 0, %s320
    %s323 = sphi 0, %s322
    %s337 = sphi 0, %s323
    %s341 = sphi 0, %s341
    %s343 = sphi 0, %s341
    %s344 = sphi 0, %s343
    %s358 = sphi 0, %s344
    %s362 = sphi 0, %s362
    %s364 = sphi 0, %s362
    %s365 = sphi 0, %s364
    %s379 = sphi 0, %s365
    %s383 = sphi 0, %s383
    %s385 = sphi 0, %s383
    %s386 = sphi 0, %s385
    %s400 = sphi 0, %s386
    %s404 = sphi 0, %s404
    %s406 = sphi 0, %s404
    %s407 = sphi 0, %s406
    %s421 = sphi 0, %s407
    %s425 = sphi 0, %s425
    %s427 = sphi 0, %s425
    %s428 = sphi 0, %s427
    %s442 = sphi 0, %s428
    %s446 = sphi 0, %s446
    %s448 = sphi 0, %s446
    %s449 = sphi 0, %s448
    %s463 = sphi 0, %s449
    %s467 = sphi 0, %s467
    %s469 = sphi 0, %s467
    %s470 = sphi 0, %s469
    %s484 = sphi 0, %s470
    %s488 = sphi 0, %s488
    %s490 = sphi 0, %s488
    %s491 = sphi 0, %s490
    %s505 = sphi 0, %s491
    %s509 = sphi 0, %s509
    %s511 = sphi 0, %s509
    %s512 = sphi 0, %s511
    %s526 = sphi 0, %s512
  $region4: #{mc_e_gcl_forward.1} parent=0 // loop_header_branch
    %32 = sbr.rel (%p30) target = $region8
  $region5: #{mc_e_gcl_forward.1} parent=0 // loop_body
    %s34 = ssub.s32 %s29, 1
    %s35 = ssub.s32 %s29, 2
    %s36 = sadd.s32 %s29, 1
    %s37 = ssub.s32 %s29, %s36
    %p38 = scmp.eq.s32.totalorder %s37, 0
    %s40 = sadd.s32 %s39, 1
    %s41 = scalar_select %p38, %s39, %s40
    %p44 = pneg %p38
    %p45 = scmp.eq.s32.totalorder %s29, 1
    %p46 = por %p44, %p45
    %p47 = scmp.ne.s32.totalorder %s39, %s42
    %p48 = scmp.eq.s32.totalorder %s29, 0
    %p49 = por %p47, %p48
    %p50 = scmp.ne.s32.totalorder %s39, %s42
    %p51 = scmp.eq.s32.totalorder %s34, 1
    %p52 = por %p50, %p51
    %p53 = scmp.ne.s32.totalorder %s42, %s43
    %p54 = scmp.eq.s32.totalorder %s34, 0
    %p55 = por %p53, %p54
    %p56 = scmp.ne.s32.totalorder %s42, %s43
    %p57 = scmp.eq.s32.totalorder %s35, 1
    %p58 = por %p56, %p57
    %p60 = scmp.ne.s32.totalorder %s43, %s59
    %p61 = scmp.eq.s32.totalorder %s35, 0
    %p62 = por %p60, %p61
    %s63 = ssub.s32 %s29, %s36
    %p64 = scmp.eq.s32.totalorder %s63, 0
    %s66 = sadd.s32 %s65, 1
    %s67 = scalar_select %p64, %s65, %s66
    %p70 = pneg %p64
    %p71 = scmp.eq.s32.totalorder %s29, 1
    %p72 = por %p70, %p71
    %p73 = scmp.ne.s32.totalorder %s65, %s68
    %p74 = scmp.eq.s32.totalorder %s29, 0
    %p75 = por %p73, %p74
    %p76 = scmp.ne.s32.totalorder %s65, %s68
    %p77 = scmp.eq.s32.totalorder %s34, 1
    %p78 = por %p76, %p77
    %p79 = scmp.ne.s32.totalorder %s68, %s69
    %p80 = scmp.eq.s32.totalorder %s34, 0
    %p81 = por %p79, %p80
    %p82 = scmp.ne.s32.totalorder %s68, %s69
    %p83 = scmp.eq.s32.totalorder %s35, 1
    %p84 = por %p82, %p83
    %p86 = scmp.ne.s32.totalorder %s69, %s85
    %p87 = scmp.eq.s32.totalorder %s35, 0
    %p88 = por %p86, %p87
    %s90 = sadd.s32 %s89, 1
    %p93 = scmp.eq.s32.totalorder %s29, 1
    %p94 = scmp.ne.s32.totalorder %s89, %s91
    %p95 = scmp.eq.s32.totalorder %s29, 0
    %p96 = por %p94, %p95
    %p97 = scmp.ne.s32.totalorder %s89, %s91
    %p98 = scmp.eq.s32.totalorder %s34, 1
    %p99 = por %p97, %p98
    %p100 = scmp.ne.s32.totalorder %s91, %s92
    %p101 = scmp.eq.s32.totalorder %s34, 0
    %p102 = por %p100, %p101
    %p103 = scmp.ne.s32.totalorder %s91, %s92
    %p104 = scmp.eq.s32.totalorder %s35, 1
    %p105 = por %p103, %p104
    %p107 = scmp.ne.s32.totalorder %s92, %s106
    %p108 = scmp.eq.s32.totalorder %s35, 0
    %p109 = por %p107, %p108
    %s111 = sadd.s32 %s110, 1
    %p114 = scmp.eq.s32.totalorder %s29, 1
    %p115 = scmp.ne.s32.totalorder %s110, %s112
    %p116 = scmp.eq.s32.totalorder %s29, 0
    %p117 = por %p115, %p116
    %p118 = scmp.ne.s32.totalorder %s110, %s112
    %p119 = scmp.eq.s32.totalorder %s34, 1
    %p120 = por %p118, %p119
    %p121 = scmp.ne.s32.totalorder %s112, %s113
    %p122 = scmp.eq.s32.totalorder %s34, 0
    %p123 = por %p121, %p122
    %p124 = scmp.ne.s32.totalorder %s112, %s113
    %p125 = scmp.eq.s32.totalorder %s35, 1
    %p126 = por %p124, %p125
    %p128 = scmp.ne.s32.totalorder %s113, %s127
    %p129 = scmp.eq.s32.totalorder %s35, 0
    %p130 = por %p128, %p129
    %s132 = sadd.s32 %s131, 1
    %p135 = scmp.eq.s32.totalorder %s29, 1
    %p136 = scmp.ne.s32.totalorder %s131, %s133
    %p137 = scmp.eq.s32.totalorder %s29, 0
    %p138 = por %p136, %p137
    %p139 = scmp.ne.s32.totalorder %s131, %s133
    %p140 = scmp.eq.s32.totalorder %s34, 1
    %p141 = por %p139, %p140
    %p142 = scmp.ne.s32.totalorder %s133, %s134
    %p143 = scmp.eq.s32.totalorder %s34, 0
    %p144 = por %p142, %p143
    %p145 = scmp.ne.s32.totalorder %s133, %s134
    %p146 = scmp.eq.s32.totalorder %s35, 1
    %p147 = por %p145, %p146
    %p149 = scmp.ne.s32.totalorder %s134, %s148
    %p150 = scmp.eq.s32.totalorder %s35, 0
    %p151 = por %p149, %p150
    %s153 = sadd.s32 %s152, 1
    %p156 = scmp.eq.s32.totalorder %s29, 1
    %p157 = scmp.ne.s32.totalorder %s152, %s154
    %p158 = scmp.eq.s32.totalorder %s29, 0
    %p159 = por %p157, %p158
    %p160 = scmp.ne.s32.totalorder %s152, %s154
    %p161 = scmp.eq.s32.totalorder %s34, 1
    %p162 = por %p160, %p161
    %p163 = scmp.ne.s32.totalorder %s154, %s155
    %p164 = scmp.eq.s32.totalorder %s34, 0
    %p165 = por %p163, %p164
    %p166 = scmp.ne.s32.totalorder %s154, %s155
    %p167 = scmp.eq.s32.totalorder %s35, 1
    %p168 = por %p166, %p167
    %p170 = scmp.ne.s32.totalorder %s155, %s169
    %p171 = scmp.eq.s32.totalorder %s35, 0
    %p172 = por %p170, %p171
    %s174 = sadd.s32 %s173, 1
    %p177 = scmp.eq.s32.totalorder %s29, 1
    %p178 = scmp.ne.s32.totalorder %s173, %s175
    %p179 = scmp.eq.s32.totalorder %s29, 0
    %p180 = por %p178, %p179
    %p181 = scmp.ne.s32.totalorder %s173, %s175
    %p182 = scmp.eq.s32.totalorder %s34, 1
    %p183 = por %p181, %p182
    %p184 = scmp.ne.s32.totalorder %s175, %s176
    %p185 = scmp.eq.s32.totalorder %s34, 0
    %p186 = por %p184, %p185
    %p187 = scmp.ne.s32.totalorder %s175, %s176
    %p188 = scmp.eq.s32.totalorder %s35, 1
    %p189 = por %p187, %p188
    %p191 = scmp.ne.s32.totalorder %s176, %s190
    %p192 = scmp.eq.s32.totalorder %s35, 0
    %p193 = por %p191, %p192
    %s195 = sadd.s32 %s194, 1
    %p198 = scmp.eq.s32.totalorder %s29, 1
    %p199 = scmp.ne.s32.totalorder %s194, %s196
    %p200 = scmp.eq.s32.totalorder %s29, 0
    %p201 = por %p199, %p200
    %p202 = scmp.ne.s32.totalorder %s194, %s196
    %p203 = scmp.eq.s32.totalorder %s34, 1
    %p204 = por %p202, %p203
    %p205 = scmp.ne.s32.totalorder %s196, %s197
    %p206 = scmp.eq.s32.totalorder %s34, 0
    %p207 = por %p205, %p206
    %p208 = scmp.ne.s32.totalorder %s196, %s197
    %p209 = scmp.eq.s32.totalorder %s35, 1
    %p210 = por %p208, %p209
    %p212 = scmp.ne.s32.totalorder %s197, %s211
    %p213 = scmp.eq.s32.totalorder %s35, 0
    %p214 = por %p212, %p213
    %s216 = sadd.s32 %s215, 1
    %p219 = scmp.eq.s32.totalorder %s29, 1
    %p220 = scmp.ne.s32.totalorder %s215, %s217
    %p221 = scmp.eq.s32.totalorder %s29, 0
    %p222 = por %p220, %p221
    %p223 = scmp.ne.s32.totalorder %s215, %s217
    %p224 = scmp.eq.s32.totalorder %s34, 1
    %p225 = por %p223, %p224
    %p226 = scmp.ne.s32.totalorder %s217, %s218
    %p227 = scmp.eq.s32.totalorder %s34, 0
    %p228 = por %p226, %p227
    %p229 = scmp.ne.s32.totalorder %s217, %s218
    %p230 = scmp.eq.s32.totalorder %s35, 1
    %p231 = por %p229, %p230
    %p233 = scmp.ne.s32.totalorder %s218, %s232
    %p234 = scmp.eq.s32.totalorder %s35, 0
    %p235 = por %p233, %p234
    %s237 = sadd.s32 %s236, 1
    %p240 = scmp.eq.s32.totalorder %s29, 1
    %p241 = scmp.ne.s32.totalorder %s236, %s238
    %p242 = scmp.eq.s32.totalorder %s29, 0
    %p243 = por %p241, %p242
    %p244 = scmp.ne.s32.totalorder %s236, %s238
    %p245 = scmp.eq.s32.totalorder %s34, 1
    %p246 = por %p244, %p245
    %p247 = scmp.ne.s32.totalorder %s238, %s239
    %p248 = scmp.eq.s32.totalorder %s34, 0
    %p249 = por %p247, %p248
    %p250 = scmp.ne.s32.totalorder %s238, %s239
    %p251 = scmp.eq.s32.totalorder %s35, 1
    %p252 = por %p250, %p251
    %p254 = scmp.ne.s32.totalorder %s239, %s253
    %p255 = scmp.eq.s32.totalorder %s35, 0
    %p256 = por %p254, %p255
    %s258 = sadd.s32 %s257, 1
    %p261 = scmp.eq.s32.totalorder %s29, 1
    %p262 = scmp.ne.s32.totalorder %s257, %s259
    %p263 = scmp.eq.s32.totalorder %s29, 0
    %p264 = por %p262, %p263
    %p265 = scmp.ne.s32.totalorder %s257, %s259
    %p266 = scmp.eq.s32.totalorder %s34, 1
    %p267 = por %p265, %p266
    %p268 = scmp.ne.s32.totalorder %s259, %s260
    %p269 = scmp.eq.s32.totalorder %s34, 0
    %p270 = por %p268, %p269
    %p271 = scmp.ne.s32.totalorder %s259, %s260
    %p272 = scmp.eq.s32.totalorder %s35, 1
    %p273 = por %p271, %p272
    %p275 = scmp.ne.s32.totalorder %s260, %s274
    %p276 = scmp.eq.s32.totalorder %s35, 0
    %p277 = por %p275, %p276
    %s279 = sadd.s32 %s278, 1
    %p282 = scmp.eq.s32.totalorder %s29, 1
    %p283 = scmp.ne.s32.totalorder %s278, %s280
    %p284 = scmp.eq.s32.totalorder %s29, 0
    %p285 = por %p283, %p284
    %p286 = scmp.ne.s32.totalorder %s278, %s280
    %p287 = scmp.eq.s32.totalorder %s34, 1
    %p288 = por %p286, %p287
    %p289 = scmp.ne.s32.totalorder %s280, %s281
    %p290 = scmp.eq.s32.totalorder %s34, 0
    %p291 = por %p289, %p290
    %p292 = scmp.ne.s32.totalorder %s280, %s281
    %p293 = scmp.eq.s32.totalorder %s35, 1
    %p294 = por %p292, %p293
    %p296 = scmp.ne.s32.totalorder %s281, %s295
    %p297 = scmp.eq.s32.totalorder %s35, 0
    %p298 = por %p296, %p297
    %s300 = sadd.s32 %s299, 1
    %p303 = scmp.eq.s32.totalorder %s29, 1
    %p304 = scmp.ne.s32.totalorder %s299, %s301
    %p305 = scmp.eq.s32.totalorder %s29, 0
    %p306 = por %p304, %p305
    %p307 = scmp.ne.s32.totalorder %s299, %s301
    %p308 = scmp.eq.s32.totalorder %s34, 1
    %p309 = por %p307, %p308
    %p310 = scmp.ne.s32.totalorder %s301, %s302
    %p311 = scmp.eq.s32.totalorder %s34, 0
    %p312 = por %p310, %p311
    %p313 = scmp.ne.s32.totalorder %s301, %s302
    %p314 = scmp.eq.s32.totalorder %s35, 1
    %p315 = por %p313, %p314
    %p317 = scmp.ne.s32.totalorder %s302, %s316
    %p318 = scmp.eq.s32.totalorder %s35, 0
    %p319 = por %p317, %p318
    %s321 = sadd.s32 %s320, 1
    %p324 = scmp.eq.s32.totalorder %s29, 1
    %p325 = scmp.ne.s32.totalorder %s320, %s322
    %p326 = scmp.eq.s32.totalorder %s29, 0
    %p327 = por %p325, %p326
    %p328 = scmp.ne.s32.totalorder %s320, %s322
    %p329 = scmp.eq.s32.totalorder %s34, 1
    %p330 = por %p328, %p329
    %p331 = scmp.ne.s32.totalorder %s322, %s323
    %p332 = scmp.eq.s32.totalorder %s34, 0
    %p333 = por %p331, %p332
    %p334 = scmp.ne.s32.totalorder %s322, %s323
    %p335 = scmp.eq.s32.totalorder %s35, 1
    %p336 = por %p334, %p335
    %p338 = scmp.ne.s32.totalorder %s323, %s337
    %p339 = scmp.eq.s32.totalorder %s35, 0
    %p340 = por %p338, %p339
    %s342 = sadd.s32 %s341, 1
    %p345 = scmp.eq.s32.totalorder %s29, 1
    %p346 = scmp.ne.s32.totalorder %s341, %s343
    %p347 = scmp.eq.s32.totalorder %s29, 0
    %p348 = por %p346, %p347
    %p349 = scmp.ne.s32.totalorder %s341, %s343
    %p350 = scmp.eq.s32.totalorder %s34, 1
    %p351 = por %p349, %p350
    %p352 = scmp.ne.s32.totalorder %s343, %s344
    %p353 = scmp.eq.s32.totalorder %s34, 0
    %p354 = por %p352, %p353
    %p355 = scmp.ne.s32.totalorder %s343, %s344
    %p356 = scmp.eq.s32.totalorder %s35, 1
    %p357 = por %p355, %p356
    %p359 = scmp.ne.s32.totalorder %s344, %s358
    %p360 = scmp.eq.s32.totalorder %s35, 0
    %p361 = por %p359, %p360
    %s363 = sadd.s32 %s362, 1
    %p366 = scmp.eq.s32.totalorder %s29, 1
    %p367 = scmp.ne.s32.totalorder %s362, %s364
    %p368 = scmp.eq.s32.totalorder %s29, 0
    %p369 = por %p367, %p368
    %p370 = scmp.ne.s32.totalorder %s362, %s364
    %p371 = scmp.eq.s32.totalorder %s34, 1
    %p372 = por %p370, %p371
    %p373 = scmp.ne.s32.totalorder %s364, %s365
    %p374 = scmp.eq.s32.totalorder %s34, 0
    %p375 = por %p373, %p374
    %p376 = scmp.ne.s32.totalorder %s364, %s365
    %p377 = scmp.eq.s32.totalorder %s35, 1
    %p378 = por %p376, %p377
    %p380 = scmp.ne.s32.totalorder %s365, %s379
    %p381 = scmp.eq.s32.totalorder %s35, 0
    %p382 = por %p380, %p381
    %s384 = sadd.s32 %s383, 1
    %p387 = scmp.eq.s32.totalorder %s29, 1
    %p388 = scmp.ne.s32.totalorder %s383, %s385
    %p389 = scmp.eq.s32.totalorder %s29, 0
    %p390 = por %p388, %p389
    %p391 = scmp.ne.s32.totalorder %s383, %s385
    %p392 = scmp.eq.s32.totalorder %s34, 1
    %p393 = por %p391, %p392
    %p394 = scmp.ne.s32.totalorder %s385, %s386
    %p395 = scmp.eq.s32.totalorder %s34, 0
    %p396 = por %p394, %p395
    %p397 = scmp.ne.s32.totalorder %s385, %s386
    %p398 = scmp.eq.s32.totalorder %s35, 1
    %p399 = por %p397, %p398
    %p401 = scmp.ne.s32.totalorder %s386, %s400
    %p402 = scmp.eq.s32.totalorder %s35, 0
    %p403 = por %p401, %p402
    %s405 = sadd.s32 %s404, 1
    %p408 = scmp.eq.s32.totalorder %s29, 1
    %p409 = scmp.ne.s32.totalorder %s404, %s406
    %p410 = scmp.eq.s32.totalorder %s29, 0
    %p411 = por %p409, %p410
    %p412 = scmp.ne.s32.totalorder %s404, %s406
    %p413 = scmp.eq.s32.totalorder %s34, 1
    %p414 = por %p412, %p413
    %p415 = scmp.ne.s32.totalorder %s406, %s407
    %p416 = scmp.eq.s32.totalorder %s34, 0
    %p417 = por %p415, %p416
    %p418 = scmp.ne.s32.totalorder %s406, %s407
    %p419 = scmp.eq.s32.totalorder %s35, 1
    %p420 = por %p418, %p419
    %p422 = scmp.ne.s32.totalorder %s407, %s421
    %p423 = scmp.eq.s32.totalorder %s35, 0
    %p424 = por %p422, %p423
    %s426 = sadd.s32 %s425, 1
    %p429 = scmp.eq.s32.totalorder %s29, 1
    %p430 = scmp.ne.s32.totalorder %s425, %s427
    %p431 = scmp.eq.s32.totalorder %s29, 0
    %p432 = por %p430, %p431
    %p433 = scmp.ne.s32.totalorder %s425, %s427
    %p434 = scmp.eq.s32.totalorder %s34, 1
    %p435 = por %p433, %p434
    %p436 = scmp.ne.s32.totalorder %s427, %s428
    %p437 = scmp.eq.s32.totalorder %s34, 0
    %p438 = por %p436, %p437
    %p439 = scmp.ne.s32.totalorder %s427, %s428
    %p440 = scmp.eq.s32.totalorder %s35, 1
    %p441 = por %p439, %p440
    %p443 = scmp.ne.s32.totalorder %s428, %s442
    %p444 = scmp.eq.s32.totalorder %s35, 0
    %p445 = por %p443, %p444
    %s447 = sadd.s32 %s446, 1
    %p450 = scmp.eq.s32.totalorder %s29, 1
    %p451 = scmp.ne.s32.totalorder %s446, %s448
    %p452 = scmp.eq.s32.totalorder %s29, 0
    %p453 = por %p451, %p452
    %p454 = scmp.ne.s32.totalorder %s446, %s448
    %p455 = scmp.eq.s32.totalorder %s34, 1
    %p456 = por %p454, %p455
    %p457 = scmp.ne.s32.totalorder %s448, %s449
    %p458 = scmp.eq.s32.totalorder %s34, 0
    %p459 = por %p457, %p458
    %p460 = scmp.ne.s32.totalorder %s448, %s449
    %p461 = scmp.eq.s32.totalorder %s35, 1
    %p462 = por %p460, %p461
    %p464 = scmp.ne.s32.totalorder %s449, %s463
    %p465 = scmp.eq.s32.totalorder %s35, 0
    %p466 = por %p464, %p465
    %s468 = sadd.s32 %s467, 1
    %p471 = scmp.eq.s32.totalorder %s29, 1
    %p472 = scmp.ne.s32.totalorder %s467, %s469
    %p473 = scmp.eq.s32.totalorder %s29, 0
    %p474 = por %p472, %p473
    %p475 = scmp.ne.s32.totalorder %s467, %s469
    %p476 = scmp.eq.s32.totalorder %s34, 1
    %p477 = por %p475, %p476
    %p478 = scmp.ne.s32.totalorder %s469, %s470
    %p479 = scmp.eq.s32.totalorder %s34, 0
    %p480 = por %p478, %p479
    %p481 = scmp.ne.s32.totalorder %s469, %s470
    %p482 = scmp.eq.s32.totalorder %s35, 1
    %p483 = por %p481, %p482
    %p485 = scmp.ne.s32.totalorder %s470, %s484
    %p486 = scmp.eq.s32.totalorder %s35, 0
    %p487 = por %p485, %p486
    %s489 = sadd.s32 %s488, 1
    %p492 = scmp.eq.s32.totalorder %s29, 1
    %p493 = scmp.ne.s32.totalorder %s488, %s490
    %p494 = scmp.eq.s32.totalorder %s29, 0
    %p495 = por %p493, %p494
    %p496 = scmp.ne.s32.totalorder %s488, %s490
    %p497 = scmp.eq.s32.totalorder %s34, 1
    %p498 = por %p496, %p497
    %p499 = scmp.ne.s32.totalorder %s490, %s491
    %p500 = scmp.eq.s32.totalorder %s34, 0
    %p501 = por %p499, %p500
    %p502 = scmp.ne.s32.totalorder %s490, %s491
    %p503 = scmp.eq.s32.totalorder %s35, 1
    %p504 = por %p502, %p503
    %p506 = scmp.ne.s32.totalorder %s491, %s505
    %p507 = scmp.eq.s32.totalorder %s35, 0
    %p508 = por %p506, %p507
    %s510 = sadd.s32 %s509, 1
    %p513 = scmp.eq.s32.totalorder %s29, 1
    %p514 = scmp.ne.s32.totalorder %s509, %s511
    %p515 = scmp.eq.s32.totalorder %s29, 0
    %p516 = por %p514, %p515
    %p517 = scmp.ne.s32.totalorder %s509, %s511
    %p518 = scmp.eq.s32.totalorder %s34, 1
    %p519 = por %p517, %p518
    %p520 = scmp.ne.s32.totalorder %s511, %s512
    %p521 = scmp.eq.s32.totalorder %s34, 0
    %p522 = por %p520, %p521
    %p523 = scmp.ne.s32.totalorder %s511, %s512
    %p524 = scmp.eq.s32.totalorder %s35, 1
    %p525 = por %p523, %p524
    %p527 = scmp.ne.s32.totalorder %s512, %s526
    %p528 = scmp.eq.s32.totalorder %s35, 0
    %p529 = por %p527, %p528
    %p530 = scmp.le.s32.totalorder 1, %s29
    %p531 = scmp.lt.s32.totalorder %s29, 3
    %p532 = pnand %p530, %p531
    %p533 = pneg %p532
    // Predicated region
    $region9: #{mc_e_gcl_forward.1} parent=5 // pred_check
      _
    $region10: #{mc_e_gcl_forward.1} parent=5 // pred_check_branch
      %535 = sbr.rel (%p532) target = $region12
    $region11: #{mc_e_gcl_forward.1} parent=5 // pred_region
      %s536 = ssub.s32 %s29, 1
      // Predicated region
      $region13: #{mc_e_gcl_forward.1} parent=11 // pred_check
        %p537 = pneg %p102
      $region14: #{mc_e_gcl_forward.1} parent=11 // pred_check_branch
        %539 = sbr.rel (%p537) target = $region16
      $region15: #{mc_e_gcl_forward.1} parent=11 // pred_region
        _
      $region16: #{mc_e_gcl_forward.1} parent=11 // pred_fallthru
        _
      // Predicated region
      $region17: #{mc_e_gcl_forward.1} parent=11 // pred_check
        %p540 = pneg %p123
      $region18: #{mc_e_gcl_forward.1} parent=11 // pred_check_branch
        %542 = sbr.rel (%p540) target = $region20
      $region19: #{mc_e_gcl_forward.1} parent=11 // pred_region
        _
      $region20: #{mc_e_gcl_forward.1} parent=11 // pred_fallthru
        _
      // Predicated region
      $region21: #{mc_e_gcl_forward.1} parent=11 // pred_check
        %p543 = pneg %p144
      $region22: #{mc_e_gcl_forward.1} parent=11 // pred_check_branch
        %545 = sbr.rel (%p543) target = $region24
      $region23: #{mc_e_gcl_forward.1} parent=11 // pred_region
        _
      $region24: #{mc_e_gcl_forward.1} parent=11 // pred_fallthru
        _
      // Predicated region
      $region25: #{mc_e_gcl_forward.1} parent=11 // pred_check
        %p546 = pneg %p165
      $region26: #{mc_e_gcl_forward.1} parent=11 // pred_check_branch
        %548 = sbr.rel (%p546) target = $region28
      $region27: #{mc_e_gcl_forward.1} parent=11 // pred_region
        _
      $region28: #{mc_e_gcl_forward.1} parent=11 // pred_fallthru
        _
      // Predicated region
      $region29: #{mc_e_gcl_forward.1} parent=11 // pred_check
        %p549 = pneg %p186
      $region30: #{mc_e_gcl_forward.1} parent=11 // pred_check_branch
        %551 = sbr.rel (%p549) target = $region32
      $region31: #{mc_e_gcl_forward.1} parent=11 // pred_region
        _
      $region32: #{mc_e_gcl_forward.1} parent=11 // pred_fallthru
        _
      // Predicated region
      $region33: #{mc_e_gcl_forward.1} parent=11 // pred_check
        %p552 = pneg %p207
      $region34: #{mc_e_gcl_forward.1} parent=11 // pred_check_branch
        %554 = sbr.rel (%p552) target = $region36
      $region35: #{mc_e_gcl_forward.1} parent=11 // pred_region
        _
      $region36: #{mc_e_gcl_forward.1} parent=11 // pred_fallthru
        _
      // Predicated region
      $region37: #{mc_e_gcl_forward.1} parent=11 // pred_check
        %p555 = pneg %p228
      $region38: #{mc_e_gcl_forward.1} parent=11 // pred_check_branch
        %557 = sbr.rel (%p555) target = $region40
      $region39: #{mc_e_gcl_forward.1} parent=11 // pred_region
        _
      $region40: #{mc_e_gcl_forward.1} parent=11 // pred_fallthru
        _
      // Predicated region
      $region41: #{mc_e_gcl_forward.1} parent=11 // pred_check
        %p558 = pneg %p249
      $region42: #{mc_e_gcl_forward.1} parent=11 // pred_check_branch
        %560 = sbr.rel (%p558) target = $region44
      $region43: #{mc_e_gcl_forward.1} parent=11 // pred_region
        _
      $region44: #{mc_e_gcl_forward.1} parent=11 // pred_fallthru
        _
      // Predicated region
      $region45: #{mc_e_gcl_forward.1} parent=11 // pred_check
        %p561 = pneg %p270
      $region46: #{mc_e_gcl_forward.1} parent=11 // pred_check_branch
        %563 = sbr.rel (%p561) target = $region48
      $region47: #{mc_e_gcl_forward.1} parent=11 // pred_region
        _
      $region48: #{mc_e_gcl_forward.1} parent=11 // pred_fallthru
        _
      // Predicated region
      $region49: #{mc_e_gcl_forward.1} parent=11 // pred_check
        %p564 = pneg %p291
      $region50: #{mc_e_gcl_forward.1} parent=11 // pred_check_branch
        %566 = sbr.rel (%p564) target = $region52
      $region51: #{mc_e_gcl_forward.1} parent=11 // pred_region
        _
      $region52: #{mc_e_gcl_forward.1} parent=11 // pred_fallthru
        _
      // Predicated region
      $region53: #{mc_e_gcl_forward.1} parent=11 // pred_check
        %p567 = pneg %p312
      $region54: #{mc_e_gcl_forward.1} parent=11 // pred_check_branch
        %569 = sbr.rel (%p567) target = $region56
      $region55: #{mc_e_gcl_forward.1} parent=11 // pred_region
        _
      $region56: #{mc_e_gcl_forward.1} parent=11 // pred_fallthru
        _
      // Predicated region
      $region57: #{mc_e_gcl_forward.1} parent=11 // pred_check
        %p570 = pneg %p333
      $region58: #{mc_e_gcl_forward.1} parent=11 // pred_check_branch
        %572 = sbr.rel (%p570) target = $region60
      $region59: #{mc_e_gcl_forward.1} parent=11 // pred_region
        _
      $region60: #{mc_e_gcl_forward.1} parent=11 // pred_fallthru
        _
      // Predicated region
      $region61: #{mc_e_gcl_forward.1} parent=11 // pred_check
        %p573 = pneg %p354
      $region62: #{mc_e_gcl_forward.1} parent=11 // pred_check_branch
        %575 = sbr.rel (%p573) target = $region64
      $region63: #{mc_e_gcl_forward.1} parent=11 // pred_region
        _
      $region64: #{mc_e_gcl_forward.1} parent=11 // pred_fallthru
        _
      // Predicated region
      $region65: #{mc_e_gcl_forward.1} parent=11 // pred_check
        %p576 = pneg %p375
      $region66: #{mc_e_gcl_forward.1} parent=11 // pred_check_branch
        %578 = sbr.rel (%p576) target = $region68
      $region67: #{mc_e_gcl_forward.1} parent=11 // pred_region
        _
      $region68: #{mc_e_gcl_forward.1} parent=11 // pred_fallthru
        _
      // Predicated region
      $region69: #{mc_e_gcl_forward.1} parent=11 // pred_check
        %p579 = pneg %p396
      $region70: #{mc_e_gcl_forward.1} parent=11 // pred_check_branch
        %581 = sbr.rel (%p579) target = $region72
      $region71: #{mc_e_gcl_forward.1} parent=11 // pred_region
        _
      $region72: #{mc_e_gcl_forward.1} parent=11 // pred_fallthru
        _
      // Predicated region
      $region73: #{mc_e_gcl_forward.1} parent=11 // pred_check
        %p582 = pneg %p417
      $region74: #{mc_e_gcl_forward.1} parent=11 // pred_check_branch
        %584 = sbr.rel (%p582) target = $region76
      $region75: #{mc_e_gcl_forward.1} parent=11 // pred_region
        _
      $region76: #{mc_e_gcl_forward.1} parent=11 // pred_fallthru
        _
      // Predicated region
      $region77: #{mc_e_gcl_forward.1} parent=11 // pred_check
        %p585 = pneg %p438
      $region78: #{mc_e_gcl_forward.1} parent=11 // pred_check_branch
        %587 = sbr.rel (%p585) target = $region80
      $region79: #{mc_e_gcl_forward.1} parent=11 // pred_region
        _
      $region80: #{mc_e_gcl_forward.1} parent=11 // pred_fallthru
        _
      // Predicated region
      $region81: #{mc_e_gcl_forward.1} parent=11 // pred_check
        %p588 = pneg %p459
      $region82: #{mc_e_gcl_forward.1} parent=11 // pred_check_branch
        %590 = sbr.rel (%p588) target = $region84
      $region83: #{mc_e_gcl_forward.1} parent=11 // pred_region
        _
      $region84: #{mc_e_gcl_forward.1} parent=11 // pred_fallthru
        _
      // Predicated region
      $region85: #{mc_e_gcl_forward.1} parent=11 // pred_check
        %p591 = pneg %p480
      $region86: #{mc_e_gcl_forward.1} parent=11 // pred_check_branch
        %593 = sbr.rel (%p591) target = $region88
      $region87: #{mc_e_gcl_forward.1} parent=11 // pred_region
        _
      $region88: #{mc_e_gcl_forward.1} parent=11 // pred_fallthru
        _
    $region12: #{mc_e_gcl_forward.1} parent=5 // pred_fallthru
      _
    %p594 = scmp.lt.s32.totalorder %s29, 2
    // Predicated region
    $region89: #{mc_e_gcl_forward.1} parent=5 // pred_check
      %p595 = pneg %p594
    $region90: #{mc_e_gcl_forward.1} parent=5 // pred_check_branch
      %597 = sbr.rel (%p595) target = $region92
    $region91: #{mc_e_gcl_forward.1} parent=5 // pred_region
      // Predicated region
      $region93: #{mc_e_gcl_forward.1} parent=91 // pred_check
        %p598 = pneg %p49
      $region94: #{mc_e_gcl_forward.1} parent=91 // pred_check_branch
        %600 = sbr.rel (%p598) target = $region96
      $region95: #{mc_e_gcl_forward.1} parent=91 // pred_region
        %s601 = smul.u32 8, %s29
        %p602 = scmp.lt.s32.totalorder %s601, 15
        %s603 = scalar_select %p602, %s601, 15
        %s604 = smul.addr %s603, 8
        %s605 = scalar_lea.vmem %s0, %s604
        %s606 = smul.u32 8, %s29
      $region96: #{mc_e_gcl_forward.1} parent=91 // pred_fallthru
        _
      // Predicated region
      $region97: #{mc_e_gcl_forward.1} parent=91 // pred_check
        %p607 = pneg %p75
      $region98: #{mc_e_gcl_forward.1} parent=91 // pred_check_branch
        %609 = sbr.rel (%p607) target = $region100
      $region99: #{mc_e_gcl_forward.1} parent=91 // pred_region
        %s610 = smul.u32 8, %s29
        %p611 = scmp.lt.s32.totalorder %s610, 15
        %s612 = scalar_select %p611, %s610, 15
        %s613 = smul.addr %s612, 8
        %s614 = scalar_lea.vmem %s1, %s613
        %s615 = smul.u32 8, %s29
      $region100: #{mc_e_gcl_forward.1} parent=91 // pred_fallthru
        _
    $region92: #{mc_e_gcl_forward.1} parent=5 // pred_fallthru
      _
    %p616 = scmp.le.s32.totalorder 1, %s29
    %p617 = scmp.lt.s32.totalorder %s29, 3
    %p618 = pnand %p616, %p617
    %p619 = pneg %p618
    // Predicated region
    $region101: #{mc_e_gcl_forward.1} parent=5 // pred_check
      _
    $region102: #{mc_e_gcl_forward.1} parent=5 // pred_check_branch
      %621 = sbr.rel (%p618) target = $region104
    $region103: #{mc_e_gcl_forward.1} parent=5 // pred_region
      %s622 = ssub.s32 %s29, 1
      %s623 = smul.u32 8, %s34
      %p624 = scmp.lt.s32.totalorder %s623, 15
      %s625 = scalar_select %p624, %s623, 15
      %s626 = smul.addr %s625, 8
      %s627 = scalar_lea.vmem %s0, %s626
      %p628 = pneg %p55
      %p629 = pneg %p52
      %s630 = smul.u32 8, %s34
      %p631 = scmp.lt.s32.totalorder %s630, 15
      %s632 = scalar_select %p631, %s630, 15
      %s633 = smul.addr %s632, 8
      %s634 = scalar_lea.vmem %s1, %s633
      %p635 = pneg %p81
      %p636 = pneg %p78
      %p637 = pneg %p102
      %p638 = pneg %p99
      %p639 = pneg %p123
      %p640 = pneg %p120
      %p641 = pneg %p144
      %p642 = pneg %p141
      %p643 = pneg %p165
      %p644 = pneg %p162
      %p645 = pneg %p186
      %p646 = pneg %p183
      %p647 = pneg %p207
      %p648 = pneg %p204
      %p649 = pneg %p228
      %p650 = pneg %p225
      %p651 = pneg %p249
      %p652 = pneg %p246
      %p653 = pneg %p270
      %p654 = pneg %p267
      %p655 = pneg %p291
      %p656 = pneg %p288
      %p657 = pneg %p312
      %p658 = pneg %p309
      %p659 = pneg %p333
      %p660 = pneg %p330
      %p661 = pneg %p354
      %p662 = pneg %p351
      %p663 = pneg %p375
      %p664 = pneg %p372
      %p665 = pneg %p396
      %p666 = pneg %p393
      %p667 = pneg %p417
      %p668 = pneg %p414
      %p669 = pneg %p438
      %p670 = pneg %p435
      %p671 = pneg %p459
      %p672 = pneg %p456
      %p673 = pneg %p480
      %p674 = pneg %p477
      %p675 = pneg %p501
      %p676 = pneg %p498
      %p677 = pneg %p522
      %p678 = pneg %p519
      %s679 = smul.u32 8, %s34
      %p680 = scmp.lt.s32.totalorder %s679, 15
      %s681 = scalar_select %p680, %s679, 15
      %s682 = smul.addr %s681, 8
      %s683 = scalar_lea.vmem %s0, %s682
      %s684 = smul.u32 8, %s34
      %s685 = smul.u32 8, %s34
      %p686 = scmp.lt.s32.totalorder %s685, 15
      %s687 = scalar_select %p686, %s685, 15
      %s688 = smul.addr %s687, 8
      %s689 = scalar_lea.vmem %s1, %s688
      %s690 = smul.u32 8, %s34
      %p691 = scmp.eq.s32.totalorder %s34, 0
      // Predicated region
      $region105: #{mc_e_gcl_forward.1} parent=103 // pred_check
        %p692 = pneg %p691
      $region106: #{mc_e_gcl_forward.1} parent=103 // pred_check_branch
        %694 = sbr.rel (%p692) target = $region108
      $region107: #{mc_e_gcl_forward.1} parent=103 // pred_region
        %vm695 = vcmask 367616
        %696 = vst.msk [vmem:[#allocation2] sm:$0xff] %vm695, 0.0
        %697 = vst.msk [vmem:[#allocation2 + $0x8] sm:$0xff] %vm695, 0.0
      $region108: #{mc_e_gcl_forward.1} parent=103 // pred_fallthru
        _
      %v698 = vlaneseq
      %v699 = vand.u32 %v698, 127
      %v700 = vld [vmem:[%s683] sm:$0xff]
      %v701 = vld [vmem:[%s683 + $0x8] sm:$0xff]
      %v702 = vld [vmem:[%s683 + $0x10] sm:$0xff]
      %v703 = vld [vmem:[%s683 + $0x18] sm:$0xff]
      %v704 = vld [vmem:[%s683 + $0x20] sm:$0xff]
      %v705 = vld [vmem:[%s683 + $0x28] sm:$0xff]
      %v706 = vld [vmem:[%s683 + $0x30] sm:$0xff]
      %v707 = vld [vmem:[%s683 + $0x38] sm:$0xff]
      %708 = vset.pattern.permute.xlu0 0
      %709 = vperm.xlu0 %708, %v700
      %v710 = vpop.permute.xlu0 %709
      %711 = vset.pattern.permute.xlu0 0
      %712 = vperm.xlu0 %711, %v701
      %v713 = vpop.permute.xlu0 %712
      %714 = vset.pattern.permute.xlu0 0
      %715 = vperm.xlu0 %714, %v702
      %v716 = vpop.permute.xlu0 %715
      %717 = vset.pattern.permute.xlu0 0
      %718 = vperm.xlu0 %717, %v703
      %v719 = vpop.permute.xlu0 %718
      %720 = vset.pattern.permute.xlu0 0
      %721 = vperm.xlu0 %720, %v704
      %v722 = vpop.permute.xlu0 %721
      %723 = vset.pattern.permute.xlu0 0
      %724 = vperm.xlu0 %723, %v705
      %v725 = vpop.permute.xlu0 %724
      %726 = vset.pattern.permute.xlu0 0
      %727 = vperm.xlu0 %726, %v706
      %v728 = vpop.permute.xlu0 %727
      %729 = vset.pattern.permute.xlu0 0
      %730 = vperm.xlu0 %729, %v707
      %v731 = vpop.permute.xlu0 %730
      %vm732 = vcmp.eq.s32.totalorder %v710, %v699
      %vm733 = vcmp.eq.s32.totalorder %v713, %v699
      %vm734 = vcmp.eq.s32.totalorder %v716, %v699
      %vm735 = vcmp.eq.s32.totalorder %v719, %v699
      %vm736 = vcmp.eq.s32.totalorder %v722, %v699
      %vm737 = vcmp.eq.s32.totalorder %v725, %v699
      %vm738 = vcmp.eq.s32.totalorder %v728, %v699
      %vm739 = vcmp.eq.s32.totalorder %v731, %v699
      %v740 = vsel %vm732, 1, 0
      %v741 = vsel %vm733, 1, 0
      %v742 = vsel %vm734, 1, 0
      %v743 = vsel %vm735, 1, 0
      %v744 = vsel %vm736, 1, 0
      %v745 = vsel %vm737, 1, 0
      %v746 = vsel %vm738, 1, 0
      %v747 = vsel %vm739, 1, 0
      %v748 = vcvt.s32.f32 %v740
      %v749 = vcvt.s32.f32 %v741
      %v750 = vcvt.s32.f32 %v742
      %v751 = vcvt.s32.f32 %v743
      %v752 = vcvt.s32.f32 %v744
      %v753 = vcvt.s32.f32 %v745
      %v754 = vcvt.s32.f32 %v746
      %v755 = vcvt.s32.f32 %v747
      %v756 = vld [vmem:[%s689] sm:$0xff]
      %v757 = vld [vmem:[%s689 + $0x8] sm:$0xff]
      %v758 = vld [vmem:[%s689 + $0x10] sm:$0xff]
      %v759 = vld [vmem:[%s689 + $0x18] sm:$0xff]
      %v760 = vld [vmem:[%s689 + $0x20] sm:$0xff]
      %v761 = vld [vmem:[%s689 + $0x28] sm:$0xff]
      %v762 = vld [vmem:[%s689 + $0x30] sm:$0xff]
      %v763 = vld [vmem:[%s689 + $0x38] sm:$0xff]
      %764 = vset.pattern.permute.xlu0 0
      %765 = vperm.xlu0 %764, %v756
      %v766 = vpop.permute.xlu0 %765
      %767 = vset.pattern.permute.xlu0 0
      %768 = vperm.xlu0 %767, %v757
      %v769 = vpop.permute.xlu0 %768
      %770 = vset.pattern.permute.xlu0 0
      %771 = vperm.xlu0 %770, %v758
      %v772 = vpop.permute.xlu0 %771
      %773 = vset.pattern.permute.xlu0 0
      %774 = vperm.xlu0 %773, %v759
      %v775 = vpop.permute.xlu0 %774
      %776 = vset.pattern.permute.xlu0 0
      %777 = vperm.xlu0 %776, %v760
      %v778 = vpop.permute.xlu0 %777
      %779 = vset.pattern.permute.xlu0 0
      %780 = vperm.xlu0 %779, %v761
      %v781 = vpop.permute.xlu0 %780
      %782 = vset.pattern.permute.xlu0 0
      %783 = vperm.xlu0 %782, %v762
      %v784 = vpop.permute.xlu0 %783
      %785 = vset.pattern.permute.xlu0 0
      %786 = vperm.xlu0 %785, %v763
      %v787 = vpop.permute.xlu0 %786
      %vm788 = vcmp.eq.s32.totalorder %v766, %v699
      %vm789 = vcmp.eq.s32.totalorder %v769, %v699
      %vm790 = vcmp.eq.s32.totalorder %v772, %v699
      %vm791 = vcmp.eq.s32.totalorder %v775, %v699
      %vm792 = vcmp.eq.s32.totalorder %v778, %v699
      %vm793 = vcmp.eq.s32.totalorder %v781, %v699
      %vm794 = vcmp.eq.s32.totalorder %v784, %v699
      %vm795 = vcmp.eq.s32.totalorder %v787, %v699
      %v796 = vsel %vm788, 1, 0
      %v797 = vsel %vm789, 1, 0
      %v798 = vsel %vm790, 1, 0
      %v799 = vsel %vm791, 1, 0
      %v800 = vsel %vm792, 1, 0
      %v801 = vsel %vm793, 1, 0
      %v802 = vsel %vm794, 1, 0
      %v803 = vsel %vm795, 1, 0
      %v804 = vcvt.s32.f32 %v796
      %v805 = vcvt.s32.f32 %v797
      %v806 = vcvt.s32.f32 %v798
      %v807 = vcvt.s32.f32 %v799
      %v808 = vcvt.s32.f32 %v800
      %v809 = vcvt.s32.f32 %v801
      %v810 = vcvt.s32.f32 %v802
      %v811 = vcvt.s32.f32 %v803
      %v812 = vsub.f32 %v748, %v804
      %v813 = vsub.f32 %v749, %v805
      %v814 = vsub.f32 %v750, %v806
      %v815 = vsub.f32 %v751, %v807
      %v816 = vsub.f32 %v752, %v808
      %v817 = vsub.f32 %v753, %v809
      %v818 = vsub.f32 %v754, %v810
      %v819 = vsub.f32 %v755, %v811
      %v820 = vld [vmem:[%s2] sm:$0xff]
      %v821 = vld [vmem:[%s2 + $0x8] sm:$0xff]
      %vm822 = vcmask 130048
      %v824 = vsel %vm822, %v748, 0
      %v827 = vsel %vm822, %v749, 0
      %v830 = vsel %vm822, %v750, 0
      %v833 = vsel %vm822, %v751, 0
      %v836 = vsel %vm822, %v752, 0
      %v839 = vsel %vm822, %v753, 0
      %v842 = vsel %vm822, %v754, 0
      %v845 = vsel %vm822, %v755, 0
      %847 = vmatprep.subr.mxu0 0.0
      %848 = vmatpush1.msra.mxu0 0.0
      %849 = vmatprep.subr.mxu0 0.0
      %850 = vmatpush1.msra.mxu0 0.0
      %851 = vmatprep.subr.mxu0 0.0
      %852 = vmatpush1.msra.mxu0 0.0
      %853 = vmatprep.subr.mxu0 0.0
      %854 = vmatpush1.msra.mxu0 0.0
      %855 = vmatprep.subr.mxu0 0.0
      %856 = vmatpush1.msra.mxu0 0.0
      %857 = vmatprep.subr.mxu0 0.0
      %858 = vmatpush1.msra.mxu0 0.0
      %859 = vmatprep.subr.mxu0 0.0
      %860 = vmatpush1.msra.mxu0 0.0
      %861 = vmatprep.subr.mxu0 0.0
      %862 = vmatpush1.msra.mxu0 0.0
      %863 = vmatprep.subr.mxu0 0.0
      %864 = vmatpush1.msra.mxu0 0.0
      %865 = vmatprep.subr.mxu0 0.0
      %866 = vmatpush1.msra.mxu0 0.0
      %867 = vmatprep.subr.mxu0 0.0
      %868 = vmatpush1.msra.mxu0 0.0
      %869 = vmatprep.subr.mxu0 0.0
      %870 = vmatpush1.msra.mxu0 0.0
      %871 = vmatprep.subr.mxu0 0.0
      %872 = vmatpush1.msra.mxu0 0.0
      %873 = vmatprep.subr.mxu0 0.0
      %874 = vmatpush1.msra.mxu0 0.0
      %875 = vmatprep.subr.mxu0 0.0
      %876 = vmatpush1.msra.mxu0 %v821
      %877 = vmatprep.subr.mxu0 0.0
      %878 = vmatpush1.msra.mxu0 %v820
      %879 = vmatprep.subr.mxu0 0.0
      %880 = vmatpush2.msra.mxu0 0.0
      %881 = vmatprep.subr.mxu0 0.0
      %882 = vmatpush2.msra.mxu0 0.0
      %883 = vmatprep.subr.mxu0 0.0
      %884 = vmatpush2.msra.mxu0 0.0
      %885 = vmatprep.subr.mxu0 0.0
      %886 = vmatpush2.msra.mxu0 0.0
      %887 = vmatprep.subr.mxu0 0.0
      %888 = vmatpush2.msra.mxu0 0.0
      %889 = vmatprep.subr.mxu0 0.0
      %890 = vmatpush2.msra.mxu0 0.0
      %891 = vmatprep.subr.mxu0 0.0
      %892 = vmatpush2.msra.mxu0 0.0
      %893 = vmatprep.subr.mxu0 0.0
      %894 = vmatpush2.msra.mxu0 0.0
      %895 = vmatprep.subr.mxu0 0.0
      %896 = vmatpush2.msra.mxu0 0.0
      %897 = vmatprep.subr.mxu0 0.0
      %898 = vmatpush2.msra.mxu0 0.0
      %899 = vmatprep.subr.mxu0 0.0
      %900 = vmatpush2.msra.mxu0 0.0
      %901 = vmatprep.subr.mxu0 0.0
      %902 = vmatpush2.msra.mxu0 0.0
      %903 = vmatprep.subr.mxu0 0.0
      %904 = vmatpush2.msra.mxu0 0.0
      %905 = vmatprep.subr.mxu0 0.0
      %906 = vmatpush2.msra.mxu0 0.0
      %907 = vmatprep.subr.mxu0 0.0
      %908 = vmatpush2.msra.mxu0 0.0
      %909 = vmatprep.subr.mxu0 0.0
      %910 = vmatpush2.msra.mxu0 0.0
      %911 = vmatprep.mubr.f32.mxu0 0.0
      %912 = vmatmul.mubr.f32.gmra.mxu0 %v824
      %v913 = vpop.f32.mrf.mxu0
      %v914 = vadd.f32 0.0, %v913
      %v915 = vpop.f32.mrf.mxu0
      %916 = vmatprep.mubr.f32.mxu0 0.0
      %917 = vmatmul.mubr.f32.gmra.mxu0 %v827
      %v918 = vpop.f32.mrf.mxu0
      %v919 = vadd.f32 0.0, %v918
      %v920 = vpop.f32.mrf.mxu0
      %921 = vmatprep.mubr.f32.mxu0 0.0
      %922 = vmatmul.mubr.f32.gmra.mxu0 %v830
      %v923 = vpop.f32.mrf.mxu0
      %v924 = vadd.f32 0.0, %v923
      %v925 = vpop.f32.mrf.mxu0
      %926 = vmatprep.mubr.f32.mxu0 0.0
      %927 = vmatmul.mubr.f32.gmra.mxu0 %v833
      %v928 = vpop.f32.mrf.mxu0
      %v929 = vadd.f32 0.0, %v928
      %v930 = vpop.f32.mrf.mxu0
      %931 = vmatprep.mubr.f32.mxu0 0.0
      %932 = vmatmul.mubr.f32.gmra.mxu0 %v836
      %v933 = vpop.f32.mrf.mxu0
      %v934 = vadd.f32 0.0, %v933
      %v935 = vpop.f32.mrf.mxu0
      %936 = vmatprep.mubr.f32.mxu0 0.0
      %937 = vmatmul.mubr.f32.gmra.mxu0 %v839
      %v938 = vpop.f32.mrf.mxu0
      %v939 = vadd.f32 0.0, %v938
      %v940 = vpop.f32.mrf.mxu0
      %941 = vmatprep.mubr.f32.mxu0 0.0
      %942 = vmatmul.mubr.f32.gmra.mxu0 %v842
      %v943 = vpop.f32.mrf.mxu0
      %v944 = vadd.f32 0.0, %v943
      %v945 = vpop.f32.mrf.mxu0
      %946 = vmatprep.mubr.f32.mxu0 0.0
      %947 = vmatmul.mubr.f32.gmra.mxu0 %v845
      %v948 = vpop.f32.mrf.mxu0
      %v949 = vadd.f32 0.0, %v948
      %v950 = vpop.f32.mrf.mxu0
      %951 = vdwg.mxu0
      %v953 = vsel %vm822, %v804, 0
      %v956 = vsel %vm822, %v805, 0
      %v959 = vsel %vm822, %v806, 0
      %v962 = vsel %vm822, %v807, 0
      %v965 = vsel %vm822, %v808, 0
      %v968 = vsel %vm822, %v809, 0
      %v971 = vsel %vm822, %v810, 0
      %v974 = vsel %vm822, %v811, 0
      %976 = vmatprep.subr.mxu0 0.0
      %977 = vmatpush1.msra.mxu0 0.0
      %978 = vmatprep.subr.mxu0 0.0
      %979 = vmatpush1.msra.mxu0 0.0
      %980 = vmatprep.subr.mxu0 0.0
      %981 = vmatpush1.msra.mxu0 0.0
      %982 = vmatprep.subr.mxu0 0.0
      %983 = vmatpush1.msra.mxu0 0.0
      %984 = vmatprep.subr.mxu0 0.0
      %985 = vmatpush1.msra.mxu0 0.0
      %986 = vmatprep.subr.mxu0 0.0
      %987 = vmatpush1.msra.mxu0 0.0
      %988 = vmatprep.subr.mxu0 0.0
      %989 = vmatpush1.msra.mxu0 0.0
      %990 = vmatprep.subr.mxu0 0.0
      %991 = vmatpush1.msra.mxu0 0.0
      %992 = vmatprep.subr.mxu0 0.0
      %993 = vmatpush1.msra.mxu0 0.0
      %994 = vmatprep.subr.mxu0 0.0
      %995 = vmatpush1.msra.mxu0 0.0
      %996 = vmatprep.subr.mxu0 0.0
      %997 = vmatpush1.msra.mxu0 0.0
      %998 = vmatprep.subr.mxu0 0.0
      %999 = vmatpush1.msra.mxu0 0.0
      %1000 = vmatprep.subr.mxu0 0.0
      %1001 = vmatpush1.msra.mxu0 0.0
      %1002 = vmatprep.subr.mxu0 0.0
      %1003 = vmatpush1.msra.mxu0 0.0
      %1004 = vmatprep.subr.mxu0 0.0
      %1005 = vmatpush1.msra.mxu0 %v821
      %1006 = vmatprep.subr.mxu0 0.0
      %1007 = vmatpush1.msra.mxu0 %v820
      %1008 = vmatprep.subr.mxu0 0.0
      %1009 = vmatpush2.msra.mxu0 0.0
      %1010 = vmatprep.subr.mxu0 0.0
      %1011 = vmatpush2.msra.mxu0 0.0
      %1012 = vmatprep.subr.mxu0 0.0
      %1013 = vmatpush2.msra.mxu0 0.0
      %1014 = vmatprep.subr.mxu0 0.0
      %1015 = vmatpush2.msra.mxu0 0.0
      %1016 = vmatprep.subr.mxu0 0.0
      %1017 = vmatpush2.msra.mxu0 0.0
      %1018 = vmatprep.subr.mxu0 0.0
      %1019 = vmatpush2.msra.mxu0 0.0
      %1020 = vmatprep.subr.mxu0 0.0
      %1021 = vmatpush2.msra.mxu0 0.0
      %1022 = vmatprep.subr.mxu0 0.0
      %1023 = vmatpush2.msra.mxu0 0.0
      %1024 = vmatprep.subr.mxu0 0.0
      %1025 = vmatpush2.msra.mxu0 0.0
      %1026 = vmatprep.subr.mxu0 0.0
      %1027 = vmatpush2.msra.mxu0 0.0
      %1028 = vmatprep.subr.mxu0 0.0
      %1029 = vmatpush2.msra.mxu0 0.0
      %1030 = vmatprep.subr.mxu0 0.0
      %1031 = vmatpush2.msra.mxu0 0.0
      %1032 = vmatprep.subr.mxu0 0.0
      %1033 = vmatpush2.msra.mxu0 0.0
      %1034 = vmatprep.subr.mxu0 0.0
      %1035 = vmatpush2.msra.mxu0 0.0
      %1036 = vmatprep.subr.mxu0 0.0
      %1037 = vmatpush2.msra.mxu0 0.0
      %1038 = vmatprep.subr.mxu0 0.0
      %1039 = vmatpush2.msra.mxu0 0.0
      %1040 = vmatprep.mubr.f32.mxu0 0.0
      %1041 = vmatmul.mubr.f32.gmra.mxu0 %v953
      %v1042 = vpop.f32.mrf.mxu0
      %v1043 = vadd.f32 0.0, %v1042
      %v1044 = vpop.f32.mrf.mxu0
      %1045 = vmatprep.mubr.f32.mxu0 0.0
      %1046 = vmatmul.mubr.f32.gmra.mxu0 %v956
      %v1047 = vpop.f32.mrf.mxu0
      %v1048 = vadd.f32 0.0, %v1047
      %v1049 = vpop.f32.mrf.mxu0
      %1050 = vmatprep.mubr.f32.mxu0 0.0
      %1051 = vmatmul.mubr.f32.gmra.mxu0 %v959
      %v1052 = vpop.f32.mrf.mxu0
      %v1053 = vadd.f32 0.0, %v1052
      %v1054 = vpop.f32.mrf.mxu0
      %1055 = vmatprep.mubr.f32.mxu0 0.0
      %1056 = vmatmul.mubr.f32.gmra.mxu0 %v962
      %v1057 = vpop.f32.mrf.mxu0
      %v1058 = vadd.f32 0.0, %v1057
      %v1059 = vpop.f32.mrf.mxu0
      %1060 = vmatprep.mubr.f32.mxu0 0.0
      %1061 = vmatmul.mubr.f32.gmra.mxu0 %v965
      %v1062 = vpop.f32.mrf.mxu0
      %v1063 = vadd.f32 0.0, %v1062
      %v1064 = vpop.f32.mrf.mxu0
      %1065 = vmatprep.mubr.f32.mxu0 0.0
      %1066 = vmatmul.mubr.f32.gmra.mxu0 %v968
      %v1067 = vpop.f32.mrf.mxu0
      %v1068 = vadd.f32 0.0, %v1067
      %v1069 = vpop.f32.mrf.mxu0
      %1070 = vmatprep.mubr.f32.mxu0 0.0
      %1071 = vmatmul.mubr.f32.gmra.mxu0 %v971
      %v1072 = vpop.f32.mrf.mxu0
      %v1073 = vadd.f32 0.0, %v1072
      %v1074 = vpop.f32.mrf.mxu0
      %1075 = vmatprep.mubr.f32.mxu0 0.0
      %1076 = vmatmul.mubr.f32.gmra.mxu0 %v974
      %v1077 = vpop.f32.mrf.mxu0
      %v1078 = vadd.f32 0.0, %v1077
      %v1079 = vpop.f32.mrf.mxu0
      %1080 = vdwg.mxu0
      %v1081 = vld [vmem:[%s3] sm:$0xff]
      %v1082 = vld [vmem:[%s3 + $0x8] sm:$0xff]
      %v1084 = vsel %vm822, %v812, 0
      %v1087 = vsel %vm822, %v813, 0
      %v1090 = vsel %vm822, %v814, 0
      %v1093 = vsel %vm822, %v815, 0
      %v1096 = vsel %vm822, %v816, 0
      %v1099 = vsel %vm822, %v817, 0
      %v1102 = vsel %vm822, %v818, 0
      %v1105 = vsel %vm822, %v819, 0
      %1107 = vmatprep.subr.mxu0 0.0
      %1108 = vmatpush1.msra.mxu0 0.0
      %1109 = vmatprep.subr.mxu0 0.0
      %1110 = vmatpush1.msra.mxu0 0.0
      %1111 = vmatprep.subr.mxu0 0.0
      %1112 = vmatpush1.msra.mxu0 0.0
      %1113 = vmatprep.subr.mxu0 0.0
      %1114 = vmatpush1.msra.mxu0 0.0
      %1115 = vmatprep.subr.mxu0 0.0
      %1116 = vmatpush1.msra.mxu0 0.0
      %1117 = vmatprep.subr.mxu0 0.0
      %1118 = vmatpush1.msra.mxu0 0.0
      %1119 = vmatprep.subr.mxu0 0.0
      %1120 = vmatpush1.msra.mxu0 0.0
      %1121 = vmatprep.subr.mxu0 0.0
      %1122 = vmatpush1.msra.mxu0 0.0
      %1123 = vmatprep.subr.mxu0 0.0
      %1124 = vmatpush1.msra.mxu0 0.0
      %1125 = vmatprep.subr.mxu0 0.0
      %1126 = vmatpush1.msra.mxu0 0.0
      %1127 = vmatprep.subr.mxu0 0.0
      %1128 = vmatpush1.msra.mxu0 0.0
      %1129 = vmatprep.subr.mxu0 0.0
      %1130 = vmatpush1.msra.mxu0 0.0
      %1131 = vmatprep.subr.mxu0 0.0
      %1132 = vmatpush1.msra.mxu0 0.0
      %1133 = vmatprep.subr.mxu0 0.0
      %1134 = vmatpush1.msra.mxu0 0.0
      %1135 = vmatprep.subr.mxu0 0.0
      %1136 = vmatpush1.msra.mxu0 %v1082
      %1137 = vmatprep.subr.mxu0 0.0
      %1138 = vmatpush1.msra.mxu0 %v1081
      %1139 = vmatprep.subr.mxu0 0.0
      %1140 = vmatpush2.msra.mxu0 0.0
      %1141 = vmatprep.subr.mxu0 0.0
      %1142 = vmatpush2.msra.mxu0 0.0
      %1143 = vmatprep.subr.mxu0 0.0
      %1144 = vmatpush2.msra.mxu0 0.0
      %1145 = vmatprep.subr.mxu0 0.0
      %1146 = vmatpush2.msra.mxu0 0.0
      %1147 = vmatprep.subr.mxu0 0.0
      %1148 = vmatpush2.msra.mxu0 0.0
      %1149 = vmatprep.subr.mxu0 0.0
      %1150 = vmatpush2.msra.mxu0 0.0
      %1151 = vmatprep.subr.mxu0 0.0
      %1152 = vmatpush2.msra.mxu0 0.0
      %1153 = vmatprep.subr.mxu0 0.0
      %1154 = vmatpush2.msra.mxu0 0.0
      %1155 = vmatprep.subr.mxu0 0.0
      %1156 = vmatpush2.msra.mxu0 0.0
      %1157 = vmatprep.subr.mxu0 0.0
      %1158 = vmatpush2.msra.mxu0 0.0
      %1159 = vmatprep.subr.mxu0 0.0
      %1160 = vmatpush2.msra.mxu0 0.0
      %1161 = vmatprep.subr.mxu0 0.0
      %1162 = vmatpush2.msra.mxu0 0.0
      %1163 = vmatprep.subr.mxu0 0.0
      %1164 = vmatpush2.msra.mxu0 0.0
      %1165 = vmatprep.subr.mxu0 0.0
      %1166 = vmatpush2.msra.mxu0 0.0
      %1167 = vmatprep.subr.mxu0 0.0
      %1168 = vmatpush2.msra.mxu0 0.0
      %1169 = vmatprep.subr.mxu0 0.0
      %1170 = vmatpush2.msra.mxu0 0.0
      %1171 = vmatprep.mubr.f32.mxu0 0.0
      %1172 = vmatmul.mubr.f32.gmra.mxu0 %v1084
      %v1173 = vpop.f32.mrf.mxu0
      %v1174 = vadd.f32 0.0, %v1173
      %v1175 = vpop.f32.mrf.mxu0
      %1176 = vmatprep.mubr.f32.mxu0 0.0
      %1177 = vmatmul.mubr.f32.gmra.mxu0 %v1087
      %v1178 = vpop.f32.mrf.mxu0
      %v1179 = vadd.f32 0.0, %v1178
      %v1180 = vpop.f32.mrf.mxu0
      %1181 = vmatprep.mubr.f32.mxu0 0.0
      %1182 = vmatmul.mubr.f32.gmra.mxu0 %v1090
      %v1183 = vpop.f32.mrf.mxu0
      %v1184 = vadd.f32 0.0, %v1183
      %v1185 = vpop.f32.mrf.mxu0
      %1186 = vmatprep.mubr.f32.mxu0 0.0
      %1187 = vmatmul.mubr.f32.gmra.mxu0 %v1093
      %v1188 = vpop.f32.mrf.mxu0
      %v1189 = vadd.f32 0.0, %v1188
      %v1190 = vpop.f32.mrf.mxu0
      %1191 = vmatprep.mubr.f32.mxu0 0.0
      %1192 = vmatmul.mubr.f32.gmra.mxu0 %v1096
      %v1193 = vpop.f32.mrf.mxu0
      %v1194 = vadd.f32 0.0, %v1193
      %v1195 = vpop.f32.mrf.mxu0
      %1196 = vmatprep.mubr.f32.mxu0 0.0
      %1197 = vmatmul.mubr.f32.gmra.mxu0 %v1099
      %v1198 = vpop.f32.mrf.mxu0
      %v1199 = vadd.f32 0.0, %v1198
      %v1200 = vpop.f32.mrf.mxu0
      %1201 = vmatprep.mubr.f32.mxu0 0.0
      %1202 = vmatmul.mubr.f32.gmra.mxu0 %v1102
      %v1203 = vpop.f32.mrf.mxu0
      %v1204 = vadd.f32 0.0, %v1203
      %v1205 = vpop.f32.mrf.mxu0
      %1206 = vmatprep.mubr.f32.mxu0 0.0
      %1207 = vmatmul.mubr.f32.gmra.mxu0 %v1105
      %v1208 = vpop.f32.mrf.mxu0
      %v1209 = vadd.f32 0.0, %v1208
      %v1210 = vpop.f32.mrf.mxu0
      %1211 = vdwg.mxu0
      %v1212 = vld [vmem:[%s4] sm:$0xff]
      %v1213 = vld [vmem:[%s4 + $0x8] sm:$0xff]
      %1214 = vmatprep.subr.mxu0 0.0
      %1215 = vmatpush1.msra.mxu0 0.0
      %1216 = vmatprep.subr.mxu0 0.0
      %1217 = vmatpush1.msra.mxu0 0.0
      %1218 = vmatprep.subr.mxu0 0.0
      %1219 = vmatpush1.msra.mxu0 0.0
      %1220 = vmatprep.subr.mxu0 0.0
      %1221 = vmatpush1.msra.mxu0 0.0
      %1222 = vmatprep.subr.mxu0 0.0
      %1223 = vmatpush1.msra.mxu0 0.0
      %1224 = vmatprep.subr.mxu0 0.0
      %1225 = vmatpush1.msra.mxu0 0.0
      %1226 = vmatprep.subr.mxu0 0.0
      %1227 = vmatpush1.msra.mxu0 0.0
      %1228 = vmatprep.subr.mxu0 0.0
      %1229 = vmatpush1.msra.mxu0 0.0
      %1230 = vmatprep.subr.mxu0 0.0
      %1231 = vmatpush1.msra.mxu0 0.0
      %1232 = vmatprep.subr.mxu0 0.0
      %1233 = vmatpush1.msra.mxu0 0.0
      %1234 = vmatprep.subr.mxu0 0.0
      %1235 = vmatpush1.msra.mxu0 0.0
      %1236 = vmatprep.subr.mxu0 0.0
      %1237 = vmatpush1.msra.mxu0 0.0
      %1238 = vmatprep.subr.mxu0 0.0
      %1239 = vmatpush1.msra.mxu0 0.0
      %1240 = vmatprep.subr.mxu0 0.0
      %1241 = vmatpush1.msra.mxu0 0.0
      %1242 = vmatprep.subr.mxu0 0.0
      %1243 = vmatpush1.msra.mxu0 %v1213
      %1244 = vmatprep.subr.mxu0 0.0
      %1245 = vmatpush1.msra.mxu0 %v1212
      %1246 = vmatprep.subr.mxu0 0.0
      %1247 = vmatpush2.msra.mxu0 0.0
      %1248 = vmatprep.subr.mxu0 0.0
      %1249 = vmatpush2.msra.mxu0 0.0
      %1250 = vmatprep.subr.mxu0 0.0
      %1251 = vmatpush2.msra.mxu0 0.0
      %1252 = vmatprep.subr.mxu0 0.0
      %1253 = vmatpush2.msra.mxu0 0.0
      %1254 = vmatprep.subr.mxu0 0.0
      %1255 = vmatpush2.msra.mxu0 0.0
      %1256 = vmatprep.subr.mxu0 0.0
      %1257 = vmatpush2.msra.mxu0 0.0
      %1258 = vmatprep.subr.mxu0 0.0
      %1259 = vmatpush2.msra.mxu0 0.0
      %1260 = vmatprep.subr.mxu0 0.0
      %1261 = vmatpush2.msra.mxu0 0.0
      %1262 = vmatprep.subr.mxu0 0.0
      %1263 = vmatpush2.msra.mxu0 0.0
      %1264 = vmatprep.subr.mxu0 0.0
      %1265 = vmatpush2.msra.mxu0 0.0
      %1266 = vmatprep.subr.mxu0 0.0
      %1267 = vmatpush2.msra.mxu0 0.0
      %1268 = vmatprep.subr.mxu0 0.0
      %1269 = vmatpush2.msra.mxu0 0.0
      %1270 = vmatprep.subr.mxu0 0.0
      %1271 = vmatpush2.msra.mxu0 0.0
      %1272 = vmatprep.subr.mxu0 0.0
      %1273 = vmatpush2.msra.mxu0 0.0
      %1274 = vmatprep.subr.mxu0 0.0
      %1275 = vmatpush2.msra.mxu0 0.0
      %1276 = vmatprep.subr.mxu0 0.0
      %1277 = vmatpush2.msra.mxu0 0.0
      %1278 = vmatprep.mubr.f32.mxu0 0.0
      %1279 = vmatmul.mubr.f32.gmra.mxu0 %v1084
      %v1280 = vpop.f32.mrf.mxu0
      %v1281 = vadd.f32 0.0, %v1280
      %v1282 = vpop.f32.mrf.mxu0
      %1283 = vmatprep.mubr.f32.mxu0 0.0
      %1284 = vmatmul.mubr.f32.gmra.mxu0 %v1087
      %v1285 = vpop.f32.mrf.mxu0
      %v1286 = vadd.f32 0.0, %v1285
      %v1287 = vpop.f32.mrf.mxu0
      %1288 = vmatprep.mubr.f32.mxu0 0.0
      %1289 = vmatmul.mubr.f32.gmra.mxu0 %v1090
      %v1290 = vpop.f32.mrf.mxu0
      %v1291 = vadd.f32 0.0, %v1290
      %v1292 = vpop.f32.mrf.mxu0
      %1293 = vmatprep.mubr.f32.mxu0 0.0
      %1294 = vmatmul.mubr.f32.gmra.mxu0 %v1093
      %v1295 = vpop.f32.mrf.mxu0
      %v1296 = vadd.f32 0.0, %v1295
      %v1297 = vpop.f32.mrf.mxu0
      %1298 = vmatprep.mubr.f32.mxu0 0.0
      %1299 = vmatmul.mubr.f32.gmra.mxu0 %v1096
      %v1300 = vpop.f32.mrf.mxu0
      %v1301 = vadd.f32 0.0, %v1300
      %v1302 = vpop.f32.mrf.mxu0
      %1303 = vmatprep.mubr.f32.mxu0 0.0
      %1304 = vmatmul.mubr.f32.gmra.mxu0 %v1099
      %v1305 = vpop.f32.mrf.mxu0
      %v1306 = vadd.f32 0.0, %v1305
      %v1307 = vpop.f32.mrf.mxu0
      %1308 = vmatprep.mubr.f32.mxu0 0.0
      %1309 = vmatmul.mubr.f32.gmra.mxu0 %v1102
      %v1310 = vpop.f32.mrf.mxu0
      %v1311 = vadd.f32 0.0, %v1310
      %v1312 = vpop.f32.mrf.mxu0
      %1313 = vmatprep.mubr.f32.mxu0 0.0
      %1314 = vmatmul.mubr.f32.gmra.mxu0 %v1105
      %v1315 = vpop.f32.mrf.mxu0
      %v1316 = vadd.f32 0.0, %v1315
      %v1317 = vpop.f32.mrf.mxu0
      %1318 = vdwg.mxu0
      %v1319 = vld [vmem:[%s5] sm:$0xff]
      %v1320 = vld [vmem:[%s5 + $0x8] sm:$0xff]
      %1321 = vmatprep.subr.mxu0 0.0
      %1322 = vmatpush1.msra.mxu0 0.0
      %1323 = vmatprep.subr.mxu0 0.0
      %1324 = vmatpush1.msra.mxu0 0.0
      %1325 = vmatprep.subr.mxu0 0.0
      %1326 = vmatpush1.msra.mxu0 0.0
      %1327 = vmatprep.subr.mxu0 0.0
      %1328 = vmatpush1.msra.mxu0 0.0
      %1329 = vmatprep.subr.mxu0 0.0
      %1330 = vmatpush1.msra.mxu0 0.0
      %1331 = vmatprep.subr.mxu0 0.0
      %1332 = vmatpush1.msra.mxu0 0.0
      %1333 = vmatprep.subr.mxu0 0.0
      %1334 = vmatpush1.msra.mxu0 0.0
      %1335 = vmatprep.subr.mxu0 0.0
      %1336 = vmatpush1.msra.mxu0 0.0
      %1337 = vmatprep.subr.mxu0 0.0
      %1338 = vmatpush1.msra.mxu0 0.0
      %1339 = vmatprep.subr.mxu0 0.0
      %1340 = vmatpush1.msra.mxu0 0.0
      %1341 = vmatprep.subr.mxu0 0.0
      %1342 = vmatpush1.msra.mxu0 0.0
      %1343 = vmatprep.subr.mxu0 0.0
      %1344 = vmatpush1.msra.mxu0 0.0
      %1345 = vmatprep.subr.mxu0 0.0
      %1346 = vmatpush1.msra.mxu0 0.0
      %1347 = vmatprep.subr.mxu0 0.0
      %1348 = vmatpush1.msra.mxu0 0.0
      %1349 = vmatprep.subr.mxu0 0.0
      %1350 = vmatpush1.msra.mxu0 %v1320
      %1351 = vmatprep.subr.mxu0 0.0
      %1352 = vmatpush1.msra.mxu0 %v1319
      %1353 = vmatprep.subr.mxu0 0.0
      %1354 = vmatpush2.msra.mxu0 0.0
      %1355 = vmatprep.subr.mxu0 0.0
      %1356 = vmatpush2.msra.mxu0 0.0
      %1357 = vmatprep.subr.mxu0 0.0
      %1358 = vmatpush2.msra.mxu0 0.0
      %1359 = vmatprep.subr.mxu0 0.0
      %1360 = vmatpush2.msra.mxu0 0.0
      %1361 = vmatprep.subr.mxu0 0.0
      %1362 = vmatpush2.msra.mxu0 0.0
      %1363 = vmatprep.subr.mxu0 0.0
      %1364 = vmatpush2.msra.mxu0 0.0
      %1365 = vmatprep.subr.mxu0 0.0
      %1366 = vmatpush2.msra.mxu0 0.0
      %1367 = vmatprep.subr.mxu0 0.0
      %1368 = vmatpush2.msra.mxu0 0.0
      %1369 = vmatprep.subr.mxu0 0.0
      %1370 = vmatpush2.msra.mxu0 0.0
      %1371 = vmatprep.subr.mxu0 0.0
      %1372 = vmatpush2.msra.mxu0 0.0
      %1373 = vmatprep.subr.mxu0 0.0
      %1374 = vmatpush2.msra.mxu0 0.0
      %1375 = vmatprep.subr.mxu0 0.0
      %1376 = vmatpush2.msra.mxu0 0.0
      %1377 = vmatprep.subr.mxu0 0.0
      %1378 = vmatpush2.msra.mxu0 0.0
      %1379 = vmatprep.subr.mxu0 0.0
      %1380 = vmatpush2.msra.mxu0 0.0
      %1381 = vmatprep.subr.mxu0 0.0
      %1382 = vmatpush2.msra.mxu0 0.0
      %1383 = vmatprep.subr.mxu0 0.0
      %1384 = vmatpush2.msra.mxu0 0.0
      %1385 = vmatprep.mubr.f32.mxu0 0.0
      %1386 = vmatmul.mubr.f32.gmra.mxu0 %v1084
      %v1387 = vpop.f32.mrf.mxu0
      %v1388 = vadd.f32 0.0, %v1387
      %v1389 = vpop.f32.mrf.mxu0
      %1390 = vmatprep.mubr.f32.mxu0 0.0
      %1391 = vmatmul.mubr.f32.gmra.mxu0 %v1087
      %v1392 = vpop.f32.mrf.mxu0
      %v1393 = vadd.f32 0.0, %v1392
      %v1394 = vpop.f32.mrf.mxu0
      %1395 = vmatprep.mubr.f32.mxu0 0.0
      %1396 = vmatmul.mubr.f32.gmra.mxu0 %v1090
      %v1397 = vpop.f32.mrf.mxu0
      %v1398 = vadd.f32 0.0, %v1397
      %v1399 = vpop.f32.mrf.mxu0
      %1400 = vmatprep.mubr.f32.mxu0 0.0
      %1401 = vmatmul.mubr.f32.gmra.mxu0 %v1093
      %v1402 = vpop.f32.mrf.mxu0
      %v1403 = vadd.f32 0.0, %v1402
      %v1404 = vpop.f32.mrf.mxu0
      %1405 = vmatprep.mubr.f32.mxu0 0.0
      %1406 = vmatmul.mubr.f32.gmra.mxu0 %v1096
      %v1407 = vpop.f32.mrf.mxu0
      %v1408 = vadd.f32 0.0, %v1407
      %v1409 = vpop.f32.mrf.mxu0
      %1410 = vmatprep.mubr.f32.mxu0 0.0
      %1411 = vmatmul.mubr.f32.gmra.mxu0 %v1099
      %v1412 = vpop.f32.mrf.mxu0
      %v1413 = vadd.f32 0.0, %v1412
      %v1414 = vpop.f32.mrf.mxu0
      %1415 = vmatprep.mubr.f32.mxu0 0.0
      %1416 = vmatmul.mubr.f32.gmra.mxu0 %v1102
      %v1417 = vpop.f32.mrf.mxu0
      %v1418 = vadd.f32 0.0, %v1417
      %v1419 = vpop.f32.mrf.mxu0
      %1420 = vmatprep.mubr.f32.mxu0 0.0
      %1421 = vmatmul.mubr.f32.gmra.mxu0 %v1105
      %v1422 = vpop.f32.mrf.mxu0
      %v1423 = vadd.f32 0.0, %v1422
      %v1424 = vpop.f32.mrf.mxu0
      %1425 = vdwg.mxu0
      %v1426 = vmul.f32 %v1281, %v1388
      %v1427 = vmul.f32 %v1286, %v1393
      %v1428 = vmul.f32 %v1291, %v1398
      %v1429 = vmul.f32 %v1296, %v1403
      %v1430 = vmul.f32 %v1301, %v1408
      %v1431 = vmul.f32 %v1306, %v1413
      %v1432 = vmul.f32 %v1311, %v1418
      %v1433 = vmul.f32 %v1316, %v1423
      %v1434 = vld [vmem:[%s6] sm:$0xff]
      %v1435 = vld [vmem:[%s6 + $0x8] sm:$0xff]
      %v1436 = vld [vmem:[%s6 + $0x10] sm:$0xff]
      %v1437 = vld [vmem:[%s6 + $0x18] sm:$0xff]
      %v1438 = vld [vmem:[%s6 + $0x20] sm:$0xff]
      %v1439 = vld [vmem:[%s6 + $0x28] sm:$0xff]
      %vm1440 = vcmask 392192
      %v1442 = vsel %vm1440, %v1426, 0
      %v1445 = vsel %vm1440, %v1427, 0
      %v1448 = vsel %vm1440, %v1428, 0
      %v1451 = vsel %vm1440, %v1429, 0
      %v1454 = vsel %vm1440, %v1430, 0
      %v1457 = vsel %vm1440, %v1431, 0
      %v1460 = vsel %vm1440, %v1432, 0
      %v1463 = vsel %vm1440, %v1433, 0
      %1465 = vmatprep.subr.mxu0 0.0
      %1466 = vmatpush1.msra.mxu0 0.0
      %1467 = vmatprep.subr.mxu0 0.0
      %1468 = vmatpush1.msra.mxu0 0.0
      %1469 = vmatprep.subr.mxu0 0.0
      %1470 = vmatpush1.msra.mxu0 0.0
      %1471 = vmatprep.subr.mxu0 0.0
      %1472 = vmatpush1.msra.mxu0 0.0
      %1473 = vmatprep.subr.mxu0 0.0
      %1474 = vmatpush1.msra.mxu0 0.0
      %1475 = vmatprep.subr.mxu0 0.0
      %1476 = vmatpush1.msra.mxu0 0.0
      %1477 = vmatprep.subr.mxu0 0.0
      %1478 = vmatpush1.msra.mxu0 0.0
      %1479 = vmatprep.subr.mxu0 0.0
      %1480 = vmatpush1.msra.mxu0 0.0
      %1481 = vmatprep.subr.mxu0 0.0
      %1482 = vmatpush1.msra.mxu0 0.0
      %1483 = vmatprep.subr.mxu0 0.0
      %1484 = vmatpush1.msra.mxu0 0.0
      %1485 = vmatprep.subr.mxu0 0.0
      %1486 = vmatpush1.msra.mxu0 %v1439
      %1487 = vmatprep.subr.mxu0 0.0
      %1488 = vmatpush1.msra.mxu0 %v1438
      %1489 = vmatprep.subr.mxu0 0.0
      %1490 = vmatpush1.msra.mxu0 %v1437
      %1491 = vmatprep.subr.mxu0 0.0
      %1492 = vmatpush1.msra.mxu0 %v1436
      %1493 = vmatprep.subr.mxu0 0.0
      %1494 = vmatpush1.msra.mxu0 %v1435
      %1495 = vmatprep.subr.mxu0 0.0
      %1496 = vmatpush1.msra.mxu0 %v1434
      %1497 = vmatprep.subr.mxu0 0.0
      %1498 = vmatpush2.msra.mxu0 0.0
      %1499 = vmatprep.subr.mxu0 0.0
      %1500 = vmatpush2.msra.mxu0 0.0
      %1501 = vmatprep.subr.mxu0 0.0
      %1502 = vmatpush2.msra.mxu0 0.0
      %1503 = vmatprep.subr.mxu0 0.0
      %1504 = vmatpush2.msra.mxu0 0.0
      %1505 = vmatprep.subr.mxu0 0.0
      %1506 = vmatpush2.msra.mxu0 0.0
      %1507 = vmatprep.subr.mxu0 0.0
      %1508 = vmatpush2.msra.mxu0 0.0
      %1509 = vmatprep.subr.mxu0 0.0
      %1510 = vmatpush2.msra.mxu0 0.0
      %1511 = vmatprep.subr.mxu0 0.0
      %1512 = vmatpush2.msra.mxu0 0.0
      %1513 = vmatprep.subr.mxu0 0.0
      %1514 = vmatpush2.msra.mxu0 0.0
      %1515 = vmatprep.subr.mxu0 0.0
      %1516 = vmatpush2.msra.mxu0 0.0
      %1517 = vmatprep.subr.mxu0 0.0
      %1518 = vmatpush2.msra.mxu0 0.0
      %1519 = vmatprep.subr.mxu0 0.0
      %1520 = vmatpush2.msra.mxu0 0.0
      %1521 = vmatprep.subr.mxu0 0.0
      %1522 = vmatpush2.msra.mxu0 0.0
      %1523 = vmatprep.subr.mxu0 0.0
      %1524 = vmatpush2.msra.mxu0 0.0
      %1525 = vmatprep.subr.mxu0 0.0
      %1526 = vmatpush2.msra.mxu0 0.0
      %1527 = vmatprep.subr.mxu0 0.0
      %1528 = vmatpush2.msra.mxu0 0.0
      %1529 = vmatprep.mubr.f32.mxu0 0.0
      %1530 = vmatmul.mubr.f32.gmra.mxu0 %v1442
      %v1531 = vpop.f32.mrf.mxu0
      %v1532 = vadd.f32 0.0, %v1531
      %v1533 = vpop.f32.mrf.mxu0
      %1534 = vmatprep.mubr.f32.mxu0 0.0
      %1535 = vmatmul.mubr.f32.gmra.mxu0 %v1445
      %v1536 = vpop.f32.mrf.mxu0
      %v1537 = vadd.f32 0.0, %v1536
      %v1538 = vpop.f32.mrf.mxu0
      %1539 = vmatprep.mubr.f32.mxu0 0.0
      %1540 = vmatmul.mubr.f32.gmra.mxu0 %v1448
      %v1541 = vpop.f32.mrf.mxu0
      %v1542 = vadd.f32 0.0, %v1541
      %v1543 = vpop.f32.mrf.mxu0
      %1544 = vmatprep.mubr.f32.mxu0 0.0
      %1545 = vmatmul.mubr.f32.gmra.mxu0 %v1451
      %v1546 = vpop.f32.mrf.mxu0
      %v1547 = vadd.f32 0.0, %v1546
      %v1548 = vpop.f32.mrf.mxu0
      %1549 = vmatprep.mubr.f32.mxu0 0.0
      %1550 = vmatmul.mubr.f32.gmra.mxu0 %v1454
      %v1551 = vpop.f32.mrf.mxu0
      %v1552 = vadd.f32 0.0, %v1551
      %v1553 = vpop.f32.mrf.mxu0
      %1554 = vmatprep.mubr.f32.mxu0 0.0
      %1555 = vmatmul.mubr.f32.gmra.mxu0 %v1457
      %v1556 = vpop.f32.mrf.mxu0
      %v1557 = vadd.f32 0.0, %v1556
      %v1558 = vpop.f32.mrf.mxu0
      %1559 = vmatprep.mubr.f32.mxu0 0.0
      %1560 = vmatmul.mubr.f32.gmra.mxu0 %v1460
      %v1561 = vpop.f32.mrf.mxu0
      %v1562 = vadd.f32 0.0, %v1561
      %v1563 = vpop.f32.mrf.mxu0
      %1564 = vmatprep.mubr.f32.mxu0 0.0
      %1565 = vmatmul.mubr.f32.gmra.mxu0 %v1463
      %v1566 = vpop.f32.mrf.mxu0
      %v1567 = vadd.f32 0.0, %v1566
      %v1568 = vpop.f32.mrf.mxu0
      %1569 = vdwg.mxu0
      %v1570 = vld [vmem:[%s8] sm:$0xff]
      %v1571 = vld [vmem:[%s8 + $0x8] sm:$0xff]
      %v1572 = vld [vmem:[%s8 + $0x10] sm:$0xff]
      %v1573 = vld [vmem:[%s8 + $0x18] sm:$0xff]
      %v1574 = vld [vmem:[%s8 + $0x20] sm:$0xff]
      %v1575 = vld [vmem:[%s8 + $0x28] sm:$0xff]
      %v1576 = vld [vmem:[%s8 + $0x30] sm:$0xff]
      %v1577 = vld [vmem:[%s8 + $0x38] sm:$0xff]
      %v1578 = vld [vmem:[%s9] sm:$0xff]
      %v1579 = vld [vmem:[%s9 + $0x8] sm:$0xff]
      %v1580 = vld [vmem:[%s9 + $0x10] sm:$0xff]
      %v1581 = vld [vmem:[%s9 + $0x18] sm:$0xff]
      %v1582 = vld [vmem:[%s9 + $0x20] sm:$0xff]
      %v1583 = vld [vmem:[%s9 + $0x28] sm:$0xff]
      %v1584 = vld [vmem:[%s9 + $0x30] sm:$0xff]
      %v1585 = vld [vmem:[%s9 + $0x38] sm:$0xff]
      %vm1586 = vcmask 261120
      %v1588 = vsel %vm1586, %v1043, 0
      %v1591 = vsel %vm1586, %v1048, 0
      %v1594 = vsel %vm1586, %v1053, 0
      %v1597 = vsel %vm1586, %v1058, 0
      %v1600 = vsel %vm1586, %v1063, 0
      %v1603 = vsel %vm1586, %v1068, 0
      %v1606 = vsel %vm1586, %v1073, 0
      %v1609 = vsel %vm1586, %v1078, 0
      %1611 = vmatprep.subr.mxu0 0.0
      %1612 = vmatpush1.msra.mxu0 0.0
      %1613 = vmatprep.subr.mxu0 0.0
      %1614 = vmatpush1.msra.mxu0 0.0
      %1615 = vmatprep.subr.mxu0 0.0
      %1616 = vmatpush1.msra.mxu0 0.0
      %1617 = vmatprep.subr.mxu0 0.0
      %1618 = vmatpush1.msra.mxu0 0.0
      %1619 = vmatprep.subr.mxu0 0.0
      %1620 = vmatpush1.msra.mxu0 0.0
      %1621 = vmatprep.subr.mxu0 0.0
      %1622 = vmatpush1.msra.mxu0 0.0
      %1623 = vmatprep.subr.mxu0 0.0
      %1624 = vmatpush1.msra.mxu0 0.0
      %1625 = vmatprep.subr.mxu0 0.0
      %1626 = vmatpush1.msra.mxu0 0.0
      %1627 = vmatprep.subr.mxu0 0.0
      %1628 = vmatpush1.msra.mxu0 0.0
      %1629 = vmatprep.subr.mxu0 0.0
      %1630 = vmatpush1.msra.mxu0 0.0
      %1631 = vmatprep.subr.mxu0 0.0
      %1632 = vmatpush1.msra.mxu0 0.0
      %1633 = vmatprep.subr.mxu0 0.0
      %1634 = vmatpush1.msra.mxu0 0.0
      %1635 = vmatprep.subr.mxu0 %v1585
      %1636 = vmatpush1.msra.mxu0 %v1584
      %1637 = vmatprep.subr.mxu0 %v1583
      %1638 = vmatpush1.msra.mxu0 %v1582
      %1639 = vmatprep.subr.mxu0 %v1581
      %1640 = vmatpush1.msra.mxu0 %v1580
      %1641 = vmatprep.subr.mxu0 %v1579
      %1642 = vmatpush1.msra.mxu0 %v1578
      %1643 = vmatprep.subr.mxu0 0.0
      %1644 = vmatpush2.msra.mxu0 0.0
      %1645 = vmatprep.subr.mxu0 0.0
      %1646 = vmatpush2.msra.mxu0 0.0
      %1647 = vmatprep.subr.mxu0 0.0
      %1648 = vmatpush2.msra.mxu0 0.0
      %1649 = vmatprep.subr.mxu0 0.0
      %1650 = vmatpush2.msra.mxu0 0.0
      %1651 = vmatprep.subr.mxu0 0.0
      %1652 = vmatpush2.msra.mxu0 0.0
      %1653 = vmatprep.subr.mxu0 0.0
      %1654 = vmatpush2.msra.mxu0 0.0
      %1655 = vmatprep.subr.mxu0 0.0
      %1656 = vmatpush2.msra.mxu0 0.0
      %1657 = vmatprep.subr.mxu0 0.0
      %1658 = vmatpush2.msra.mxu0 0.0
      %1659 = vmatprep.subr.mxu0 0.0
      %1660 = vmatpush2.msra.mxu0 0.0
      %1661 = vmatprep.subr.mxu0 0.0
      %1662 = vmatpush2.msra.mxu0 0.0
      %1663 = vmatprep.subr.mxu0 0.0
      %1664 = vmatpush2.msra.mxu0 0.0
      %1665 = vmatprep.subr.mxu0 0.0
      %1666 = vmatpush2.msra.mxu0 0.0
      %1667 = vmatprep.subr.mxu0 0.0
      %1668 = vmatpush2.msra.mxu0 0.0
      %1669 = vmatprep.subr.mxu0 0.0
      %1670 = vmatpush2.msra.mxu0 0.0
      %1671 = vmatprep.subr.mxu0 0.0
      %1672 = vmatpush2.msra.mxu0 0.0
      %1673 = vmatprep.subr.mxu0 0.0
      %1674 = vmatpush2.msra.mxu0 0.0
      %1675 = vmatprep.mubr.f32.mxu0 0.0
      %1676 = vmatmul.mubr.f32.gmra.mxu0 %v1588
      %v1677 = vpop.f32.mrf.mxu0
      %v1678 = vadd.f32 0.0, %v1677
      %v1679 = vpop.f32.mrf.mxu0
      %v1680 = vadd.f32 0.0, %v1679
      %1681 = vmatprep.mubr.f32.mxu0 0.0
      %1682 = vmatmul.mubr.f32.gmra.mxu0 %v1591
      %v1683 = vpop.f32.mrf.mxu0
      %v1684 = vadd.f32 0.0, %v1683
      %v1685 = vpop.f32.mrf.mxu0
      %v1686 = vadd.f32 0.0, %v1685
      %1687 = vmatprep.mubr.f32.mxu0 0.0
      %1688 = vmatmul.mubr.f32.gmra.mxu0 %v1594
      %v1689 = vpop.f32.mrf.mxu0
      %v1690 = vadd.f32 0.0, %v1689
      %v1691 = vpop.f32.mrf.mxu0
      %v1692 = vadd.f32 0.0, %v1691
      %1693 = vmatprep.mubr.f32.mxu0 0.0
      %1694 = vmatmul.mubr.f32.gmra.mxu0 %v1597
      %v1695 = vpop.f32.mrf.mxu0
      %v1696 = vadd.f32 0.0, %v1695
      %v1697 = vpop.f32.mrf.mxu0
      %v1698 = vadd.f32 0.0, %v1697
      %1699 = vmatprep.mubr.f32.mxu0 0.0
      %1700 = vmatmul.mubr.f32.gmra.mxu0 %v1600
      %v1701 = vpop.f32.mrf.mxu0
      %v1702 = vadd.f32 0.0, %v1701
      %v1703 = vpop.f32.mrf.mxu0
      %v1704 = vadd.f32 0.0, %v1703
      %1705 = vmatprep.mubr.f32.mxu0 0.0
      %1706 = vmatmul.mubr.f32.gmra.mxu0 %v1603
      %v1707 = vpop.f32.mrf.mxu0
      %v1708 = vadd.f32 0.0, %v1707
      %v1709 = vpop.f32.mrf.mxu0
      %v1710 = vadd.f32 0.0, %v1709
      %1711 = vmatprep.mubr.f32.mxu0 0.0
      %1712 = vmatmul.mubr.f32.gmra.mxu0 %v1606
      %v1713 = vpop.f32.mrf.mxu0
      %v1714 = vadd.f32 0.0, %v1713
      %v1715 = vpop.f32.mrf.mxu0
      %v1716 = vadd.f32 0.0, %v1715
      %1717 = vmatprep.mubr.f32.mxu0 0.0
      %1718 = vmatmul.mubr.f32.gmra.mxu0 %v1609
      %v1719 = vpop.f32.mrf.mxu0
      %v1720 = vadd.f32 0.0, %v1719
      %v1721 = vpop.f32.mrf.mxu0
      %v1722 = vadd.f32 0.0, %v1721
      %1723 = vdwg.mxu0
      %v1725 = vsel %vm1586, %v914, 0
      %v1728 = vsel %vm1586, %v919, 0
      %v1731 = vsel %vm1586, %v924, 0
      %v1734 = vsel %vm1586, %v929, 0
      %v1737 = vsel %vm1586, %v934, 0
      %v1740 = vsel %vm1586, %v939, 0
      %v1743 = vsel %vm1586, %v944, 0
      %v1746 = vsel %vm1586, %v949, 0
      %1748 = vmatprep.subr.mxu0 0.0
      %1749 = vmatpush1.msra.mxu0 0.0
      %1750 = vmatprep.subr.mxu0 0.0
      %1751 = vmatpush1.msra.mxu0 0.0
      %1752 = vmatprep.subr.mxu0 0.0
      %1753 = vmatpush1.msra.mxu0 0.0
      %1754 = vmatprep.subr.mxu0 0.0
      %1755 = vmatpush1.msra.mxu0 0.0
      %1756 = vmatprep.subr.mxu0 0.0
      %1757 = vmatpush1.msra.mxu0 0.0
      %1758 = vmatprep.subr.mxu0 0.0
      %1759 = vmatpush1.msra.mxu0 0.0
      %1760 = vmatprep.subr.mxu0 0.0
      %1761 = vmatpush1.msra.mxu0 0.0
      %1762 = vmatprep.subr.mxu0 0.0
      %1763 = vmatpush1.msra.mxu0 0.0
      %1764 = vmatprep.subr.mxu0 0.0
      %1765 = vmatpush1.msra.mxu0 0.0
      %1766 = vmatprep.subr.mxu0 0.0
      %1767 = vmatpush1.msra.mxu0 0.0
      %1768 = vmatprep.subr.mxu0 0.0
      %1769 = vmatpush1.msra.mxu0 0.0
      %1770 = vmatprep.subr.mxu0 0.0
      %1771 = vmatpush1.msra.mxu0 0.0
      %1772 = vmatprep.subr.mxu0 %v1577
      %1773 = vmatpush1.msra.mxu0 %v1576
      %1774 = vmatprep.subr.mxu0 %v1575
      %1775 = vmatpush1.msra.mxu0 %v1574
      %1776 = vmatprep.subr.mxu0 %v1573
      %1777 = vmatpush1.msra.mxu0 %v1572
      %1778 = vmatprep.subr.mxu0 %v1571
      %1779 = vmatpush1.msra.mxu0 %v1570
      %1780 = vmatprep.subr.mxu0 0.0
      %1781 = vmatpush2.msra.mxu0 0.0
      %1782 = vmatprep.subr.mxu0 0.0
      %1783 = vmatpush2.msra.mxu0 0.0
      %1784 = vmatprep.subr.mxu0 0.0
      %1785 = vmatpush2.msra.mxu0 0.0
      %1786 = vmatprep.subr.mxu0 0.0
      %1787 = vmatpush2.msra.mxu0 0.0
      %1788 = vmatprep.subr.mxu0 0.0
      %1789 = vmatpush2.msra.mxu0 0.0
      %1790 = vmatprep.subr.mxu0 0.0
      %1791 = vmatpush2.msra.mxu0 0.0
      %1792 = vmatprep.subr.mxu0 0.0
      %1793 = vmatpush2.msra.mxu0 0.0
      %1794 = vmatprep.subr.mxu0 0.0
      %1795 = vmatpush2.msra.mxu0 0.0
      %1796 = vmatprep.subr.mxu0 0.0
      %1797 = vmatpush2.msra.mxu0 0.0
      %1798 = vmatprep.subr.mxu0 0.0
      %1799 = vmatpush2.msra.mxu0 0.0
      %1800 = vmatprep.subr.mxu0 0.0
      %1801 = vmatpush2.msra.mxu0 0.0
      %1802 = vmatprep.subr.mxu0 0.0
      %1803 = vmatpush2.msra.mxu0 0.0
      %1804 = vmatprep.subr.mxu0 0.0
      %1805 = vmatpush2.msra.mxu0 0.0
      %1806 = vmatprep.subr.mxu0 0.0
      %1807 = vmatpush2.msra.mxu0 0.0
      %1808 = vmatprep.subr.mxu0 0.0
      %1809 = vmatpush2.msra.mxu0 0.0
      %1810 = vmatprep.subr.mxu0 0.0
      %1811 = vmatpush2.msra.mxu0 0.0
      %1812 = vmatprep.mubr.f32.mxu0 0.0
      %1813 = vmatmul.mubr.f32.gmra.mxu0 %v1725
      %v1814 = vpop.f32.mrf.mxu0
      %v1815 = vadd.f32 %v1678, %v1814
      %v1816 = vpop.f32.mrf.mxu0
      %v1817 = vadd.f32 %v1680, %v1816
      %1818 = vmatprep.mubr.f32.mxu0 0.0
      %1819 = vmatmul.mubr.f32.gmra.mxu0 %v1728
      %v1820 = vpop.f32.mrf.mxu0
      %v1821 = vadd.f32 %v1684, %v1820
      %v1822 = vpop.f32.mrf.mxu0
      %v1823 = vadd.f32 %v1686, %v1822
      %1824 = vmatprep.mubr.f32.mxu0 0.0
      %1825 = vmatmul.mubr.f32.gmra.mxu0 %v1731
      %v1826 = vpop.f32.mrf.mxu0
      %v1827 = vadd.f32 %v1690, %v1826
      %v1828 = vpop.f32.mrf.mxu0
      %v1829 = vadd.f32 %v1692, %v1828
      %1830 = vmatprep.mubr.f32.mxu0 0.0
      %1831 = vmatmul.mubr.f32.gmra.mxu0 %v1734
      %v1832 = vpop.f32.mrf.mxu0
      %v1833 = vadd.f32 %v1696, %v1832
      %v1834 = vpop.f32.mrf.mxu0
      %v1835 = vadd.f32 %v1698, %v1834
      %1836 = vmatprep.mubr.f32.mxu0 0.0
      %1837 = vmatmul.mubr.f32.gmra.mxu0 %v1737
      %v1838 = vpop.f32.mrf.mxu0
      %v1839 = vadd.f32 %v1702, %v1838
      %v1840 = vpop.f32.mrf.mxu0
      %v1841 = vadd.f32 %v1704, %v1840
      %1842 = vmatprep.mubr.f32.mxu0 0.0
      %1843 = vmatmul.mubr.f32.gmra.mxu0 %v1740
      %v1844 = vpop.f32.mrf.mxu0
      %v1845 = vadd.f32 %v1708, %v1844
      %v1846 = vpop.f32.mrf.mxu0
      %v1847 = vadd.f32 %v1710, %v1846
      %1848 = vmatprep.mubr.f32.mxu0 0.0
      %1849 = vmatmul.mubr.f32.gmra.mxu0 %v1743
      %v1850 = vpop.f32.mrf.mxu0
      %v1851 = vadd.f32 %v1714, %v1850
      %v1852 = vpop.f32.mrf.mxu0
      %v1853 = vadd.f32 %v1716, %v1852
      %1854 = vmatprep.mubr.f32.mxu0 0.0
      %1855 = vmatmul.mubr.f32.gmra.mxu0 %v1746
      %v1856 = vpop.f32.mrf.mxu0
      %v1857 = vadd.f32 %v1720, %v1856
      %v1858 = vpop.f32.mrf.mxu0
      %v1859 = vadd.f32 %v1722, %v1858
      %1860 = vdwg.mxu0
      %v1861 = vld [vmem:[%s10] sm:$0xff]
      %v1862 = vld [vmem:[%s10 + $0x8] sm:$0xff]
      %v1863 = vld [vmem:[%s10 + $0x10] sm:$0xff]
      %v1864 = vld [vmem:[%s10 + $0x18] sm:$0xff]
      %v1866 = vsel %vm822, %v1532, 0
      %v1869 = vsel %vm822, %v1537, 0
      %v1872 = vsel %vm822, %v1542, 0
      %v1875 = vsel %vm822, %v1547, 0
      %v1878 = vsel %vm822, %v1552, 0
      %v1881 = vsel %vm822, %v1557, 0
      %v1884 = vsel %vm822, %v1562, 0
      %v1887 = vsel %vm822, %v1567, 0
      %1889 = vmatprep.subr.mxu0 0.0
      %1890 = vmatpush1.msra.mxu0 0.0
      %1891 = vmatprep.subr.mxu0 0.0
      %1892 = vmatpush1.msra.mxu0 0.0
      %1893 = vmatprep.subr.mxu0 0.0
      %1894 = vmatpush1.msra.mxu0 0.0
      %1895 = vmatprep.subr.mxu0 0.0
      %1896 = vmatpush1.msra.mxu0 0.0
      %1897 = vmatprep.subr.mxu0 0.0
      %1898 = vmatpush1.msra.mxu0 0.0
      %1899 = vmatprep.subr.mxu0 0.0
      %1900 = vmatpush1.msra.mxu0 0.0
      %1901 = vmatprep.subr.mxu0 0.0
      %1902 = vmatpush1.msra.mxu0 0.0
      %1903 = vmatprep.subr.mxu0 0.0
      %1904 = vmatpush1.msra.mxu0 0.0
      %1905 = vmatprep.subr.mxu0 0.0
      %1906 = vmatpush1.msra.mxu0 0.0
      %1907 = vmatprep.subr.mxu0 0.0
      %1908 = vmatpush1.msra.mxu0 0.0
      %1909 = vmatprep.subr.mxu0 0.0
      %1910 = vmatpush1.msra.mxu0 0.0
      %1911 = vmatprep.subr.mxu0 0.0
      %1912 = vmatpush1.msra.mxu0 0.0
      %1913 = vmatprep.subr.mxu0 0.0
      %1914 = vmatpush1.msra.mxu0 0.0
      %1915 = vmatprep.subr.mxu0 0.0
      %1916 = vmatpush1.msra.mxu0 0.0
      %1917 = vmatprep.subr.mxu0 %v1864
      %1918 = vmatpush1.msra.mxu0 %v1863
      %1919 = vmatprep.subr.mxu0 %v1862
      %1920 = vmatpush1.msra.mxu0 %v1861
      %1921 = vmatprep.subr.mxu0 0.0
      %1922 = vmatpush2.msra.mxu0 0.0
      %1923 = vmatprep.subr.mxu0 0.0
      %1924 = vmatpush2.msra.mxu0 0.0
      %1925 = vmatprep.subr.mxu0 0.0
      %1926 = vmatpush2.msra.mxu0 0.0
      %1927 = vmatprep.subr.mxu0 0.0
      %1928 = vmatpush2.msra.mxu0 0.0
      %1929 = vmatprep.subr.mxu0 0.0
      %1930 = vmatpush2.msra.mxu0 0.0
      %1931 = vmatprep.subr.mxu0 0.0
      %1932 = vmatpush2.msra.mxu0 0.0
      %1933 = vmatprep.subr.mxu0 0.0
      %1934 = vmatpush2.msra.mxu0 0.0
      %1935 = vmatprep.subr.mxu0 0.0
      %1936 = vmatpush2.msra.mxu0 0.0
      %1937 = vmatprep.subr.mxu0 0.0
      %1938 = vmatpush2.msra.mxu0 0.0
      %1939 = vmatprep.subr.mxu0 0.0
      %1940 = vmatpush2.msra.mxu0 0.0
      %1941 = vmatprep.subr.mxu0 0.0
      %1942 = vmatpush2.msra.mxu0 0.0
      %1943 = vmatprep.subr.mxu0 0.0
      %1944 = vmatpush2.msra.mxu0 0.0
      %1945 = vmatprep.subr.mxu0 0.0
      %1946 = vmatpush2.msra.mxu0 0.0
      %1947 = vmatprep.subr.mxu0 0.0
      %1948 = vmatpush2.msra.mxu0 0.0
      %1949 = vmatprep.subr.mxu0 0.0
      %1950 = vmatpush2.msra.mxu0 0.0
      %1951 = vmatprep.subr.mxu0 0.0
      %1952 = vmatpush2.msra.mxu0 0.0
      %1953 = vmatprep.mubr.f32.mxu0 0.0
      %1954 = vmatmul.mubr.f32.gmra.mxu0 %v1866
      %v1955 = vpop.f32.mrf.mxu0
      %v1956 = vadd.f32 0.0, %v1955
      %v1957 = vpop.f32.mrf.mxu0
      %v1958 = vadd.f32 0.0, %v1957
      %1959 = vmatprep.mubr.f32.mxu0 0.0
      %1960 = vmatmul.mubr.f32.gmra.mxu0 %v1869
      %v1961 = vpop.f32.mrf.mxu0
      %v1962 = vadd.f32 0.0, %v1961
      %v1963 = vpop.f32.mrf.mxu0
      %v1964 = vadd.f32 0.0, %v1963
      %1965 = vmatprep.mubr.f32.mxu0 0.0
      %1966 = vmatmul.mubr.f32.gmra.mxu0 %v1872
      %v1967 = vpop.f32.mrf.mxu0
      %v1968 = vadd.f32 0.0, %v1967
      %v1969 = vpop.f32.mrf.mxu0
      %v1970 = vadd.f32 0.0, %v1969
      %1971 = vmatprep.mubr.f32.mxu0 0.0
      %1972 = vmatmul.mubr.f32.gmra.mxu0 %v1875
      %v1973 = vpop.f32.mrf.mxu0
      %v1974 = vadd.f32 0.0, %v1973
      %v1975 = vpop.f32.mrf.mxu0
      %v1976 = vadd.f32 0.0, %v1975
      %1977 = vmatprep.mubr.f32.mxu0 0.0
      %1978 = vmatmul.mubr.f32.gmra.mxu0 %v1878
      %v1979 = vpop.f32.mrf.mxu0
      %v1980 = vadd.f32 0.0, %v1979
      %v1981 = vpop.f32.mrf.mxu0
      %v1982 = vadd.f32 0.0, %v1981
      %1983 = vmatprep.mubr.f32.mxu0 0.0
      %1984 = vmatmul.mubr.f32.gmra.mxu0 %v1881
      %v1985 = vpop.f32.mrf.mxu0
      %v1986 = vadd.f32 0.0, %v1985
      %v1987 = vpop.f32.mrf.mxu0
      %v1988 = vadd.f32 0.0, %v1987
      %1989 = vmatprep.mubr.f32.mxu0 0.0
      %1990 = vmatmul.mubr.f32.gmra.mxu0 %v1884
      %v1991 = vpop.f32.mrf.mxu0
      %v1992 = vadd.f32 0.0, %v1991
      %v1993 = vpop.f32.mrf.mxu0
      %v1994 = vadd.f32 0.0, %v1993
      %1995 = vmatprep.mubr.f32.mxu0 0.0
      %1996 = vmatmul.mubr.f32.gmra.mxu0 %v1887
      %v1997 = vpop.f32.mrf.mxu0
      %v1998 = vadd.f32 0.0, %v1997
      %v1999 = vpop.f32.mrf.mxu0
      %v2000 = vadd.f32 0.0, %v1999
      %2001 = vdwg.mxu0
      %v2002 = vadd.f32 %v1815, %v1956
      %v2003 = vadd.f32 %v1817, %v1958
      %v2004 = vadd.f32 %v1821, %v1962
      %v2005 = vadd.f32 %v1823, %v1964
      %v2006 = vadd.f32 %v1827, %v1968
      %v2007 = vadd.f32 %v1829, %v1970
      %v2008 = vadd.f32 %v1833, %v1974
      %v2009 = vadd.f32 %v1835, %v1976
      %v2010 = vadd.f32 %v1839, %v1980
      %v2011 = vadd.f32 %v1841, %v1982
      %v2012 = vadd.f32 %v1845, %v1986
      %v2013 = vadd.f32 %v1847, %v1988
      %v2014 = vadd.f32 %v1851, %v1992
      %v2015 = vadd.f32 %v1853, %v1994
      %v2016 = vadd.f32 %v1857, %v1998
      %v2017 = vadd.f32 %v1859, %v2000
      %v2018 = vld [vmem:[%s11] sm:$0x3]
      %v2020 = vlaneseq
      %v2021 = vshrl.u32 %v2020, 7
      %v2022 = vsub.s32 0, %v2021
      %v2023 = vrot.slane %v2018, %v2022
      %v2024 = vlaneseq
      %v2025 = vshrl.u32 %v2024, 7
      %v2026 = vsub.s32 1, %v2025
      %v2027 = vrot.slane %v2018, %v2026
      %v2030 = vadd.f32 %v2002, %v2023
      %v2031 = vadd.f32 %v2003, %v2027
      %v2032 = vadd.f32 %v2004, %v2023
      %v2033 = vadd.f32 %v2005, %v2027
      %v2034 = vadd.f32 %v2006, %v2023
      %v2035 = vadd.f32 %v2007, %v2027
      %v2036 = vadd.f32 %v2008, %v2023
      %v2037 = vadd.f32 %v2009, %v2027
      %v2038 = vadd.f32 %v2010, %v2023
      %v2039 = vadd.f32 %v2011, %v2027
      %v2040 = vadd.f32 %v2012, %v2023
      %v2041 = vadd.f32 %v2013, %v2027
      %v2042 = vadd.f32 %v2014, %v2023
      %v2043 = vadd.f32 %v2015, %v2027
      %v2044 = vadd.f32 %v2016, %v2023
      %v2045 = vadd.f32 %v2017, %v2027
      %v2046 = vxor.u32 %v2030, 2147483648
      %v2047 = vxor.u32 %v2031, 2147483648
      %v2048 = vxor.u32 %v2032, 2147483648
      %v2049 = vxor.u32 %v2033, 2147483648
      %v2050 = vxor.u32 %v2034, 2147483648
      %v2051 = vxor.u32 %v2035, 2147483648
      %v2052 = vxor.u32 %v2036, 2147483648
      %v2053 = vxor.u32 %v2037, 2147483648
      %v2054 = vxor.u32 %v2038, 2147483648
      %v2055 = vxor.u32 %v2039, 2147483648
      %v2056 = vxor.u32 %v2040, 2147483648
      %v2057 = vxor.u32 %v2041, 2147483648
      %v2058 = vxor.u32 %v2042, 2147483648
      %v2059 = vxor.u32 %v2043, 2147483648
      %v2060 = vxor.u32 %v2044, 2147483648
      %v2061 = vxor.u32 %v2045, 2147483648
      %v2062 = vmul.f32 %v2046, 1.442695
      %v2063 = vpow.pop %v2062
      %v2064 = vmul.f32 %v2047, 1.442695
      %v2065 = vpow.pop %v2064
      %v2066 = vmul.f32 %v2048, 1.442695
      %v2067 = vpow.pop %v2066
      %v2068 = vmul.f32 %v2049, 1.442695
      %v2069 = vpow.pop %v2068
      %v2070 = vmul.f32 %v2050, 1.442695
      %v2071 = vpow.pop %v2070
      %v2072 = vmul.f32 %v2051, 1.442695
      %v2073 = vpow.pop %v2072
      %v2074 = vmul.f32 %v2052, 1.442695
      %v2075 = vpow.pop %v2074
      %v2076 = vmul.f32 %v2053, 1.442695
      %v2077 = vpow.pop %v2076
      %v2078 = vmul.f32 %v2054, 1.442695
      %v2079 = vpow.pop %v2078
      %v2080 = vmul.f32 %v2055, 1.442695
      %v2081 = vpow.pop %v2080
      %v2082 = vmul.f32 %v2056, 1.442695
      %v2083 = vpow.pop %v2082
      %v2084 = vmul.f32 %v2057, 1.442695
      %v2085 = vpow.pop %v2084
      %v2086 = vmul.f32 %v2058, 1.442695
      %v2087 = vpow.pop %v2086
      %v2088 = vmul.f32 %v2059, 1.442695
      %v2089 = vpow.pop %v2088
      %v2090 = vmul.f32 %v2060, 1.442695
      %v2091 = vpow.pop %v2090
      %v2092 = vmul.f32 %v2061, 1.442695
      %v2093 = vpow.pop %v2092
      %v2094 = vadd.f32 %v2063, 1.0
      %v2095 = vadd.f32 %v2065, 1.0
      %v2096 = vadd.f32 %v2067, 1.0
      %v2097 = vadd.f32 %v2069, 1.0
      %v2098 = vadd.f32 %v2071, 1.0
      %v2099 = vadd.f32 %v2073, 1.0
      %v2100 = vadd.f32 %v2075, 1.0
      %v2101 = vadd.f32 %v2077, 1.0
      %v2102 = vadd.f32 %v2079, 1.0
      %v2103 = vadd.f32 %v2081, 1.0
      %v2104 = vadd.f32 %v2083, 1.0
      %v2105 = vadd.f32 %v2085, 1.0
      %v2106 = vadd.f32 %v2087, 1.0
      %v2107 = vadd.f32 %v2089, 1.0
      %v2108 = vadd.f32 %v2091, 1.0
      %v2109 = vadd.f32 %v2093, 1.0
      %v2110 = vrcp.pop %v2094
      %v2111 = vmul.f32 1.0, %v2110
      %v2112 = vrcp.pop %v2095
      %v2113 = vmul.f32 1.0, %v2112
      %v2114 = vrcp.pop %v2096
      %v2115 = vmul.f32 1.0, %v2114
      %v2116 = vrcp.pop %v2097
      %v2117 = vmul.f32 1.0, %v2116
      %v2118 = vrcp.pop %v2098
      %v2119 = vmul.f32 1.0, %v2118
      %v2120 = vrcp.pop %v2099
      %v2121 = vmul.f32 1.0, %v2120
      %v2122 = vrcp.pop %v2100
      %v2123 = vmul.f32 1.0, %v2122
      %v2124 = vrcp.pop %v2101
      %v2125 = vmul.f32 1.0, %v2124
      %v2126 = vrcp.pop %v2102
      %v2127 = vmul.f32 1.0, %v2126
      %v2128 = vrcp.pop %v2103
      %v2129 = vmul.f32 1.0, %v2128
      %v2130 = vrcp.pop %v2104
      %v2131 = vmul.f32 1.0, %v2130
      %v2132 = vrcp.pop %v2105
      %v2133 = vmul.f32 1.0, %v2132
      %v2134 = vrcp.pop %v2106
      %v2135 = vmul.f32 1.0, %v2134
      %v2136 = vrcp.pop %v2107
      %v2137 = vmul.f32 1.0, %v2136
      %v2138 = vrcp.pop %v2108
      %v2139 = vmul.f32 1.0, %v2138
      %v2140 = vrcp.pop %v2109
      %v2141 = vmul.f32 1.0, %v2140
      %v2142 = vmul.f32 %v2030, %v2111
      %v2143 = vmul.f32 %v2031, %v2113
      %v2144 = vmul.f32 %v2032, %v2115
      %v2145 = vmul.f32 %v2033, %v2117
      %v2146 = vmul.f32 %v2034, %v2119
      %v2147 = vmul.f32 %v2035, %v2121
      %v2148 = vmul.f32 %v2036, %v2123
      %v2149 = vmul.f32 %v2037, %v2125
      %v2150 = vmul.f32 %v2038, %v2127
      %v2151 = vmul.f32 %v2039, %v2129
      %v2152 = vmul.f32 %v2040, %v2131
      %v2153 = vmul.f32 %v2041, %v2133
      %v2154 = vmul.f32 %v2042, %v2135
      %v2155 = vmul.f32 %v2043, %v2137
      %v2156 = vmul.f32 %v2044, %v2139
      %v2157 = vmul.f32 %v2045, %v2141
      %v2158 = vld [vmem:[%s12] sm:$0xff]
      %v2159 = vld [vmem:[%s12 + $0x8] sm:$0xff]
      %v2160 = vld [vmem:[%s12 + $0x10] sm:$0xff]
      %v2161 = vld [vmem:[%s12 + $0x18] sm:$0xff]
      %v2162 = vld [vmem:[%s12 + $0x20] sm:$0xff]
      %v2163 = vld [vmem:[%s12 + $0x28] sm:$0xff]
      %v2164 = vld [vmem:[%s12 + $0x30] sm:$0xff]
      %v2165 = vld [vmem:[%s12 + $0x38] sm:$0xff]
      %v2166 = vld [vmem:[%s12 + $0x40] sm:$0xff]
      %v2167 = vld [vmem:[%s12 + $0x48] sm:$0xff]
      %v2168 = vld [vmem:[%s12 + $0x50] sm:$0xff]
      %v2169 = vld [vmem:[%s12 + $0x58] sm:$0xff]
      %v2170 = vld [vmem:[%s12 + $0x60] sm:$0xff]
      %v2171 = vld [vmem:[%s12 + $0x68] sm:$0xff]
      %v2172 = vld [vmem:[%s12 + $0x70] sm:$0xff]
      %v2173 = vld [vmem:[%s12 + $0x78] sm:$0xff]
      %v2174 = vld [vmem:[%s12 + $0x80] sm:$0xff]
      %v2175 = vld [vmem:[%s12 + $0x88] sm:$0xff]
      %v2176 = vld [vmem:[%s12 + $0x90] sm:$0xff]
      %v2177 = vld [vmem:[%s12 + $0x98] sm:$0xff]
      %v2178 = vld [vmem:[%s13] sm:$0x1]
      %v2180 = vlaneseq
      %v2181 = vshrl.u32 %v2180, 7
      %v2182 = vsub.s32 0, %v2181
      %v2183 = vrot.slane %v2178, %v2182
      %v2186 = vsel %vm1586, %v2143, 0
      %v2189 = vsel %vm1586, %v2145, 0
      %v2192 = vsel %vm1586, %v2147, 0
      %v2195 = vsel %vm1586, %v2149, 0
      %v2198 = vsel %vm1586, %v2151, 0
      %v2201 = vsel %vm1586, %v2153, 0
      %v2204 = vsel %vm1586, %v2155, 0
      %v2207 = vsel %vm1586, %v2157, 0
      %2209 = vmatprep.subr.mxu0 0.0
      %2210 = vmatpush1.msra.mxu0 %v2173
      %2211 = vmatprep.subr.mxu0 0.0
      %2212 = vmatpush1.msra.mxu0 %v2172
      %2213 = vmatprep.subr.mxu0 0.0
      %2214 = vmatpush1.msra.mxu0 %v2171
      %2215 = vmatprep.subr.mxu0 0.0
      %2216 = vmatpush1.msra.mxu0 %v2170
      %2217 = vmatprep.subr.mxu0 0.0
      %2218 = vmatpush1.msra.mxu0 %v2169
      %2219 = vmatprep.subr.mxu0 0.0
      %2220 = vmatpush1.msra.mxu0 %v2168
      %2221 = vmatprep.subr.mxu0 0.0
      %2222 = vmatpush1.msra.mxu0 %v2167
      %2223 = vmatprep.subr.mxu0 0.0
      %2224 = vmatpush1.msra.mxu0 %v2166
      %2225 = vmatprep.subr.mxu0 0.0
      %2226 = vmatpush1.msra.mxu0 %v2165
      %2227 = vmatprep.subr.mxu0 0.0
      %2228 = vmatpush1.msra.mxu0 %v2164
      %2229 = vmatprep.subr.mxu0 0.0
      %2230 = vmatpush1.msra.mxu0 %v2163
      %2231 = vmatprep.subr.mxu0 0.0
      %2232 = vmatpush1.msra.mxu0 %v2162
      %2233 = vmatprep.subr.mxu0 0.0
      %2234 = vmatpush1.msra.mxu0 %v2161
      %2235 = vmatprep.subr.mxu0 0.0
      %2236 = vmatpush1.msra.mxu0 %v2160
      %2237 = vmatprep.subr.mxu0 0.0
      %2238 = vmatpush1.msra.mxu0 %v2159
      %2239 = vmatprep.subr.mxu0 0.0
      %2240 = vmatpush1.msra.mxu0 %v2158
      %2241 = vmatprep.subr.mxu0 0.0
      %2242 = vmatpush2.msra.mxu0 0.0
      %2243 = vmatprep.subr.mxu0 0.0
      %2244 = vmatpush2.msra.mxu0 0.0
      %2245 = vmatprep.subr.mxu0 0.0
      %2246 = vmatpush2.msra.mxu0 0.0
      %2247 = vmatprep.subr.mxu0 0.0
      %2248 = vmatpush2.msra.mxu0 0.0
      %2249 = vmatprep.subr.mxu0 0.0
      %2250 = vmatpush2.msra.mxu0 0.0
      %2251 = vmatprep.subr.mxu0 0.0
      %2252 = vmatpush2.msra.mxu0 0.0
      %2253 = vmatprep.subr.mxu0 0.0
      %2254 = vmatpush2.msra.mxu0 0.0
      %2255 = vmatprep.subr.mxu0 0.0
      %2256 = vmatpush2.msra.mxu0 0.0
      %2257 = vmatprep.subr.mxu0 0.0
      %2258 = vmatpush2.msra.mxu0 0.0
      %2259 = vmatprep.subr.mxu0 0.0
      %2260 = vmatpush2.msra.mxu0 0.0
      %2261 = vmatprep.subr.mxu0 0.0
      %2262 = vmatpush2.msra.mxu0 0.0
      %2263 = vmatprep.subr.mxu0 0.0
      %2264 = vmatpush2.msra.mxu0 0.0
      %2265 = vmatprep.subr.mxu0 0.0
      %2266 = vmatpush2.msra.mxu0 %v2177
      %2267 = vmatprep.subr.mxu0 0.0
      %2268 = vmatpush2.msra.mxu0 %v2176
      %2269 = vmatprep.subr.mxu0 0.0
      %2270 = vmatpush2.msra.mxu0 %v2175
      %2271 = vmatprep.subr.mxu0 0.0
      %2272 = vmatpush2.msra.mxu0 %v2174
      %2273 = vmatprep.mubr.f32.mxu0 %v2186
      %2274 = vmatmul.mubr.f32.gmra.mxu0 %v2142
      %v2275 = vpop.f32.mrf.mxu0
      %v2276 = vadd.f32 %v2183, %v2275
      %v2277 = vpop.f32.mrf.mxu0
      %2278 = vmatprep.mubr.f32.mxu0 %v2189
      %2279 = vmatmul.mubr.f32.gmra.mxu0 %v2144
      %v2280 = vpop.f32.mrf.mxu0
      %v2281 = vadd.f32 %v2183, %v2280
      %v2282 = vpop.f32.mrf.mxu0
      %2283 = vmatprep.mubr.f32.mxu0 %v2192
      %2284 = vmatmul.mubr.f32.gmra.mxu0 %v2146
      %v2285 = vpop.f32.mrf.mxu0
      %v2286 = vadd.f32 %v2183, %v2285
      %v2287 = vpop.f32.mrf.mxu0
      %2288 = vmatprep.mubr.f32.mxu0 %v2195
      %2289 = vmatmul.mubr.f32.gmra.mxu0 %v2148
      %v2290 = vpop.f32.mrf.mxu0
      %v2291 = vadd.f32 %v2183, %v2290
      %v2292 = vpop.f32.mrf.mxu0
      %2293 = vmatprep.mubr.f32.mxu0 %v2198
      %2294 = vmatmul.mubr.f32.gmra.mxu0 %v2150
      %v2295 = vpop.f32.mrf.mxu0
      %v2296 = vadd.f32 %v2183, %v2295
      %v2297 = vpop.f32.mrf.mxu0
      %2298 = vmatprep.mubr.f32.mxu0 %v2201
      %2299 = vmatmul.mubr.f32.gmra.mxu0 %v2152
      %v2300 = vpop.f32.mrf.mxu0
      %v2301 = vadd.f32 %v2183, %v2300
      %v2302 = vpop.f32.mrf.mxu0
      %2303 = vmatprep.mubr.f32.mxu0 %v2204
      %2304 = vmatmul.mubr.f32.gmra.mxu0 %v2154
      %v2305 = vpop.f32.mrf.mxu0
      %v2306 = vadd.f32 %v2183, %v2305
      %v2307 = vpop.f32.mrf.mxu0
      %2308 = vmatprep.mubr.f32.mxu0 %v2207
      %2309 = vmatmul.mubr.f32.gmra.mxu0 %v2156
      %v2310 = vpop.f32.mrf.mxu0
      %v2311 = vadd.f32 %v2183, %v2310
      %v2312 = vpop.f32.mrf.mxu0
      %2313 = vdwg.mxu0
      %v2314 = vxor.u32 %v2276, 2147483648
      %v2315 = vxor.u32 %v2281, 2147483648
      %v2316 = vxor.u32 %v2286, 2147483648
      %v2317 = vxor.u32 %v2291, 2147483648
      %v2318 = vxor.u32 %v2296, 2147483648
      %v2319 = vxor.u32 %v2301, 2147483648
      %v2320 = vxor.u32 %v2306, 2147483648
      %v2321 = vxor.u32 %v2311, 2147483648
      %v2322 = vmul.f32 %v2314, 1.442695
      %v2323 = vpow.pop %v2322
      %v2324 = vmul.f32 %v2315, 1.442695
      %v2325 = vpow.pop %v2324
      %v2326 = vmul.f32 %v2316, 1.442695
      %v2327 = vpow.pop %v2326
      %v2328 = vmul.f32 %v2317, 1.442695
      %v2329 = vpow.pop %v2328
      %v2330 = vmul.f32 %v2318, 1.442695
      %v2331 = vpow.pop %v2330
      %v2332 = vmul.f32 %v2319, 1.442695
      %v2333 = vpow.pop %v2332
      %v2334 = vmul.f32 %v2320, 1.442695
      %v2335 = vpow.pop %v2334
      %v2336 = vmul.f32 %v2321, 1.442695
      %v2337 = vpow.pop %v2336
      %v2338 = vadd.f32 %v2323, 1.0
      %v2339 = vadd.f32 %v2325, 1.0
      %v2340 = vadd.f32 %v2327, 1.0
      %v2341 = vadd.f32 %v2329, 1.0
      %v2342 = vadd.f32 %v2331, 1.0
      %v2343 = vadd.f32 %v2333, 1.0
      %v2344 = vadd.f32 %v2335, 1.0
      %v2345 = vadd.f32 %v2337, 1.0
      %v2346 = vrcp.pop %v2338
      %v2347 = vmul.f32 1.0, %v2346
      %v2348 = vrcp.pop %v2339
      %v2349 = vmul.f32 1.0, %v2348
      %v2350 = vrcp.pop %v2340
      %v2351 = vmul.f32 1.0, %v2350
      %v2352 = vrcp.pop %v2341
      %v2353 = vmul.f32 1.0, %v2352
      %v2354 = vrcp.pop %v2342
      %v2355 = vmul.f32 1.0, %v2354
      %v2356 = vrcp.pop %v2343
      %v2357 = vmul.f32 1.0, %v2356
      %v2358 = vrcp.pop %v2344
      %v2359 = vmul.f32 1.0, %v2358
      %v2360 = vrcp.pop %v2345
      %v2361 = vmul.f32 1.0, %v2360
      %v2362 = vmul.f32 %v2276, %v2347
      %v2363 = vmul.f32 %v2281, %v2349
      %v2364 = vmul.f32 %v2286, %v2351
      %v2365 = vmul.f32 %v2291, %v2353
      %v2366 = vmul.f32 %v2296, %v2355
      %v2367 = vmul.f32 %v2301, %v2357
      %v2368 = vmul.f32 %v2306, %v2359
      %v2369 = vmul.f32 %v2311, %v2361
      %v2370 = vld [vmem:[%s14] sm:$0xff]
      %v2371 = vld [vmem:[%s14 + $0x8] sm:$0xff]
      %v2372 = vld [vmem:[%s14 + $0x10] sm:$0xff]
      %v2373 = vld [vmem:[%s14 + $0x18] sm:$0xff]
      %v2375 = vsel %vm1586, %v2362, 0
      %v2378 = vsel %vm1586, %v2363, 0
      %v2381 = vsel %vm1586, %v2364, 0
      %v2384 = vsel %vm1586, %v2365, 0
      %v2387 = vsel %vm1586, %v2366, 0
      %v2390 = vsel %vm1586, %v2367, 0
      %v2393 = vsel %vm1586, %v2368, 0
      %v2396 = vsel %vm1586, %v2369, 0
      %2398 = vmatprep.subr.mxu0 0.0
      %2399 = vmatpush1.msra.mxu0 0.0
      %2400 = vmatprep.subr.mxu0 0.0
      %2401 = vmatpush1.msra.mxu0 0.0
      %2402 = vmatprep.subr.mxu0 0.0
      %2403 = vmatpush1.msra.mxu0 0.0
      %2404 = vmatprep.subr.mxu0 0.0
      %2405 = vmatpush1.msra.mxu0 0.0
      %2406 = vmatprep.subr.mxu0 0.0
      %2407 = vmatpush1.msra.mxu0 0.0
      %2408 = vmatprep.subr.mxu0 0.0
      %2409 = vmatpush1.msra.mxu0 0.0
      %2410 = vmatprep.subr.mxu0 0.0
      %2411 = vmatpush1.msra.mxu0 0.0
      %2412 = vmatprep.subr.mxu0 0.0
      %2413 = vmatpush1.msra.mxu0 0.0
      %2414 = vmatprep.subr.mxu0 0.0
      %2415 = vmatpush1.msra.mxu0 0.0
      %2416 = vmatprep.subr.mxu0 0.0
      %2417 = vmatpush1.msra.mxu0 0.0
      %2418 = vmatprep.subr.mxu0 0.0
      %2419 = vmatpush1.msra.mxu0 0.0
      %2420 = vmatprep.subr.mxu0 0.0
      %2421 = vmatpush1.msra.mxu0 0.0
      %2422 = vmatprep.subr.mxu0 0.0
      %2423 = vmatpush1.msra.mxu0 %v2373
      %2424 = vmatprep.subr.mxu0 0.0
      %2425 = vmatpush1.msra.mxu0 %v2372
      %2426 = vmatprep.subr.mxu0 0.0
      %2427 = vmatpush1.msra.mxu0 %v2371
      %2428 = vmatprep.subr.mxu0 0.0
      %2429 = vmatpush1.msra.mxu0 %v2370
      %2430 = vmatprep.subr.mxu0 0.0
      %2431 = vmatpush2.msra.mxu0 0.0
      %2432 = vmatprep.subr.mxu0 0.0
      %2433 = vmatpush2.msra.mxu0 0.0
      %2434 = vmatprep.subr.mxu0 0.0
      %2435 = vmatpush2.msra.mxu0 0.0
      %2436 = vmatprep.subr.mxu0 0.0
      %2437 = vmatpush2.msra.mxu0 0.0
      %2438 = vmatprep.subr.mxu0 0.0
      %2439 = vmatpush2.msra.mxu0 0.0
      %2440 = vmatprep.subr.mxu0 0.0
      %2441 = vmatpush2.msra.mxu0 0.0
      %2442 = vmatprep.subr.mxu0 0.0
      %2443 = vmatpush2.msra.mxu0 0.0
      %2444 = vmatprep.subr.mxu0 0.0
      %2445 = vmatpush2.msra.mxu0 0.0
      %2446 = vmatprep.subr.mxu0 0.0
      %2447 = vmatpush2.msra.mxu0 0.0
      %2448 = vmatprep.subr.mxu0 0.0
      %2449 = vmatpush2.msra.mxu0 0.0
      %2450 = vmatprep.subr.mxu0 0.0
      %2451 = vmatpush2.msra.mxu0 0.0
      %2452 = vmatprep.subr.mxu0 0.0
      %2453 = vmatpush2.msra.mxu0 0.0
      %2454 = vmatprep.subr.mxu0 0.0
      %2455 = vmatpush2.msra.mxu0 0.0
      %2456 = vmatprep.subr.mxu0 0.0
      %2457 = vmatpush2.msra.mxu0 0.0
      %2458 = vmatprep.subr.mxu0 0.0
      %2459 = vmatpush2.msra.mxu0 0.0
      %2460 = vmatprep.subr.mxu0 0.0
      %2461 = vmatpush2.msra.mxu0 0.0
      %2462 = vmatprep.mubr.f32.mxu0 0.0
      %2463 = vmatmul.mubr.f32.gmra.mxu0 %v2375
      %v2464 = vpop.f32.mrf.mxu0
      %v2465 = vadd.f32 0.0, %v2464
      %v2466 = vpop.f32.mrf.mxu0
      %2467 = vmatprep.mubr.f32.mxu0 0.0
      %2468 = vmatmul.mubr.f32.gmra.mxu0 %v2378
      %v2469 = vpop.f32.mrf.mxu0
      %v2470 = vadd.f32 0.0, %v2469
      %v2471 = vpop.f32.mrf.mxu0
      %2472 = vmatprep.mubr.f32.mxu0 0.0
      %2473 = vmatmul.mubr.f32.gmra.mxu0 %v2381
      %v2474 = vpop.f32.mrf.mxu0
      %v2475 = vadd.f32 0.0, %v2474
      %v2476 = vpop.f32.mrf.mxu0
      %2477 = vmatprep.mubr.f32.mxu0 0.0
      %2478 = vmatmul.mubr.f32.gmra.mxu0 %v2384
      %v2479 = vpop.f32.mrf.mxu0
      %v2480 = vadd.f32 0.0, %v2479
      %v2481 = vpop.f32.mrf.mxu0
      %2482 = vmatprep.mubr.f32.mxu0 0.0
      %2483 = vmatmul.mubr.f32.gmra.mxu0 %v2387
      %v2484 = vpop.f32.mrf.mxu0
      %v2485 = vadd.f32 0.0, %v2484
      %v2486 = vpop.f32.mrf.mxu0
      %2487 = vmatprep.mubr.f32.mxu0 0.0
      %2488 = vmatmul.mubr.f32.gmra.mxu0 %v2390
      %v2489 = vpop.f32.mrf.mxu0
      %v2490 = vadd.f32 0.0, %v2489
      %v2491 = vpop.f32.mrf.mxu0
      %2492 = vmatprep.mubr.f32.mxu0 0.0
      %2493 = vmatmul.mubr.f32.gmra.mxu0 %v2393
      %v2494 = vpop.f32.mrf.mxu0
      %v2495 = vadd.f32 0.0, %v2494
      %v2496 = vpop.f32.mrf.mxu0
      %2497 = vmatprep.mubr.f32.mxu0 0.0
      %2498 = vmatmul.mubr.f32.gmra.mxu0 %v2396
      %v2499 = vpop.f32.mrf.mxu0
      %v2500 = vadd.f32 0.0, %v2499
      %v2501 = vpop.f32.mrf.mxu0
      %2502 = vdwg.mxu0
      %v2503 = vxor.u32 %v2465, 2147483648
      %v2504 = vxor.u32 %v2470, 2147483648
      %v2505 = vxor.u32 %v2475, 2147483648
      %v2506 = vxor.u32 %v2480, 2147483648
      %v2507 = vxor.u32 %v2485, 2147483648
      %v2508 = vxor.u32 %v2490, 2147483648
      %v2509 = vxor.u32 %v2495, 2147483648
      %v2510 = vxor.u32 %v2500, 2147483648
      %v2511 = vmul.f32 %v2503, 1.442695
      %v2512 = vpow.pop %v2511
      %v2513 = vmul.f32 %v2504, 1.442695
      %v2514 = vpow.pop %v2513
      %v2515 = vmul.f32 %v2505, 1.442695
      %v2516 = vpow.pop %v2515
      %v2517 = vmul.f32 %v2506, 1.442695
      %v2518 = vpow.pop %v2517
      %v2519 = vmul.f32 %v2507, 1.442695
      %v2520 = vpow.pop %v2519
      %v2521 = vmul.f32 %v2508, 1.442695
      %v2522 = vpow.pop %v2521
      %v2523 = vmul.f32 %v2509, 1.442695
      %v2524 = vpow.pop %v2523
      %v2525 = vmul.f32 %v2510, 1.442695
      %v2526 = vpow.pop %v2525
      %v2527 = vadd.f32 %v2512, 1.0
      %v2528 = vadd.f32 %v2514, 1.0
      %v2529 = vadd.f32 %v2516, 1.0
      %v2530 = vadd.f32 %v2518, 1.0
      %v2531 = vadd.f32 %v2520, 1.0
      %v2532 = vadd.f32 %v2522, 1.0
      %v2533 = vadd.f32 %v2524, 1.0
      %v2534 = vadd.f32 %v2526, 1.0
      %v2535 = vrcp.pop %v2527
      %v2536 = vmul.f32 1.0, %v2535
      %v2537 = vrcp.pop %v2528
      %v2538 = vmul.f32 1.0, %v2537
      %v2539 = vrcp.pop %v2529
      %v2540 = vmul.f32 1.0, %v2539
      %v2541 = vrcp.pop %v2530
      %v2542 = vmul.f32 1.0, %v2541
      %v2543 = vrcp.pop %v2531
      %v2544 = vmul.f32 1.0, %v2543
      %v2545 = vrcp.pop %v2532
      %v2546 = vmul.f32 1.0, %v2545
      %v2547 = vrcp.pop %v2533
      %v2548 = vmul.f32 1.0, %v2547
      %v2549 = vrcp.pop %v2534
      %v2550 = vmul.f32 1.0, %v2549
      %v2551 = vmul.f32 %v2465, %v2536
      %v2552 = vmul.f32 %v2470, %v2538
      %v2553 = vmul.f32 %v2475, %v2540
      %v2554 = vmul.f32 %v2480, %v2542
      %v2555 = vmul.f32 %v2485, %v2544
      %v2556 = vmul.f32 %v2490, %v2546
      %v2557 = vmul.f32 %v2495, %v2548
      %v2558 = vmul.f32 %v2500, %v2550
      %v2559 = vld [vmem:[%s15] sm:$0xff]
      %v2560 = vld [vmem:[%s15 + $0x8] sm:$0xff]
      %v2561 = vld [vmem:[%s15 + $0x10] sm:$0xff]
      %v2562 = vld [vmem:[%s15 + $0x18] sm:$0xff]
      %v2563 = vld [vmem:[%s15 + $0x20] sm:$0xff]
      %v2564 = vld [vmem:[%s15 + $0x28] sm:$0xff]
      %v2565 = vld [vmem:[%s15 + $0x30] sm:$0xff]
      %v2566 = vld [vmem:[%s15 + $0x38] sm:$0xff]
      %vm2567 = vcmask 523264
      %v2569 = vsel %vm2567, %v2551, 0
      %v2572 = vsel %vm2567, %v2552, 0
      %v2575 = vsel %vm2567, %v2553, 0
      %v2578 = vsel %vm2567, %v2554, 0
      %v2581 = vsel %vm2567, %v2555, 0
      %v2584 = vsel %vm2567, %v2556, 0
      %v2587 = vsel %vm2567, %v2557, 0
      %v2590 = vsel %vm2567, %v2558, 0
      %2592 = vmatprep.subr.mxu0 0.0
      %2593 = vmatpush1.msra.mxu0 0.0
      %2594 = vmatprep.subr.mxu0 0.0
      %2595 = vmatpush1.msra.mxu0 0.0
      %2596 = vmatprep.subr.mxu0 0.0
      %2597 = vmatpush1.msra.mxu0 0.0
      %2598 = vmatprep.subr.mxu0 0.0
      %2599 = vmatpush1.msra.mxu0 0.0
      %2600 = vmatprep.subr.mxu0 0.0
      %2601 = vmatpush1.msra.mxu0 0.0
      %2602 = vmatprep.subr.mxu0 0.0
      %2603 = vmatpush1.msra.mxu0 0.0
      %2604 = vmatprep.subr.mxu0 0.0
      %2605 = vmatpush1.msra.mxu0 0.0
      %2606 = vmatprep.subr.mxu0 0.0
      %2607 = vmatpush1.msra.mxu0 0.0
      %2608 = vmatprep.subr.mxu0 0.0
      %2609 = vmatpush1.msra.mxu0 %v2566
      %2610 = vmatprep.subr.mxu0 0.0
      %2611 = vmatpush1.msra.mxu0 %v2565
      %2612 = vmatprep.subr.mxu0 0.0
      %2613 = vmatpush1.msra.mxu0 %v2564
      %2614 = vmatprep.subr.mxu0 0.0
      %2615 = vmatpush1.msra.mxu0 %v2563
      %2616 = vmatprep.subr.mxu0 0.0
      %2617 = vmatpush1.msra.mxu0 %v2562
      %2618 = vmatprep.subr.mxu0 0.0
      %2619 = vmatpush1.msra.mxu0 %v2561
      %2620 = vmatprep.subr.mxu0 0.0
      %2621 = vmatpush1.msra.mxu0 %v2560
      %2622 = vmatprep.subr.mxu0 0.0
      %2623 = vmatpush1.msra.mxu0 %v2559
      %2624 = vmatprep.subr.mxu0 0.0
      %2625 = vmatpush2.msra.mxu0 0.0
      %2626 = vmatprep.subr.mxu0 0.0
      %2627 = vmatpush2.msra.mxu0 0.0
      %2628 = vmatprep.subr.mxu0 0.0
      %2629 = vmatpush2.msra.mxu0 0.0
      %2630 = vmatprep.subr.mxu0 0.0
      %2631 = vmatpush2.msra.mxu0 0.0
      %2632 = vmatprep.subr.mxu0 0.0
      %2633 = vmatpush2.msra.mxu0 0.0
      %2634 = vmatprep.subr.mxu0 0.0
      %2635 = vmatpush2.msra.mxu0 0.0
      %2636 = vmatprep.subr.mxu0 0.0
      %2637 = vmatpush2.msra.mxu0 0.0
      %2638 = vmatprep.subr.mxu0 0.0
      %2639 = vmatpush2.msra.mxu0 0.0
      %2640 = vmatprep.subr.mxu0 0.0
      %2641 = vmatpush2.msra.mxu0 0.0
      %2642 = vmatprep.subr.mxu0 0.0
      %2643 = vmatpush2.msra.mxu0 0.0
      %2644 = vmatprep.subr.mxu0 0.0
      %2645 = vmatpush2.msra.mxu0 0.0
      %2646 = vmatprep.subr.mxu0 0.0
      %2647 = vmatpush2.msra.mxu0 0.0
      %2648 = vmatprep.subr.mxu0 0.0
      %2649 = vmatpush2.msra.mxu0 0.0
      %2650 = vmatprep.subr.mxu0 0.0
      %2651 = vmatpush2.msra.mxu0 0.0
      %2652 = vmatprep.subr.mxu0 0.0
      %2653 = vmatpush2.msra.mxu0 0.0
      %2654 = vmatprep.subr.mxu0 0.0
      %2655 = vmatpush2.msra.mxu0 0.0
      %2656 = vmatprep.mubr.f32.mxu0 0.0
      %2657 = vmatmul.mubr.f32.gmra.mxu0 %v2569
      %v2658 = vpop.f32.mrf.mxu0
      %v2659 = vadd.f32 0.0, %v2658
      %v2660 = vpop.f32.mrf.mxu0
      %2661 = vmatprep.mubr.f32.mxu0 0.0
      %2662 = vmatmul.mubr.f32.gmra.mxu0 %v2572
      %v2663 = vpop.f32.mrf.mxu0
      %v2664 = vadd.f32 0.0, %v2663
      %v2665 = vpop.f32.mrf.mxu0
      %2666 = vmatprep.mubr.f32.mxu0 0.0
      %2667 = vmatmul.mubr.f32.gmra.mxu0 %v2575
      %v2668 = vpop.f32.mrf.mxu0
      %v2669 = vadd.f32 0.0, %v2668
      %v2670 = vpop.f32.mrf.mxu0
      %2671 = vmatprep.mubr.f32.mxu0 0.0
      %2672 = vmatmul.mubr.f32.gmra.mxu0 %v2578
      %v2673 = vpop.f32.mrf.mxu0
      %v2674 = vadd.f32 0.0, %v2673
      %v2675 = vpop.f32.mrf.mxu0
      %2676 = vmatprep.mubr.f32.mxu0 0.0
      %2677 = vmatmul.mubr.f32.gmra.mxu0 %v2581
      %v2678 = vpop.f32.mrf.mxu0
      %v2679 = vadd.f32 0.0, %v2678
      %v2680 = vpop.f32.mrf.mxu0
      %2681 = vmatprep.mubr.f32.mxu0 0.0
      %2682 = vmatmul.mubr.f32.gmra.mxu0 %v2584
      %v2683 = vpop.f32.mrf.mxu0
      %v2684 = vadd.f32 0.0, %v2683
      %v2685 = vpop.f32.mrf.mxu0
      %2686 = vmatprep.mubr.f32.mxu0 0.0
      %2687 = vmatmul.mubr.f32.gmra.mxu0 %v2587
      %v2688 = vpop.f32.mrf.mxu0
      %v2689 = vadd.f32 0.0, %v2688
      %v2690 = vpop.f32.mrf.mxu0
      %2691 = vmatprep.mubr.f32.mxu0 0.0
      %2692 = vmatmul.mubr.f32.gmra.mxu0 %v2590
      %v2693 = vpop.f32.mrf.mxu0
      %v2694 = vadd.f32 0.0, %v2693
      %v2695 = vpop.f32.mrf.mxu0
      %2696 = vdwg.mxu0
      %v2697 = vld [vmem:[%s7] sm:$0xf]
      %vm2698 = vcmask 31744
      %v2700 = vsel %vm2698, %v2659, 0
      %v2703 = vsel %vm2698, %v2664, 0
      %v2706 = vsel %vm2698, %v2669, 0
      %v2709 = vsel %vm2698, %v2674, 0
      %v2712 = vsel %vm2698, %v2679, 0
      %v2715 = vsel %vm2698, %v2684, 0
      %v2718 = vsel %vm2698, %v2689, 0
      %v2721 = vsel %vm2698, %v2694, 0
      %vm2723 = vcmask 1043456
      %v2725 = vsel %vm2723, %v2697, 0
      %2727 = vmatprep.subr.mxu0 0.0
      %2728 = vmatpush1.msra.mxu0 0.0
      %2729 = vmatprep.subr.mxu0 0.0
      %2730 = vmatpush1.msra.mxu0 0.0
      %2731 = vmatprep.subr.mxu0 0.0
      %2732 = vmatpush1.msra.mxu0 0.0
      %2733 = vmatprep.subr.mxu0 0.0
      %2734 = vmatpush1.msra.mxu0 0.0
      %2735 = vmatprep.subr.mxu0 0.0
      %2736 = vmatpush1.msra.mxu0 0.0
      %2737 = vmatprep.subr.mxu0 0.0
      %2738 = vmatpush1.msra.mxu0 0.0
      %2739 = vmatprep.subr.mxu0 0.0
      %2740 = vmatpush1.msra.mxu0 0.0
      %2741 = vmatprep.subr.mxu0 0.0
      %2742 = vmatpush1.msra.mxu0 0.0
      %2743 = vmatprep.subr.mxu0 0.0
      %2744 = vmatpush1.msra.mxu0 0.0
      %2745 = vmatprep.subr.mxu0 0.0
      %2746 = vmatpush1.msra.mxu0 0.0
      %2747 = vmatprep.subr.mxu0 0.0
      %2748 = vmatpush1.msra.mxu0 0.0
      %2749 = vmatprep.subr.mxu0 0.0
      %2750 = vmatpush1.msra.mxu0 0.0
      %2751 = vmatprep.subr.mxu0 0.0
      %2752 = vmatpush1.msra.mxu0 0.0
      %2753 = vmatprep.subr.mxu0 0.0
      %2754 = vmatpush1.msra.mxu0 0.0
      %2755 = vmatprep.subr.mxu0 0.0
      %2756 = vmatpush1.msra.mxu0 0.0
      %2757 = vmatprep.subr.mxu0 0.0
      %2758 = vmatpush1.msra.mxu0 %v2725
      %2759 = vmatprep.subr.mxu0 0.0
      %2760 = vmatpush2.msra.mxu0 0.0
      %2761 = vmatprep.subr.mxu0 0.0
      %2762 = vmatpush2.msra.mxu0 0.0
      %2763 = vmatprep.subr.mxu0 0.0
      %2764 = vmatpush2.msra.mxu0 0.0
      %2765 = vmatprep.subr.mxu0 0.0
      %2766 = vmatpush2.msra.mxu0 0.0
      %2767 = vmatprep.subr.mxu0 0.0
      %2768 = vmatpush2.msra.mxu0 0.0
      %2769 = vmatprep.subr.mxu0 0.0
      %2770 = vmatpush2.msra.mxu0 0.0
      %2771 = vmatprep.subr.mxu0 0.0
      %2772 = vmatpush2.msra.mxu0 0.0
      %2773 = vmatprep.subr.mxu0 0.0
      %2774 = vmatpush2.msra.mxu0 0.0
      %2775 = vmatprep.subr.mxu0 0.0
      %2776 = vmatpush2.msra.mxu0 0.0
      %2777 = vmatprep.subr.mxu0 0.0
      %2778 = vmatpush2.msra.mxu0 0.0
      %2779 = vmatprep.subr.mxu0 0.0
      %2780 = vmatpush2.msra.mxu0 0.0
      %2781 = vmatprep.subr.mxu0 0.0
      %2782 = vmatpush2.msra.mxu0 0.0
      %2783 = vmatprep.subr.mxu0 0.0
      %2784 = vmatpush2.msra.mxu0 0.0
      %2785 = vmatprep.subr.mxu0 0.0
      %2786 = vmatpush2.msra.mxu0 0.0
      %2787 = vmatprep.subr.mxu0 0.0
      %2788 = vmatpush2.msra.mxu0 0.0
      %2789 = vmatprep.subr.mxu0 0.0
      %2790 = vmatpush2.msra.mxu0 0.0
      %2791 = vmatprep.mubr.f32.mxu0 0.0
      %2792 = vmatmul.mubr.f32.gmra.mxu0 %v2700
      %v2793 = vpop.f32.mrf.mxu0
      %v2794 = vadd.f32 0.0, %v2793
      %v2795 = vpop.f32.mrf.mxu0
      %2796 = vmatprep.mubr.f32.mxu0 0.0
      %2797 = vmatmul.mubr.f32.gmra.mxu0 %v2703
      %v2798 = vpop.f32.mrf.mxu0
      %v2799 = vadd.f32 0.0, %v2798
      %v2800 = vpop.f32.mrf.mxu0
      %2801 = vmatprep.mubr.f32.mxu0 0.0
      %2802 = vmatmul.mubr.f32.gmra.mxu0 %v2706
      %v2803 = vpop.f32.mrf.mxu0
      %v2804 = vadd.f32 0.0, %v2803
      %v2805 = vpop.f32.mrf.mxu0
      %2806 = vmatprep.mubr.f32.mxu0 0.0
      %2807 = vmatmul.mubr.f32.gmra.mxu0 %v2709
      %v2808 = vpop.f32.mrf.mxu0
      %v2809 = vadd.f32 0.0, %v2808
      %v2810 = vpop.f32.mrf.mxu0
      %2811 = vmatprep.mubr.f32.mxu0 0.0
      %2812 = vmatmul.mubr.f32.gmra.mxu0 %v2712
      %v2813 = vpop.f32.mrf.mxu0
      %v2814 = vadd.f32 0.0, %v2813
      %v2815 = vpop.f32.mrf.mxu0
      %2816 = vmatprep.mubr.f32.mxu0 0.0
      %2817 = vmatmul.mubr.f32.gmra.mxu0 %v2715
      %v2818 = vpop.f32.mrf.mxu0
      %v2819 = vadd.f32 0.0, %v2818
      %v2820 = vpop.f32.mrf.mxu0
      %2821 = vmatprep.mubr.f32.mxu0 0.0
      %2822 = vmatmul.mubr.f32.gmra.mxu0 %v2718
      %v2823 = vpop.f32.mrf.mxu0
      %v2824 = vadd.f32 0.0, %v2823
      %v2825 = vpop.f32.mrf.mxu0
      %2826 = vmatprep.mubr.f32.mxu0 0.0
      %2827 = vmatmul.mubr.f32.gmra.mxu0 %v2721
      %v2828 = vpop.f32.mrf.mxu0
      %v2829 = vadd.f32 0.0, %v2828
      %v2830 = vpop.f32.mrf.mxu0
      %2831 = vdwg.mxu0
      %v2832 = vmul.f32 %v1174, %v2794
      %v2833 = vmul.f32 %v1179, %v2799
      %v2834 = vmul.f32 %v1184, %v2804
      %v2835 = vmul.f32 %v1189, %v2809
      %v2836 = vmul.f32 %v1194, %v2814
      %v2837 = vmul.f32 %v1199, %v2819
      %v2838 = vmul.f32 %v1204, %v2824
      %v2839 = vmul.f32 %v1209, %v2829
      %2848 = vrot.lane.b32.xlu0 %v2832, 32
      %v2849 = vpop.permute.xlu0 %2848
      %2850 = vrot.lane.b32.xlu0 %v2833, 32
      %v2851 = vpop.permute.xlu0 %2850
      %2852 = vrot.lane.b32.xlu0 %v2834, 32
      %v2853 = vpop.permute.xlu0 %2852
      %2854 = vrot.lane.b32.xlu0 %v2835, 32
      %v2855 = vpop.permute.xlu0 %2854
      %2856 = vrot.lane.b32.xlu0 %v2836, 32
      %v2857 = vpop.permute.xlu0 %2856
      %2858 = vrot.lane.b32.xlu0 %v2837, 32
      %v2859 = vpop.permute.xlu0 %2858
      %2860 = vrot.lane.b32.xlu0 %v2838, 32
      %v2861 = vpop.permute.xlu0 %2860
      %2862 = vrot.lane.b32.xlu0 %v2839, 32
      %v2863 = vpop.permute.xlu0 %2862
      %v2872 = vsel %vm1586, %v2362, %v2849
      %v2873 = vsel %vm1586, %v2363, %v2851
      %v2874 = vsel %vm1586, %v2364, %v2853
      %v2875 = vsel %vm1586, %v2365, %v2855
      %v2876 = vsel %vm1586, %v2366, %v2857
      %v2877 = vsel %vm1586, %v2367, %v2859
      %v2878 = vsel %vm1586, %v2368, %v2861
      %v2879 = vsel %vm1586, %v2369, %v2863
      %vm2880 = vcmask 359424
      %v2881 = vsel %vm2880, %v2872, 1.0
      %v2882 = vsel %vm2880, %v2873, 1.0
      %v2883 = vsel %vm2880, %v2874, 1.0
      %v2884 = vsel %vm2880, %v2875, 1.0
      %v2885 = vsel %vm2880, %v2876, 1.0
      %v2886 = vsel %vm2880, %v2877, 1.0
      %v2887 = vsel %vm2880, %v2878, 1.0
      %v2888 = vsel %vm2880, %v2879, 1.0
      %v2889 = vld [vmem:[#allocation2] sm:$0xff]
      %v2890 = vld [vmem:[#allocation2 + $0x8] sm:$0xff]
      %2891 = vxpose.xlu0.b32.start [1/16] %v748, 128
      %2892 = vxpose.xlu0.b32.cont [2/16] %v749, 128
      %2893 = vxpose.xlu0.b32.cont [3/16] %v750, 128
      %2894 = vxpose.xlu0.b32.cont [4/16] %v751, 128
      %2895 = vxpose.xlu0.b32.cont [5/16] %v752, 128
      %2896 = vxpose.xlu0.b32.cont [6/16] %v753, 128
      %2897 = vxpose.xlu0.b32.cont [7/16] %v754, 128
      %2898 = vxpose.xlu0.b32.cont [8/16] %v755, 128
      %2899 = vxpose.xlu0.b32.cont [9/16] 0.0, 128
      %2900 = vxpose.xlu0.b32.cont [10/16] 0.0, 128
      %2901 = vxpose.xlu0.b32.cont [11/16] 0.0, 128
      %2902 = vxpose.xlu0.b32.cont [12/16] 0.0, 128
      %2903 = vxpose.xlu0.b32.cont [13/16] 0.0, 128
      %2904 = vxpose.xlu0.b32.cont [14/16] 0.0, 128
      %2905 = vxpose.xlu0.b32.cont [15/16] 0.0, 128
      %2906 = vxpose.xlu0.b32.end [16/16] 0.0, 128
      %v2907 = vpop.trf.xlu0
      %v2908 = vpop.trf.xlu0
      %v2909 = vpop.trf.xlu0
      %v2910 = vpop.trf.xlu0
      %v2911 = vpop.trf.xlu0
      %v2912 = vpop.trf.xlu0
      %v2913 = vpop.trf.xlu0
      %v2914 = vpop.trf.xlu0
      %v2915 = vpop.trf.xlu0
      %v2916 = vpop.trf.xlu0
      %v2917 = vpop.trf.xlu0
      %v2918 = vpop.trf.xlu0
      %v2919 = vpop.trf.xlu0
      %v2920 = vpop.trf.xlu0
      %v2921 = vpop.trf.xlu0
      %v2922 = vpop.trf.xlu0
      %v2924 = vsel %vm2567, %v2907, 0
      %v2927 = vsel %vm2567, %v2908, 0
      %2929 = vmatprep.subr.mxu0 0.0
      %2930 = vmatpush1.msra.mxu0 0.0
      %2931 = vmatprep.subr.mxu0 0.0
      %2932 = vmatpush1.msra.mxu0 0.0
      %2933 = vmatprep.subr.mxu0 0.0
      %2934 = vmatpush1.msra.mxu0 0.0
      %2935 = vmatprep.subr.mxu0 0.0
      %2936 = vmatpush1.msra.mxu0 0.0
      %2937 = vmatprep.subr.mxu0 0.0
      %2938 = vmatpush1.msra.mxu0 0.0
      %2939 = vmatprep.subr.mxu0 0.0
      %2940 = vmatpush1.msra.mxu0 0.0
      %2941 = vmatprep.subr.mxu0 0.0
      %2942 = vmatpush1.msra.mxu0 0.0
      %2943 = vmatprep.subr.mxu0 0.0
      %2944 = vmatpush1.msra.mxu0 0.0
      %2945 = vmatprep.subr.mxu0 0.0
      %2946 = vmatpush1.msra.mxu0 %v2888
      %2947 = vmatprep.subr.mxu0 0.0
      %2948 = vmatpush1.msra.mxu0 %v2887
      %2949 = vmatprep.subr.mxu0 0.0
      %2950 = vmatpush1.msra.mxu0 %v2886
      %2951 = vmatprep.subr.mxu0 0.0
      %2952 = vmatpush1.msra.mxu0 %v2885
      %2953 = vmatprep.subr.mxu0 0.0
      %2954 = vmatpush1.msra.mxu0 %v2884
      %2955 = vmatprep.subr.mxu0 0.0
      %2956 = vmatpush1.msra.mxu0 %v2883
      %2957 = vmatprep.subr.mxu0 0.0
      %2958 = vmatpush1.msra.mxu0 %v2882
      %2959 = vmatprep.subr.mxu0 0.0
      %2960 = vmatpush1.msra.mxu0 %v2881
      %2961 = vmatprep.subr.mxu0 0.0
      %2962 = vmatpush2.msra.mxu0 0.0
      %2963 = vmatprep.subr.mxu0 0.0
      %2964 = vmatpush2.msra.mxu0 0.0
      %2965 = vmatprep.subr.mxu0 0.0
      %2966 = vmatpush2.msra.mxu0 0.0
      %2967 = vmatprep.subr.mxu0 0.0
      %2968 = vmatpush2.msra.mxu0 0.0
      %2969 = vmatprep.subr.mxu0 0.0
      %2970 = vmatpush2.msra.mxu0 0.0
      %2971 = vmatprep.subr.mxu0 0.0
      %2972 = vmatpush2.msra.mxu0 0.0
      %2973 = vmatprep.subr.mxu0 0.0
      %2974 = vmatpush2.msra.mxu0 0.0
      %2975 = vmatprep.subr.mxu0 0.0
      %2976 = vmatpush2.msra.mxu0 0.0
      %2977 = vmatprep.subr.mxu0 0.0
      %2978 = vmatpush2.msra.mxu0 0.0
      %2979 = vmatprep.subr.mxu0 0.0
      %2980 = vmatpush2.msra.mxu0 0.0
      %2981 = vmatprep.subr.mxu0 0.0
      %2982 = vmatpush2.msra.mxu0 0.0
      %2983 = vmatprep.subr.mxu0 0.0
      %2984 = vmatpush2.msra.mxu0 0.0
      %2985 = vmatprep.subr.mxu0 0.0
      %2986 = vmatpush2.msra.mxu0 0.0
      %2987 = vmatprep.subr.mxu0 0.0
      %2988 = vmatpush2.msra.mxu0 0.0
      %2989 = vmatprep.subr.mxu0 0.0
      %2990 = vmatpush2.msra.mxu0 0.0
      %2991 = vmatprep.subr.mxu0 0.0
      %2992 = vmatpush2.msra.mxu0 0.0
      %2993 = vmatprep.mubr.f32.mxu0 0.0
      %2994 = vmatmul.mubr.f32.gmra.mxu0 %v2924
      %v2995 = vpop.f32.mrf.mxu0
      %v2996 = vadd.f32 0.0, %v2995
      %v2997 = vpop.f32.mrf.mxu0
      %2998 = vmatprep.mubr.f32.mxu0 0.0
      %2999 = vmatmul.mubr.f32.gmra.mxu0 %v2927
      %v3000 = vpop.f32.mrf.mxu0
      %v3001 = vadd.f32 0.0, %v3000
      %v3002 = vpop.f32.mrf.mxu0
      %3003 = vdwg.mxu0
      %v3004 = vadd.f32 %v2889, %v2996
      %v3005 = vadd.f32 %v2890, %v3001
      %vm3006 = vcmask 367616
      %3007 = vst.msk [vmem:[#allocation2] sm:$0xff] %vm3006, %v3004
      %3008 = vst.msk [vmem:[#allocation2 + $0x8] sm:$0xff] %vm3006, %v3005
      %p3009 = scmp.eq.s32.totalorder %s34, 1
      // Predicated region
      $region109: #{mc_e_gcl_forward.1} parent=103 // pred_check
        %p3010 = pneg %p3009
      $region110: #{mc_e_gcl_forward.1} parent=103 // pred_check_branch
        %3012 = sbr.rel (%p3010) target = $region112
      $region111: #{mc_e_gcl_forward.1} parent=103 // pred_region
        %v3013 = vld [vmem:[#allocation2] sm:$0xff]
        %v3014 = vld [vmem:[#allocation2 + $0x8] sm:$0xff]
        %v3015 = vmax.f32 %v3013, 1.0
        %v3016 = vmax.f32 %v3014, 1.0
        %v3017 = vrcp.pop %v3015
        %v3018 = vrcp.pop %v3016
        %3020 = vset.pattern.permute.xlu0 44
        %3021 = vperm.xlu0 %3020, %v3017
        %v3022 = vpop.permute.xlu0 %3021
        %3025 = vset.pattern.permute.xlu0 44
        %3026 = vperm.xlu0 %3025, %v3018
        %v3027 = vpop.permute.xlu0 %3026
        %v3029 = vmul.f32 %v3013, %v3022
        %v3030 = vmul.f32 %v3014, %v3027
        %v3031 = vld [vmem:[%s3] sm:$0xff]
        %v3032 = vld [vmem:[%s3 + $0x8] sm:$0xff]
        %v3033 = vmax.f32 %v3029, -10.0
        %v3034 = vmax.f32 %v3030, -10.0
        %v3035 = vmin.f32 %v3033, 10.0
        %v3036 = vmin.f32 %v3034, 10.0
        %3039 = vrot.lane.b32.xlu0 %v3035, 96
        %v3040 = vpop.permute.xlu0 %3039
        %3041 = vrot.lane.b32.xlu0 %v3036, 96
        %v3042 = vpop.permute.xlu0 %3041
        %v3045 = vadd.f32 %v3031, %v3040
        %v3046 = vadd.f32 %v3032, %v3042
        %vm3047 = vcmask 97280
        %3048 = vst.msk [vmem:[%s22] sm:$0xff] %vm3047, %v3045
        %3049 = vst.msk [vmem:[%s22 + $0x8] sm:$0xff] %vm3047, %v3046
        %v3050 = vld [vmem:[%s2] sm:$0xff]
        %v3051 = vld [vmem:[%s2 + $0x8] sm:$0xff]
        %v3052 = vld [vmem:[%s16] sm:$0xff]
        %v3053 = vld [vmem:[%s16 + $0x8] sm:$0xff]
        %v3054 = vld [vmem:[%s16 + $0x10] sm:$0xff]
        %v3055 = vld [vmem:[%s16 + $0x18] sm:$0xff]
        %v3056 = vld [vmem:[%s17] sm:$0xff]
        %v3057 = vld [vmem:[%s17 + $0x8] sm:$0xff]
        %v3058 = vld [vmem:[%s17 + $0x10] sm:$0xff]
        %v3059 = vld [vmem:[%s17 + $0x18] sm:$0xff]
        %v3061 = vsel %vm1586, %v3013, 0
        %v3064 = vsel %vm1586, %v3014, 0
        %3066 = vmatprep.subr.mxu0 0.0
        %3067 = vmatpush1.msra.mxu0 0.0
        %3068 = vmatprep.subr.mxu0 0.0
        %3069 = vmatpush1.msra.mxu0 0.0
        %3070 = vmatprep.subr.mxu0 0.0
        %3071 = vmatpush1.msra.mxu0 0.0
        %3072 = vmatprep.subr.mxu0 0.0
        %3073 = vmatpush1.msra.mxu0 0.0
        %3074 = vmatprep.subr.mxu0 0.0
        %3075 = vmatpush1.msra.mxu0 0.0
        %3076 = vmatprep.subr.mxu0 0.0
        %3077 = vmatpush1.msra.mxu0 0.0
        %3078 = vmatprep.subr.mxu0 0.0
        %3079 = vmatpush1.msra.mxu0 0.0
        %3080 = vmatprep.subr.mxu0 0.0
        %3081 = vmatpush1.msra.mxu0 0.0
        %3082 = vmatprep.subr.mxu0 0.0
        %3083 = vmatpush1.msra.mxu0 0.0
        %3084 = vmatprep.subr.mxu0 0.0
        %3085 = vmatpush1.msra.mxu0 0.0
        %3086 = vmatprep.subr.mxu0 0.0
        %3087 = vmatpush1.msra.mxu0 0.0
        %3088 = vmatprep.subr.mxu0 0.0
        %3089 = vmatpush1.msra.mxu0 0.0
        %3090 = vmatprep.subr.mxu0 0.0
        %3091 = vmatpush1.msra.mxu0 %v3059
        %3092 = vmatprep.subr.mxu0 0.0
        %3093 = vmatpush1.msra.mxu0 %v3058
        %3094 = vmatprep.subr.mxu0 0.0
        %3095 = vmatpush1.msra.mxu0 %v3057
        %3096 = vmatprep.subr.mxu0 0.0
        %3097 = vmatpush1.msra.mxu0 %v3056
        %3098 = vmatprep.subr.mxu0 0.0
        %3099 = vmatpush2.msra.mxu0 0.0
        %3100 = vmatprep.subr.mxu0 0.0
        %3101 = vmatpush2.msra.mxu0 0.0
        %3102 = vmatprep.subr.mxu0 0.0
        %3103 = vmatpush2.msra.mxu0 0.0
        %3104 = vmatprep.subr.mxu0 0.0
        %3105 = vmatpush2.msra.mxu0 0.0
        %3106 = vmatprep.subr.mxu0 0.0
        %3107 = vmatpush2.msra.mxu0 0.0
        %3108 = vmatprep.subr.mxu0 0.0
        %3109 = vmatpush2.msra.mxu0 0.0
        %3110 = vmatprep.subr.mxu0 0.0
        %3111 = vmatpush2.msra.mxu0 0.0
        %3112 = vmatprep.subr.mxu0 0.0
        %3113 = vmatpush2.msra.mxu0 0.0
        %3114 = vmatprep.subr.mxu0 0.0
        %3115 = vmatpush2.msra.mxu0 0.0
        %3116 = vmatprep.subr.mxu0 0.0
        %3117 = vmatpush2.msra.mxu0 0.0
        %3118 = vmatprep.subr.mxu0 0.0
        %3119 = vmatpush2.msra.mxu0 0.0
        %3120 = vmatprep.subr.mxu0 0.0
        %3121 = vmatpush2.msra.mxu0 0.0
        %3122 = vmatprep.subr.mxu0 0.0
        %3123 = vmatpush2.msra.mxu0 0.0
        %3124 = vmatprep.subr.mxu0 0.0
        %3125 = vmatpush2.msra.mxu0 0.0
        %3126 = vmatprep.subr.mxu0 0.0
        %3127 = vmatpush2.msra.mxu0 0.0
        %3128 = vmatprep.subr.mxu0 0.0
        %3129 = vmatpush2.msra.mxu0 0.0
        %3130 = vmatprep.mubr.f32.mxu0 0.0
        %3131 = vmatmul.mubr.f32.gmra.mxu0 %v3061
        %v3132 = vpop.f32.mrf.mxu0
        %v3133 = vadd.f32 0.0, %v3132
        %v3134 = vpop.f32.mrf.mxu0
        %3135 = vmatprep.mubr.f32.mxu0 0.0
        %3136 = vmatmul.mubr.f32.gmra.mxu0 %v3064
        %v3137 = vpop.f32.mrf.mxu0
        %v3138 = vadd.f32 0.0, %v3137
        %v3139 = vpop.f32.mrf.mxu0
        %3140 = vdwg.mxu0
        %v3142 = vsel %vm1586, %v3050, 0
        %v3145 = vsel %vm1586, %v3051, 0
        %3147 = vmatprep.subr.mxu0 0.0
        %3148 = vmatpush1.msra.mxu0 0.0
        %3149 = vmatprep.subr.mxu0 0.0
        %3150 = vmatpush1.msra.mxu0 0.0
        %3151 = vmatprep.subr.mxu0 0.0
        %3152 = vmatpush1.msra.mxu0 0.0
        %3153 = vmatprep.subr.mxu0 0.0
        %3154 = vmatpush1.msra.mxu0 0.0
        %3155 = vmatprep.subr.mxu0 0.0
        %3156 = vmatpush1.msra.mxu0 0.0
        %3157 = vmatprep.subr.mxu0 0.0
        %3158 = vmatpush1.msra.mxu0 0.0
        %3159 = vmatprep.subr.mxu0 0.0
        %3160 = vmatpush1.msra.mxu0 0.0
        %3161 = vmatprep.subr.mxu0 0.0
        %3162 = vmatpush1.msra.mxu0 0.0
        %3163 = vmatprep.subr.mxu0 0.0
        %3164 = vmatpush1.msra.mxu0 0.0
        %3165 = vmatprep.subr.mxu0 0.0
        %3166 = vmatpush1.msra.mxu0 0.0
        %3167 = vmatprep.subr.mxu0 0.0
        %3168 = vmatpush1.msra.mxu0 0.0
        %3169 = vmatprep.subr.mxu0 0.0
        %3170 = vmatpush1.msra.mxu0 0.0
        %3171 = vmatprep.subr.mxu0 0.0
        %3172 = vmatpush1.msra.mxu0 %v3055
        %3173 = vmatprep.subr.mxu0 0.0
        %3174 = vmatpush1.msra.mxu0 %v3054
        %3175 = vmatprep.subr.mxu0 0.0
        %3176 = vmatpush1.msra.mxu0 %v3053
        %3177 = vmatprep.subr.mxu0 0.0
        %3178 = vmatpush1.msra.mxu0 %v3052
        %3179 = vmatprep.subr.mxu0 0.0
        %3180 = vmatpush2.msra.mxu0 0.0
        %3181 = vmatprep.subr.mxu0 0.0
        %3182 = vmatpush2.msra.mxu0 0.0
        %3183 = vmatprep.subr.mxu0 0.0
        %3184 = vmatpush2.msra.mxu0 0.0
        %3185 = vmatprep.subr.mxu0 0.0
        %3186 = vmatpush2.msra.mxu0 0.0
        %3187 = vmatprep.subr.mxu0 0.0
        %3188 = vmatpush2.msra.mxu0 0.0
        %3189 = vmatprep.subr.mxu0 0.0
        %3190 = vmatpush2.msra.mxu0 0.0
        %3191 = vmatprep.subr.mxu0 0.0
        %3192 = vmatpush2.msra.mxu0 0.0
        %3193 = vmatprep.subr.mxu0 0.0
        %3194 = vmatpush2.msra.mxu0 0.0
        %3195 = vmatprep.subr.mxu0 0.0
        %3196 = vmatpush2.msra.mxu0 0.0
        %3197 = vmatprep.subr.mxu0 0.0
        %3198 = vmatpush2.msra.mxu0 0.0
        %3199 = vmatprep.subr.mxu0 0.0
        %3200 = vmatpush2.msra.mxu0 0.0
        %3201 = vmatprep.subr.mxu0 0.0
        %3202 = vmatpush2.msra.mxu0 0.0
        %3203 = vmatprep.subr.mxu0 0.0
        %3204 = vmatpush2.msra.mxu0 0.0
        %3205 = vmatprep.subr.mxu0 0.0
        %3206 = vmatpush2.msra.mxu0 0.0
        %3207 = vmatprep.subr.mxu0 0.0
        %3208 = vmatpush2.msra.mxu0 0.0
        %3209 = vmatprep.subr.mxu0 0.0
        %3210 = vmatpush2.msra.mxu0 0.0
        %3211 = vmatprep.mubr.f32.mxu0 0.0
        %3212 = vmatmul.mubr.f32.gmra.mxu0 %v3142
        %v3213 = vpop.f32.mrf.mxu0
        %v3214 = vadd.f32 %v3133, %v3213
        %v3215 = vpop.f32.mrf.mxu0
        %3216 = vmatprep.mubr.f32.mxu0 0.0
        %3217 = vmatmul.mubr.f32.gmra.mxu0 %v3145
        %v3218 = vpop.f32.mrf.mxu0
        %v3219 = vadd.f32 %v3138, %v3218
        %v3220 = vpop.f32.mrf.mxu0
        %3221 = vdwg.mxu0
        %v3222 = vld [vmem:[%s18] sm:$0x1]
        %v3224 = vlaneseq
        %v3225 = vshrl.u32 %v3224, 7
        %v3226 = vsub.s32 0, %v3225
        %v3227 = vrot.slane %v3222, %v3226
        %v3229 = vadd.f32 %v3214, %v3227
        %v3230 = vadd.f32 %v3219, %v3227
        %v3231 = vxor.u32 %v3229, 2147483648
        %v3232 = vxor.u32 %v3230, 2147483648
        %v3233 = vmul.f32 %v3231, 1.442695
        %v3234 = vpow.pop %v3233
        %v3235 = vmul.f32 %v3232, 1.442695
        %v3236 = vpow.pop %v3235
        %v3237 = vadd.f32 %v3234, 1.0
        %v3238 = vadd.f32 %v3236, 1.0
        %v3239 = vrcp.pop %v3237
        %v3240 = vmul.f32 1.0, %v3239
        %v3241 = vrcp.pop %v3238
        %v3242 = vmul.f32 1.0, %v3241
        %v3243 = vmul.f32 %v3229, %v3240
        %v3244 = vmul.f32 %v3230, %v3242
        %v3245 = vld [vmem:[%s19] sm:$0xff]
        %v3246 = vld [vmem:[%s19 + $0x8] sm:$0xff]
        %v3247 = vld [vmem:[%s19 + $0x10] sm:$0xff]
        %v3248 = vld [vmem:[%s19 + $0x18] sm:$0xff]
        %v3249 = vld [vmem:[%s19 + $0x20] sm:$0xff]
        %v3250 = vld [vmem:[%s19 + $0x28] sm:$0xff]
        %v3251 = vld [vmem:[%s19 + $0x30] sm:$0xff]
        %v3252 = vld [vmem:[%s19 + $0x38] sm:$0xff]
        %v3253 = vld [vmem:[%s19 + $0x40] sm:$0xff]
        %v3254 = vld [vmem:[%s19 + $0x48] sm:$0xff]
        %v3255 = vld [vmem:[%s19 + $0x50] sm:$0xff]
        %v3256 = vld [vmem:[%s19 + $0x58] sm:$0xff]
        %v3257 = vld [vmem:[%s19 + $0x60] sm:$0xff]
        %v3258 = vld [vmem:[%s19 + $0x68] sm:$0xff]
        %v3259 = vld [vmem:[%s19 + $0x70] sm:$0xff]
        %v3260 = vld [vmem:[%s19 + $0x78] sm:$0xff]
        %v3261 = vld [vmem:[%s20] sm:$0x1]
        %v3263 = vlaneseq
        %v3264 = vshrl.u32 %v3263, 7
        %v3265 = vsub.s32 0, %v3264
        %v3266 = vrot.slane %v3261, %v3265
        %3268 = vmatprep.subr.mxu0 0.0
        %3269 = vmatpush1.msra.mxu0 %v3260
        %3270 = vmatprep.subr.mxu0 0.0
        %3271 = vmatpush1.msra.mxu0 %v3259
        %3272 = vmatprep.subr.mxu0 0.0
        %3273 = vmatpush1.msra.mxu0 %v3258
        %3274 = vmatprep.subr.mxu0 0.0
        %3275 = vmatpush1.msra.mxu0 %v3257
        %3276 = vmatprep.subr.mxu0 0.0
        %3277 = vmatpush1.msra.mxu0 %v3256
        %3278 = vmatprep.subr.mxu0 0.0
        %3279 = vmatpush1.msra.mxu0 %v3255
        %3280 = vmatprep.subr.mxu0 0.0
        %3281 = vmatpush1.msra.mxu0 %v3254
        %3282 = vmatprep.subr.mxu0 0.0
        %3283 = vmatpush1.msra.mxu0 %v3253
        %3284 = vmatprep.subr.mxu0 0.0
        %3285 = vmatpush1.msra.mxu0 %v3252
        %3286 = vmatprep.subr.mxu0 0.0
        %3287 = vmatpush1.msra.mxu0 %v3251
        %3288 = vmatprep.subr.mxu0 0.0
        %3289 = vmatpush1.msra.mxu0 %v3250
        %3290 = vmatprep.subr.mxu0 0.0
        %3291 = vmatpush1.msra.mxu0 %v3249
        %3292 = vmatprep.subr.mxu0 0.0
        %3293 = vmatpush1.msra.mxu0 %v3248
        %3294 = vmatprep.subr.mxu0 0.0
        %3295 = vmatpush1.msra.mxu0 %v3247
        %3296 = vmatprep.subr.mxu0 0.0
        %3297 = vmatpush1.msra.mxu0 %v3246
        %3298 = vmatprep.subr.mxu0 0.0
        %3299 = vmatpush1.msra.mxu0 %v3245
        %3300 = vmatprep.subr.mxu0 0.0
        %3301 = vmatpush2.msra.mxu0 0.0
        %3302 = vmatprep.subr.mxu0 0.0
        %3303 = vmatpush2.msra.mxu0 0.0
        %3304 = vmatprep.subr.mxu0 0.0
        %3305 = vmatpush2.msra.mxu0 0.0
        %3306 = vmatprep.subr.mxu0 0.0
        %3307 = vmatpush2.msra.mxu0 0.0
        %3308 = vmatprep.subr.mxu0 0.0
        %3309 = vmatpush2.msra.mxu0 0.0
        %3310 = vmatprep.subr.mxu0 0.0
        %3311 = vmatpush2.msra.mxu0 0.0
        %3312 = vmatprep.subr.mxu0 0.0
        %3313 = vmatpush2.msra.mxu0 0.0
        %3314 = vmatprep.subr.mxu0 0.0
        %3315 = vmatpush2.msra.mxu0 0.0
        %3316 = vmatprep.subr.mxu0 0.0
        %3317 = vmatpush2.msra.mxu0 0.0
        %3318 = vmatprep.subr.mxu0 0.0
        %3319 = vmatpush2.msra.mxu0 0.0
        %3320 = vmatprep.subr.mxu0 0.0
        %3321 = vmatpush2.msra.mxu0 0.0
        %3322 = vmatprep.subr.mxu0 0.0
        %3323 = vmatpush2.msra.mxu0 0.0
        %3324 = vmatprep.subr.mxu0 0.0
        %3325 = vmatpush2.msra.mxu0 0.0
        %3326 = vmatprep.subr.mxu0 0.0
        %3327 = vmatpush2.msra.mxu0 0.0
        %3328 = vmatprep.subr.mxu0 0.0
        %3329 = vmatpush2.msra.mxu0 0.0
        %3330 = vmatprep.subr.mxu0 0.0
        %3331 = vmatpush2.msra.mxu0 0.0
        %3332 = vmatprep.mubr.f32.mxu0 0.0
        %3333 = vmatmul.mubr.f32.gmra.mxu0 %v3243
        %v3334 = vpop.f32.mrf.mxu0
        %v3335 = vadd.f32 %v3266, %v3334
        %v3336 = vpop.f32.mrf.mxu0
        %3337 = vmatprep.mubr.f32.mxu0 0.0
        %3338 = vmatmul.mubr.f32.gmra.mxu0 %v3244
        %v3339 = vpop.f32.mrf.mxu0
        %v3340 = vadd.f32 %v3266, %v3339
        %v3341 = vpop.f32.mrf.mxu0
        %3342 = vdwg.mxu0
        %v3343 = vxor.u32 %v3335, 2147483648
        %v3344 = vxor.u32 %v3340, 2147483648
        %v3345 = vmul.f32 %v3343, 1.442695
        %v3346 = vpow.pop %v3345
        %v3347 = vmul.f32 %v3344, 1.442695
        %v3348 = vpow.pop %v3347
        %v3349 = vadd.f32 %v3346, 1.0
        %v3350 = vadd.f32 %v3348, 1.0
        %v3351 = vrcp.pop %v3349
        %v3352 = vmul.f32 1.0, %v3351
        %v3353 = vrcp.pop %v3350
        %v3354 = vmul.f32 1.0, %v3353
        %v3355 = vmul.f32 %v3335, %v3352
        %v3356 = vmul.f32 %v3340, %v3354
        %v3357 = vadd.f32 %v3050, %v3355
        %v3358 = vadd.f32 %v3051, %v3356
        %3359 = vst.msk [vmem:[%s21] sm:$0xff] %vm1586, %v3357
        %3360 = vst.msk [vmem:[%s21 + $0x8] sm:$0xff] %vm1586, %v3358
      $region112: #{mc_e_gcl_forward.1} parent=103 // pred_fallthru
        _
      // Predicated region
      $region113: #{mc_e_gcl_forward.1} parent=103 // pred_check
        %p3361 = pneg %p498
      $region114: #{mc_e_gcl_forward.1} parent=103 // pred_check_branch
        %3363 = sbr.rel (%p3361) target = $region116
      $region115: #{mc_e_gcl_forward.1} parent=103 // pred_region
        _
      $region116: #{mc_e_gcl_forward.1} parent=103 // pred_fallthru
        _
      // Predicated region
      $region117: #{mc_e_gcl_forward.1} parent=103 // pred_check
        %p3364 = pneg %p519
      $region118: #{mc_e_gcl_forward.1} parent=103 // pred_check_branch
        %3366 = sbr.rel (%p3364) target = $region120
      $region119: #{mc_e_gcl_forward.1} parent=103 // pred_region
        _
      $region120: #{mc_e_gcl_forward.1} parent=103 // pred_fallthru
        _
      // Predicated region
      $region121: #{mc_e_gcl_forward.1} parent=103 // pred_check
        %p3367 = pneg %p498
      $region122: #{mc_e_gcl_forward.1} parent=103 // pred_check_branch
        %3369 = sbr.rel (%p3367) target = $region124
      $region123: #{mc_e_gcl_forward.1} parent=103 // pred_region
        _
      $region124: #{mc_e_gcl_forward.1} parent=103 // pred_fallthru
        _
      // Predicated region
      $region125: #{mc_e_gcl_forward.1} parent=103 // pred_check
        %p3370 = pneg %p519
      $region126: #{mc_e_gcl_forward.1} parent=103 // pred_check_branch
        %3372 = sbr.rel (%p3370) target = $region128
      $region127: #{mc_e_gcl_forward.1} parent=103 // pred_region
        _
      $region128: #{mc_e_gcl_forward.1} parent=103 // pred_fallthru
        _
    $region104: #{mc_e_gcl_forward.1} parent=5 // pred_fallthru
      _
    %p3373 = scmp.le.s32.totalorder 2, %s29
    // Predicated region
    $region129: #{mc_e_gcl_forward.1} parent=5 // pred_check
      %p3374 = pneg %p3373
    $region130: #{mc_e_gcl_forward.1} parent=5 // pred_check_branch
      %3376 = sbr.rel (%p3374) target = $region132
    $region131: #{mc_e_gcl_forward.1} parent=5 // pred_region
      %s3377 = ssub.s32 %s29, 2
    $region132: #{mc_e_gcl_forward.1} parent=5 // pred_fallthru
      _
  $region6: #{mc_e_gcl_forward.1} parent=0 // loop_footer
    %s33 = sadd.s32 1, %s29
  $region7: #{mc_e_gcl_forward.1} parent=0 // loop_footer_branch
    %28 = sbr.rel target = $region3
  $region8: #{mc_e_gcl_forward.1} parent=0 // loop_exit
    _

</llo_original>
